<compile_context>
chip_gen: v5e
topology: v5e:2x2
jax: 0.10.0
libtpu: 0.0.40
codegen_flags: <defaults>
</compile_context>

<pallas_src>
import functools

import jax
import jax.numpy as jnp
from jax.experimental import pallas as pl
from jax.experimental.pallas import tpu as pltpu


# ---------------------------------------------------------------------------
# helpers
# ---------------------------------------------------------------------------
def _vmem_limit(working_set_bytes):
    # Explicit scoped-VMEM limit: working set with headroom, clamped to a range
    # safe on every generation (v7x only has 64 MiB physical VMEM).
    return int(min(48 * 1024 * 1024, max(8 * 1024 * 1024, 4 * working_set_bytes)))


def _fit_strip(H, rows):
    rows = max(1, min(int(rows), H))
    while H % rows:
        rows -= 1
    return rows


# ---------------------------------------------------------------------------
# Kernel A: main conv3x3 + LeakyReLU + partial BN statistics
# ---------------------------------------------------------------------------
def _main_conv_bn_kernel(xp_ref, w_ref, b_ref, y_ref, stat_ref):
    """One (batch, row-strip) tile: y = LeakyReLU(conv3x3(x) + b, 0.2) in bf16,
    plus per-tile partial BN sums (stat row 0 = sum, row 1 = sum of squares).

    xp_ref  : (1, H+2, W+2, Cin) bf16   (full padded image, resident per batch)
    w_ref   : (9, Cin, Cp)       bf16
    b_ref   : (1, Cp)            f32
    y_ref   : (1, TH, W, Cp)     bf16
    stat_ref: (1, 1, 2, Cp)      f32
    """
    TH, W, Cp = y_ref.shape[1], y_ref.shape[2], y_ref.shape[3]
    Cin = xp_ref.shape[3]
    h = pl.program_id(1)
    row0 = pl.multiple_of(h * TH, TH)

    # x already bf16 (cast once in the wrapper) -> no per-tap casts.
    xs = xp_ref[0, pl.ds(row0, TH + 2), :, :]            # (TH+2, W+2, Cin) bf16
    w = w_ref[...]                                       # (9, Cin, Cp) bf16

    acc = jnp.zeros((TH * W, Cp), jnp.float32)
    # TODO(synk): for tiny Cin, fold the 9 taps into one K=9*Cin im2col dot;
    # for Cin>=128 the per-tap K already fills the MXU.
    for t in range(9):
        dh, dw = divmod(t, 3)
        patch = xs[dh:dh + TH, dw:dw + W, :].reshape(TH * W, Cin)
        acc += jnp.dot(patch, w[t], preferred_element_type=jnp.float32)

    acc = acc + b_ref[...]                               # (1, Cp) broadcast (hoisted)
    acc = jnp.where(acc > 0, acc, 0.2 * acc)             # LeakyReLU(0.2)

    # Partial BN statistics in f32 (before the bf16 store).
    # TODO(synk): compensated / two-pass variance for very large N*H*W.
    s = jnp.sum(acc, axis=0)
    q = jnp.sum(acc * acc, axis=0)
    stat_ref[0, 0] = jnp.stack([s, q])
    y_ref[0] = acc.reshape(TH, W, Cp).astype(y_ref.dtype)


def main_conv_bn(xp, w9, b_row, strip_rows):
    N, Hp, Wp, Cin = xp.shape
    H, W = Hp - 2, Wp - 2
    Cp = w9.shape[-1]
    TH = strip_rows
    nH = H // TH

    est = (2 * Hp * Wp * Cin * 2                 # resident padded image (bf16, x2 buf)
           + 2 * TH * W * Cp * 2                 # bf16 y tile (x2 buf)
           + TH * W * Cp * 4                     # f32 accumulator
           + 2 * 9 * Cin * Cp * 2 + 64 * Cp)

    return pl.pallas_call(
        _main_conv_bn_kernel,
        out_shape=(jax.ShapeDtypeStruct((N, H, W, Cp), jnp.bfloat16),
                   jax.ShapeDtypeStruct((N, nH, 2, Cp), jnp.float32)),
        grid_spec=pltpu.PrefetchScalarGridSpec(
            num_scalar_prefetch=0,
            grid=(N, nH),
            in_specs=[
                # TODO(synk): for very large images, replace the full-image
                # resident block with a halo'd strip DMA (manual copy) so input
                # VMEM is also bounded per strip.
                pl.BlockSpec((1, Hp, Wp, Cin), lambda n, h: (n, 0, 0, 0)),
                pl.BlockSpec((9, Cin, Cp), lambda n, h: (0, 0, 0)),
                pl.BlockSpec((1, Cp), lambda n, h: (0, 0)),
            ],
            out_specs=(
                pl.BlockSpec((1, TH, W, Cp), lambda n, h: (n, h, 0, 0)),
                pl.BlockSpec((1, 1, 2, Cp), lambda n, h: (n, h, 0, 0)),
            ),
        ),
        compiler_params=pltpu.CompilerParams(
            dimension_semantics=("parallel", "parallel"),
            vmem_limit_bytes=_vmem_limit(est)),
    )(xp, w9, b_row)


# ---------------------------------------------------------------------------
# Kernel B: fused SPADE (mlp_shared + gamma/beta convs + modulate)
# ---------------------------------------------------------------------------
def _spade_fused_kernel(segp_ref, y_ref, wsh_ref, bsh_ref, wgb_ref, bgb_ref,
                        scale_ref, shift_ref, o_ref):
    """One (batch, row-strip) tile:
        actv        = ReLU(conv3x3(seg, w_sh) + b_sh)         (VPU, stays in VMEM)
        gamma|beta  = conv3x3(actv, [w_g | w_b]) + [b_g | b_b] (combined MXU weight)
        out         = (y*scale + shift) * (1 + gamma) + beta   (BN folded in scale/shift)

    segp_ref : (1, H+4, W+4, 1)  f32 (2-pixel halo)   y_ref : (1, TH, W, Cp) bf16
    wsh_ref  : (9, Ch) bf16   bsh_ref : (1, Ch) f32
    wgb_ref  : (9, Ch, 2*Cp) bf16   bgb_ref : (1, 2*Cp) f32
    scale/shift : (1, Cp) f32       o_ref : (1, TH, W, Cp) f32
    """
    TH, W, Cp = o_ref.shape[1], o_ref.shape[2], o_ref.shape[3]
    Ch = wsh_ref.shape[1]
    h = pl.program_id(1)
    row0 = pl.multiple_of(h * TH, TH)
    Htot = pl.num_programs(1) * TH

    # ---- mlp_shared: broadcast the 1-channel seg across lanes ONCE, then 9 VPU FMAs.
    seg = segp_ref[0, pl.ds(row0, TH + 4), :, :]                 # (TH+4, W+4, 1) f32
    seg = seg.astype(jnp.bfloat16).astype(jnp.float32)           # match MXU rounding
    seg = jnp.broadcast_to(seg, (TH + 4, W + 4, Ch))
    wsh = wsh_ref[...].astype(jnp.float32)                       # (9, Ch)

    a = jnp.zeros((TH + 2, W + 2, Ch), jnp.float32)
    for t in range(9):
        dh, dw = divmod(t, 3)
        a += seg[dh:dh + TH + 2, dw:dw + W + 2, :] * wsh[t].reshape(1, 1, Ch)
    actv = jnp.maximum(a + bsh_ref[...].reshape(1, 1, Ch), 0.0)

    # gamma/beta convs zero-pad *actv* at the image border (PyTorch semantics);
    # the 1-pixel halo ring of actv outside the image must therefore be 0.
    r_ids = row0 - 1 + jax.lax.broadcasted_iota(jnp.int32, (TH + 2, W + 2, 1), 0)
    c_ids = jax.lax.broadcasted_iota(jnp.int32, (TH + 2, W + 2, 1), 1) - 1
    inside = (r_ids >= 0) & (r_ids < Htot) & (c_ids >= 0) & (c_ids < W)
    actv = jnp.where(inside, actv, 0.0).astype(jnp.bfloat16)     # (TH+2, W+2, Ch)

    # ---- gamma|beta: 9 taps, one combined (Ch, 2*Cp) weight, K=Ch=128 per dot.
    # TODO(synk): pair two taps (K=256) on v6e/v7x if this ever becomes MXU-bound.
    gb = jnp.zeros((TH * W, 2 * Cp), jnp.float32)
    for t in range(9):
        dh, dw = divmod(t, 3)
        patch = actv[dh:dh + TH, dw:dw + W, :].reshape(TH * W, Ch)
        gb += jnp.dot(patch, wgb_ref[t], preferred_element_type=jnp.float32)
    gb = gb + bgb_ref[...]
    gamma = gb[:, :Cp]
    beta = gb[:, Cp:]

    # ---- modulate (BatchNorm already folded into scale/shift).
    y = y_ref[0].reshape(TH * W, Cp).astype(jnp.float32)
    yn = y * scale_ref[...] + shift_ref[...]
    out = yn * (1.0 + gamma) + beta
    # TODO(synk): emit bf16 here as well if the consumer tolerates it (halves stores).
    o_ref[0] = out.reshape(TH, W, Cp).astype(o_ref.dtype)


def spade_fused(segp, y, w_sh, b_sh, w_gb, b_gb, scale, shift, strip_rows):
    N, Hp4, Wp4, _ = segp.shape
    H, W = Hp4 - 4, Wp4 - 4
    Cp = y.shape[-1]
    Ch = w_sh.shape[-1]
    TH = strip_rows
    nH = H // TH

    est = (2 * Hp4 * Wp4 * 4                       # seg (f32, x2 buf)
           + 2 * TH * W * Cp * (2 + 4)             # y bf16 + out f32 tiles (x2 buf)
           + 2 * 9 * Ch * 2 * Cp * 2               # combined gamma/beta weight
           + (TH + 4) * (W + 4) * Ch * 4           # broadcast seg
           + (TH + 2) * (W + 2) * Ch * 6           # actv f32 acc + bf16
           + TH * W * 2 * Cp * 4)                  # gamma/beta accumulator

    return pl.pallas_call(
        _spade_fused_kernel,
        out_shape=jax.ShapeDtypeStruct((N, H, W, Cp), jnp.float32),
        grid_spec=pltpu.PrefetchScalarGridSpec(
            num_scalar_prefetch=0,
            grid=(N, nH),
            in_specs=[
                pl.BlockSpec((1, Hp4, Wp4, 1), lambda n, h: (n, 0, 0, 0)),
                pl.BlockSpec((1, TH, W, Cp), lambda n, h: (n, h, 0, 0)),
                pl.BlockSpec((9, Ch), lambda n, h: (0, 0)),
                pl.BlockSpec((1, Ch), lambda n, h: (0, 0)),
                pl.BlockSpec((9, Ch, 2 * Cp), lambda n, h: (0, 0, 0)),
                pl.BlockSpec((1, 2 * Cp), lambda n, h: (0, 0)),
                pl.BlockSpec((1, Cp), lambda n, h: (0, 0)),
                pl.BlockSpec((1, Cp), lambda n, h: (0, 0)),
            ],
            out_specs=pl.BlockSpec((1, TH, W, Cp), lambda n, h: (n, h, 0, 0)),
        ),
        compiler_params=pltpu.CompilerParams(
            dimension_semantics=("parallel", "parallel"),
            vmem_limit_bytes=_vmem_limit(est)),
    )(segp, y, w_sh, b_sh, w_gb, b_gb, scale, shift)


# ---------------------------------------------------------------------------
# Full ConvSPADEBlock forward
# ---------------------------------------------------------------------------
def conv_spade_block_forward(x_nchw, alpha_nchw, p, *, out_channels, strip_rows=None):
    """Returns (out_nchw, alpha_nchw) — same tuple convention as the nn.Module."""
    xh = jnp.transpose(x_nchw, (0, 2, 3, 1)).astype(jnp.float32)   # NCHW -> NHWC
    N, H, W, _ = xh.shape
    Cp = p["b_main"].shape[-1]

    if strip_rows is None:
        per_row = W * Cp * 12                       # ~f32 out + f32 gamma/beta + bf16 y
        strip_rows = max(8, (2 << 20) // max(per_row, 1))
    TH = _fit_strip(H, strip_rows)

    # main: conv3x3 + LeakyReLU(0.2), bf16 x / bf16 y, per-strip BN partial sums
    xp = jnp.pad(xh, ((0, 0), (1, 1), (1, 1), (0, 0))).astype(jnp.bfloat16)
    y, stats = main_conv_bn(xp, p["w_main"], p["b_main"], TH)

    # BatchNorm2d, training-mode batch statistics (eps=1e-5, biased variance),
    # folded into per-channel scale/shift consumed by the fused SPADE kernel.
    # TODO(synk): running-stats update (training side effect) is not modeled.
    cnt = jnp.float32(N * H * W)
    s = jnp.sum(stats[:, :, 0, :], axis=(0, 1))
    q = jnp.sum(stats[:, :, 1, :], axis=(0, 1))
    mean = s / cnt
    var = jnp.maximum(q / cnt - mean * mean, 0.0)
    invstd = 1.0 / jnp.sqrt(var + 1e-5)
    scale = (p["bn_w"] * invstd).reshape(1, -1)
    shift = (p["bn_b"] - mean * p["bn_w"] * invstd).reshape(1, -1)

    # SPADE: nearest-resize alpha_map to (H, W)  (host-side gather glue)
    ah = jnp.transpose(alpha_nchw, (0, 2, 3, 1)).astype(jnp.float32)
    Hs, Ws = ah.shape[1], ah.shape[2]
    ih = (jnp.arange(H) * Hs) // H
    iw = (jnp.arange(W) * Ws) // W
    seg = ah[:, ih][:, :, iw]                                    # (N, H, W, 1)
    segp = jnp.pad(seg, ((0, 0), (2, 2), (2, 2), (0, 0)))        # 2-pixel halo

    out_p = spade_fused(segp, y, p["w_sh"], p["b_sh"], p["w_gb"], p["b_gb"],
                        scale, shift, TH)
    out = out_p[..., :out_channels]                              # drop lane padding
    return jnp.transpose(out, (0, 3, 1, 2)), alpha_nchw


# ---------------------------------------------------------------------------
# Pure-JAX reference (same numerics: bf16 conv operands / bf16 y, f32 accumulation)
# ---------------------------------------------------------------------------
def _ref_forward(x_nchw, alpha_nchw, raw):
    def bf(v):
        return v.astype(jnp.bfloat16).astype(jnp.float32)

    def conv(xh, w, b):
        return jax.lax.conv_general_dilated(
            bf(xh), bf(w), window_strides=(1, 1), padding="SAME",
            dimension_numbers=("NHWC", "HWIO", "NHWC")) + b

    xh = jnp.transpose(x_nchw, (0, 2, 3, 1)).astype(jnp.float32)
    N, H, W, _ = xh.shape
    y = conv(xh, raw["w_main"], raw["b_main"])
    y = jnp.where(y > 0, y, 0.2 * y)
    mean = jnp.mean(y, axis=(0, 1, 2))                 # stats from f32 y
    var = jnp.mean((y - mean) ** 2, axis=(0, 1, 2))
    y_q = bf(y)                                        # kernel stores y in bf16
    yn = (y_q - mean) / jnp.sqrt(var + 1e-5) * raw["bn_w"] + raw["bn_b"]

    ah = jnp.transpose(alpha_nchw, (0, 2, 3, 1)).astype(jnp.float32)
    Hs, Ws = ah.shape[1], ah.shape[2]
    seg = ah[:, (jnp.arange(H) * Hs) // H][:, :, (jnp.arange(W) * Ws) // W]
    actv = jax.nn.relu(conv(seg, raw["w_sh"], raw["b_sh"]))
    gamma = conv(actv, raw["w_g"], raw["b_g"])
    beta = conv(actv, raw["w_b"], raw["b_b"])
    out = yn * (1.0 + gamma) + beta
    return jnp.transpose(out, (0, 3, 1, 2))


# ---------------------------------------------------------------------------
# Parameter init + MXU-friendly packing (Cout zero-padded to 128 lanes)
# ---------------------------------------------------------------------------
def init_raw_params(key, in_ch, out_ch, nhidden=128):
    ks = jax.random.split(key, 10)

    def conv_w(k, cin, cout):
        scale = 1.0 / float(cin * 9) ** 0.5
        return jax.random.normal(k, (3, 3, cin, cout), jnp.float32) * scale

    return {
        "w_main": conv_w(ks[0], in_ch, out_ch),
        "b_main": 0.1 * jax.random.normal(ks[1], (out_ch,), jnp.float32),
        "bn_w": 1.0 + 0.1 * jax.random.normal(ks[2], (out_ch,), jnp.float32),
        "bn_b": 0.1 * jax.random.normal(ks[3], (out_ch,), jnp.float32),
        "w_sh": conv_w(ks[4], 1, nhidden),        # SPADE mlp_shared (label_nc=1)
        "b_sh": 0.1 * jax.random.normal(ks[5], (nhidden,), jnp.float32),
        "w_g": conv_w(ks[6], nhidden, out_ch),    # SPADE mlp_gamma
        "b_g": 0.1 * jax.random.normal(ks[7], (out_ch,), jnp.float32),
        "w_b": conv_w(ks[8], nhidden, out_ch),    # SPADE mlp_beta
        "b_b": 0.1 * jax.random.normal(ks[9], (out_ch,), jnp.float32),
    }


def pack_params(raw):
    Cout = raw["w_main"].shape[-1]
    Cp = -(-Cout // 128) * 128                    # lane-dense output channels

    def padc(a):
        pad = Cp - a.shape[-1]
        if pad == 0:
            return a
        cfg = [(0, 0)] * (a.ndim - 1) + [(0, pad)]
        return jnp.pad(a, cfg)

    def taps(w):                                  # (3,3,Cin,C) -> (9, Cin, C)
        kh, kw, cin, c = w.shape
        return w.reshape(kh * kw, cin, c)

    w_g = taps(padc(raw["w_g"]))
    w_b = taps(padc(raw["w_b"]))
    return {
        "w_main": taps(padc(raw["w_main"])).astype(jnp.bfloat16),
        "b_main": padc(raw["b_main"]).reshape(1, Cp).astype(jnp.float32),
        "w_sh": raw["w_sh"].reshape(9, -1).astype(jnp.bfloat16),
        "b_sh": raw["b_sh"].reshape(1, -1).astype(jnp.float32),
        # gamma|beta combined into a single (9, Ch, 2*Cp) weight
        "w_gb": jnp.concatenate([w_g, w_b], axis=-1).astype(jnp.bfloat16),
        "b_gb": jnp.concatenate([padc(raw["b_g"]), padc(raw["b_b"])]
                                ).reshape(1, 2 * Cp).astype(jnp.float32),
        "bn_w": padc(raw["bn_w"]).astype(jnp.float32),
        "bn_b": padc(raw["bn_b"]).astype(jnp.float32),
    }


# ---------------------------------------------------------------------------
if __name__ == "__main__":
    key = jax.random.PRNGKey(0)
    k_x, k_a, k_p = jax.random.split(key, 3)

    N, Cin, Cout, H, W = 2, 4, 8, 16, 16
    x = jax.random.normal(k_x, (N, Cin, H, W), jnp.float32)          # NCHW
    alpha_map = jax.random.uniform(k_a, (N, 1, H, W), jnp.float32)   # label_nc=1
    raw = init_raw_params(k_p, Cin, Cout)
    params = pack_params(raw)

    fwd = jax.jit(functools.partial(conv_spade_block_forward,
                                    out_channels=Cout, strip_rows=8))
    out, alpha_out = fwd(x, alpha_map, params)
    jax.block_until_ready(out)

    ref = _ref_forward(x, alpha_map, raw)
    assert out.shape == (N, Cout, H, W), out.shape
    max_err = float(jnp.max(jnp.abs(out - ref)))
    assert jnp.allclose(out, ref, rtol=1e-3, atol=2e-3), max_err
    assert jnp.array_equal(alpha_out, alpha_map)

    print("KERNEL_OK")
</pallas_src>

<mosaic_0001>
module attributes {stable_mosaic.version = 11 : i64} {
  func.func @_main_conv_bn_kernel(%arg0: i32, %arg1: i32, %arg2: memref<1x18x18x4xbf16, #tpu.memory_space<vmem>>, %arg3: memref<9x4x128xbf16, #tpu.memory_space<vmem>>, %arg4: memref<1x128xf32, #tpu.memory_space<vmem>>, %arg5: memref<1x8x16x128xbf16, #tpu.memory_space<vmem>>, %arg6: memref<1x1x2x128xf32, #tpu.memory_space<vmem>>) attributes {dimension_semantics = [#tpu.dimension_semantics<parallel>, #tpu.dimension_semantics<parallel>], iteration_bounds = array<i64: 2, 2>, scalar_prefetch = 0 : i64, scratch_operands = 0 : i64, tpu.core_type = #tpu.core_type<tc>, window_params = [{transform_indices = @transform_0, window_bounds = array<i64: 1, 18, 18, 4>}, {pipeline_mode = #tpu.pipeline_mode<synchronous>, transform_indices = @transform_1, window_bounds = array<i64: 9, 4, 128>}, {pipeline_mode = #tpu.pipeline_mode<synchronous>, transform_indices = @transform_2, window_bounds = array<i64: 1, 128>}, {transform_indices = @transform_3, window_bounds = array<i64: 1, 8, 16, 128>}, {transform_indices = @transform_4, window_bounds = array<i64: 1, 1, 2, 128>}]} {
    %c8_i32 = arith.constant 8 : i32
    %0 = arith.muli %arg1, %c8_i32 : i32
    %1 = tpu.assume_multiple %0, 8 : i32
    %c0 = arith.constant 0 : index
    %2 = arith.index_cast %1 : i32 to index
    %c0_0 = arith.constant 0 : index
    %c0_1 = arith.constant 0 : index
    %3 = vector.load %arg2[%c0, %2, %c0_0, %c0_1] : memref<1x18x18x4xbf16, #tpu.memory_space<vmem>>, vector<1x10x18x4xbf16>
    %4 = vector.shape_cast %3 : vector<1x10x18x4xbf16> to vector<10x18x4xbf16>
    %c0_2 = arith.constant 0 : index
    %c0_3 = arith.constant 0 : index
    %c0_4 = arith.constant 0 : index
    %5 = vector.load %arg3[%c0_2, %c0_3, %c0_4] : memref<9x4x128xbf16, #tpu.memory_space<vmem>>, vector<9x4x128xbf16>
    %cst = arith.constant 0.000000e+00 : f32
    %6 = vector.broadcast %cst : f32 to vector<128x128xf32>
    %7 = vector.extract_strided_slice %4 {offsets = [0, 0, 0], sizes = [8, 16, 4], strides = [1, 1, 1]} : vector<10x18x4xbf16> to vector<8x16x4xbf16>
    %8 = vector.shape_cast %7 : vector<8x16x4xbf16> to vector<128x4xbf16>
    %9 = vector.extract_strided_slice %5 {offsets = [0, 0, 0], sizes = [1, 4, 128], strides = [1, 1, 1]} : vector<9x4x128xbf16> to vector<1x4x128xbf16>
    %10 = vector.shape_cast %9 : vector<1x4x128xbf16> to vector<4x128xbf16>
    %cst_5 = arith.constant dense<0.000000e+00> : vector<128x128xf32>
    %11 = tpu.matmul %8, %10, %cst_5 {dimension_numbers = #tpu.dot_dimension_numbers<[1], [0], [0], [1], [0, 0, 1, 1], [], []>} : vector<128x4xbf16>, vector<4x128xbf16>, vector<128x128xf32> -> vector<128x128xf32>
    %12 = arith.addf %6, %11 : vector<128x128xf32>
    %13 = vector.extract_strided_slice %4 {offsets = [0, 1, 0], sizes = [8, 16, 4], strides = [1, 1, 1]} : vector<10x18x4xbf16> to vector<8x16x4xbf16>
    %14 = vector.shape_cast %13 : vector<8x16x4xbf16> to vector<128x4xbf16>
    %15 = vector.extract_strided_slice %5 {offsets = [1, 0, 0], sizes = [1, 4, 128], strides = [1, 1, 1]} : vector<9x4x128xbf16> to vector<1x4x128xbf16>
    %16 = vector.shape_cast %15 : vector<1x4x128xbf16> to vector<4x128xbf16>
    %cst_6 = arith.constant dense<0.000000e+00> : vector<128x128xf32>
    %17 = tpu.matmul %14, %16, %cst_6 {dimension_numbers = #tpu.dot_dimension_numbers<[1], [0], [0], [1], [0, 0, 1, 1], [], []>} : vector<128x4xbf16>, vector<4x128xbf16>, vector<128x128xf32> -> vector<128x128xf32>
    %18 = arith.addf %12, %17 : vector<128x128xf32>
    %19 = vector.extract_strided_slice %4 {offsets = [0, 2, 0], sizes = [8, 16, 4], strides = [1, 1, 1]} : vector<10x18x4xbf16> to vector<8x16x4xbf16>
    %20 = vector.shape_cast %19 : vector<8x16x4xbf16> to vector<128x4xbf16>
    %21 = vector.extract_strided_slice %5 {offsets = [2, 0, 0], sizes = [1, 4, 128], strides = [1, 1, 1]} : vector<9x4x128xbf16> to vector<1x4x128xbf16>
    %22 = vector.shape_cast %21 : vector<1x4x128xbf16> to vector<4x128xbf16>
    %cst_7 = arith.constant dense<0.000000e+00> : vector<128x128xf32>
    %23 = tpu.matmul %20, %22, %cst_7 {dimension_numbers = #tpu.dot_dimension_numbers<[1], [0], [0], [1], [0, 0, 1, 1], [], []>} : vector<128x4xbf16>, vector<4x128xbf16>, vector<128x128xf32> -> vector<128x128xf32>
    %24 = arith.addf %18, %23 : vector<128x128xf32>
    %25 = vector.extract_strided_slice %4 {offsets = [1, 0, 0], sizes = [8, 16, 4], strides = [1, 1, 1]} : vector<10x18x4xbf16> to vector<8x16x4xbf16>
    %26 = vector.shape_cast %25 : vector<8x16x4xbf16> to vector<128x4xbf16>
    %27 = vector.extract_strided_slice %5 {offsets = [3, 0, 0], sizes = [1, 4, 128], strides = [1, 1, 1]} : vector<9x4x128xbf16> to vector<1x4x128xbf16>
    %28 = vector.shape_cast %27 : vector<1x4x128xbf16> to vector<4x128xbf16>
    %cst_8 = arith.constant dense<0.000000e+00> : vector<128x128xf32>
    %29 = tpu.matmul %26, %28, %cst_8 {dimension_numbers = #tpu.dot_dimension_numbers<[1], [0], [0], [1], [0, 0, 1, 1], [], []>} : vector<128x4xbf16>, vector<4x128xbf16>, vector<128x128xf32> -> vector<128x128xf32>
    %30 = arith.addf %24, %29 : vector<128x128xf32>
    %31 = vector.extract_strided_slice %4 {offsets = [1, 1, 0], sizes = [8, 16, 4], strides = [1, 1, 1]} : vector<10x18x4xbf16> to vector<8x16x4xbf16>
    %32 = vector.shape_cast %31 : vector<8x16x4xbf16> to vector<128x4xbf16>
    %33 = vector.extract_strided_slice %5 {offsets = [4, 0, 0], sizes = [1, 4, 128], strides = [1, 1, 1]} : vector<9x4x128xbf16> to vector<1x4x128xbf16>
    %34 = vector.shape_cast %33 : vector<1x4x128xbf16> to vector<4x128xbf16>
    %cst_9 = arith.constant dense<0.000000e+00> : vector<128x128xf32>
    %35 = tpu.matmul %32, %34, %cst_9 {dimension_numbers = #tpu.dot_dimension_numbers<[1], [0], [0], [1], [0, 0, 1, 1], [], []>} : vector<128x4xbf16>, vector<4x128xbf16>, vector<128x128xf32> -> vector<128x128xf32>
    %36 = arith.addf %30, %35 : vector<128x128xf32>
    %37 = vector.extract_strided_slice %4 {offsets = [1, 2, 0], sizes = [8, 16, 4], strides = [1, 1, 1]} : vector<10x18x4xbf16> to vector<8x16x4xbf16>
    %38 = vector.shape_cast %37 : vector<8x16x4xbf16> to vector<128x4xbf16>
    %39 = vector.extract_strided_slice %5 {offsets = [5, 0, 0], sizes = [1, 4, 128], strides = [1, 1, 1]} : vector<9x4x128xbf16> to vector<1x4x128xbf16>
    %40 = vector.shape_cast %39 : vector<1x4x128xbf16> to vector<4x128xbf16>
    %cst_10 = arith.constant dense<0.000000e+00> : vector<128x128xf32>
    %41 = tpu.matmul %38, %40, %cst_10 {dimension_numbers = #tpu.dot_dimension_numbers<[1], [0], [0], [1], [0, 0, 1, 1], [], []>} : vector<128x4xbf16>, vector<4x128xbf16>, vector<128x128xf32> -> vector<128x128xf32>
    %42 = arith.addf %36, %41 : vector<128x128xf32>
    %43 = vector.extract_strided_slice %4 {offsets = [2, 0, 0], sizes = [8, 16, 4], strides = [1, 1, 1]} : vector<10x18x4xbf16> to vector<8x16x4xbf16>
    %44 = vector.shape_cast %43 : vector<8x16x4xbf16> to vector<128x4xbf16>
    %45 = vector.extract_strided_slice %5 {offsets = [6, 0, 0], sizes = [1, 4, 128], strides = [1, 1, 1]} : vector<9x4x128xbf16> to vector<1x4x128xbf16>
    %46 = vector.shape_cast %45 : vector<1x4x128xbf16> to vector<4x128xbf16>
    %cst_11 = arith.constant dense<0.000000e+00> : vector<128x128xf32>
    %47 = tpu.matmul %44, %46, %cst_11 {dimension_numbers = #tpu.dot_dimension_numbers<[1], [0], [0], [1], [0, 0, 1, 1], [], []>} : vector<128x4xbf16>, vector<4x128xbf16>, vector<128x128xf32> -> vector<128x128xf32>
    %48 = arith.addf %42, %47 : vector<128x128xf32>
    %49 = vector.extract_strided_slice %4 {offsets = [2, 1, 0], sizes = [8, 16, 4], strides = [1, 1, 1]} : vector<10x18x4xbf16> to vector<8x16x4xbf16>
    %50 = vector.shape_cast %49 : vector<8x16x4xbf16> to vector<128x4xbf16>
    %51 = vector.extract_strided_slice %5 {offsets = [7, 0, 0], sizes = [1, 4, 128], strides = [1, 1, 1]} : vector<9x4x128xbf16> to vector<1x4x128xbf16>
    %52 = vector.shape_cast %51 : vector<1x4x128xbf16> to vector<4x128xbf16>
    %cst_12 = arith.constant dense<0.000000e+00> : vector<128x128xf32>
    %53 = tpu.matmul %50, %52, %cst_12 {dimension_numbers = #tpu.dot_dimension_numbers<[1], [0], [0], [1], [0, 0, 1, 1], [], []>} : vector<128x4xbf16>, vector<4x128xbf16>, vector<128x128xf32> -> vector<128x128xf32>
    %54 = arith.addf %48, %53 : vector<128x128xf32>
    %55 = vector.extract_strided_slice %4 {offsets = [2, 2, 0], sizes = [8, 16, 4], strides = [1, 1, 1]} : vector<10x18x4xbf16> to vector<8x16x4xbf16>
    %56 = vector.shape_cast %55 : vector<8x16x4xbf16> to vector<128x4xbf16>
    %57 = vector.extract_strided_slice %5 {offsets = [8, 0, 0], sizes = [1, 4, 128], strides = [1, 1, 1]} : vector<9x4x128xbf16> to vector<1x4x128xbf16>
    %58 = vector.shape_cast %57 : vector<1x4x128xbf16> to vector<4x128xbf16>
    %cst_13 = arith.constant dense<0.000000e+00> : vector<128x128xf32>
    %59 = tpu.matmul %56, %58, %cst_13 {dimension_numbers = #tpu.dot_dimension_numbers<[1], [0], [0], [1], [0, 0, 1, 1], [], []>} : vector<128x4xbf16>, vector<4x128xbf16>, vector<128x128xf32> -> vector<128x128xf32>
    %60 = arith.addf %54, %59 : vector<128x128xf32>
    %c0_14 = arith.constant 0 : index
    %c0_15 = arith.constant 0 : index
    %61 = vector.load %arg4[%c0_14, %c0_15] : memref<1x128xf32, #tpu.memory_space<vmem>>, vector<1x128xf32>
    %62 = vector.broadcast %61 : vector<1x128xf32> to vector<128x128xf32>
    %63 = arith.addf %60, %62 : vector<128x128xf32>
    %cst_16 = arith.constant 0.000000e+00 : f32
    %64 = vector.broadcast %cst_16 : f32 to vector<128x128xf32>
    %65 = arith.cmpf ogt, %63, %64 : vector<128x128xf32>
    %cst_17 = arith.constant 2.000000e-01 : f32
    %66 = vector.broadcast %cst_17 : f32 to vector<128x128xf32>
    %67 = arith.mulf %66, %63 : vector<128x128xf32>
    %68 = arith.select %65, %63, %67 : vector<128x128xi1>, vector<128x128xf32>
    %cst_18 = arith.constant dense<0.000000e+00> : vector<128xf32>
    %69 = vector.multi_reduction <add>, %68, %cst_18 [0] : vector<128x128xf32> to vector<128xf32>
    %70 = arith.mulf %68, %68 : vector<128x128xf32>
    %cst_19 = arith.constant dense<0.000000e+00> : vector<128xf32>
    %71 = vector.multi_reduction <add>, %70, %cst_19 [0] : vector<128x128xf32> to vector<128xf32>
    %72 = vector.shape_cast %69 : vector<128xf32> to vector<1x128xf32>
    %73 = vector.shape_cast %71 : vector<128xf32> to vector<1x128xf32>
    %74 = tpu.concatenate %72, %73 in 0 : vector<1x128xf32>, vector<1x128xf32> -> vector<2x128xf32>
    %c0_20 = arith.constant 0 : index
    %c0_21 = arith.constant 0 : index
    %c0_22 = arith.constant 0 : index
    %c0_23 = arith.constant 0 : index
    %75 = vector.load %arg6[%c0_20, %c0_21, %c0_22, %c0_23] : memref<1x1x2x128xf32, #tpu.memory_space<vmem>>, vector<1x1x2x128xf32>
    %76 = vector.shape_cast %75 : vector<1x1x2x128xf32> to vector<2x128xf32>
    %77 = vector.shape_cast %74 : vector<2x128xf32> to vector<1x1x2x128xf32>
    tpu.vector_store %arg6[%c0_20, %c0_21, %c0_22, %c0_23], %77 {strides = array<i32>} : memref<1x1x2x128xf32, #tpu.memory_space<vmem>>, vector<1x1x2x128xf32>,
    %78 = vector.shape_cast %68 : vector<128x128xf32> to vector<8x16x128xf32>
    %79 = arith.truncf %78 : vector<8x16x128xf32> to vector<8x16x128xbf16>
    %c0_24 = arith.constant 0 : index
    %c0_25 = arith.constant 0 : index
    %c0_26 = arith.constant 0 : index
    %c0_27 = arith.constant 0 : index
    %80 = vector.load %arg5[%c0_24, %c0_25, %c0_26, %c0_27] : memref<1x8x16x128xbf16, #tpu.memory_space<vmem>>, vector<1x8x16x128xbf16>
    %81 = vector.shape_cast %80 : vector<1x8x16x128xbf16> to vector<8x16x128xbf16>
    %82 = vector.shape_cast %79 : vector<8x16x128xbf16> to vector<1x8x16x128xbf16>
    tpu.vector_store %arg5[%c0_24, %c0_25, %c0_26, %c0_27], %82 {strides = array<i32>} : memref<1x8x16x128xbf16, #tpu.memory_space<vmem>>, vector<1x8x16x128xbf16>,
    return
  }
  func.func @transform_0(%arg0: i32, %arg1: i32) -> (i32, i32, i32, i32) {
    %c0_i32 = arith.constant 0 : i32
    %c0_i32_0 = arith.constant 0 : i32
    %c0_i32_1 = arith.constant 0 : i32
    %c0_i32_2 = arith.constant 0 : i32
    return %arg0, %c0_i32, %c0_i32_0, %c0_i32_1 : i32, i32, i32, i32
  }
  func.func @transform_1(%arg0: i32, %arg1: i32) -> (i32, i32, i32) {
    %c0_i32 = arith.constant 0 : i32
    %c0_i32_0 = arith.constant 0 : i32
    %c0_i32_1 = arith.constant 0 : i32
    %c0_i32_2 = arith.constant 0 : i32
    return %c0_i32, %c0_i32_0, %c0_i32_1 : i32, i32, i32
  }
  func.func @transform_2(%arg0: i32, %arg1: i32) -> (i32, i32) {
    %c0_i32 = arith.constant 0 : i32
    %c0_i32_0 = arith.constant 0 : i32
    %c0_i32_1 = arith.constant 0 : i32
    return %c0_i32, %c0_i32_0 : i32, i32
  }
  func.func @transform_3(%arg0: i32, %arg1: i32) -> (i32, i32, i32, i32) {
    %c0_i32 = arith.constant 0 : i32
    %c0_i32_0 = arith.constant 0 : i32
    %c0_i32_1 = arith.constant 0 : i32
    return %arg0, %arg1, %c0_i32, %c0_i32_0 : i32, i32, i32, i32
  }
  func.func @transform_4(%arg0: i32, %arg1: i32) -> (i32, i32, i32, i32) {
    %c0_i32 = arith.constant 0 : i32
    %c0_i32_0 = arith.constant 0 : i32
    %c0_i32_1 = arith.constant 0 : i32
    return %arg0, %arg1, %c0_i32, %c0_i32_0 : i32, i32, i32, i32
  }
}

module attributes {stable_mosaic.version = 11 : i64} {
  func.func @_spade_fused_kernel(%arg0: i32, %arg1: i32, %arg2: memref<1x20x20x1xf32, #tpu.memory_space<vmem>>, %arg3: memref<1x8x16x128xbf16, #tpu.memory_space<vmem>>, %arg4: memref<9x128xbf16, #tpu.memory_space<vmem>>, %arg5: memref<1x128xf32, #tpu.memory_space<vmem>>, %arg6: memref<9x128x256xbf16, #tpu.memory_space<vmem>>, %arg7: memref<1x256xf32, #tpu.memory_space<vmem>>, %arg8: memref<1x128xf32, #tpu.memory_space<vmem>>, %arg9: memref<1x128xf32, #tpu.memory_space<vmem>>, %arg10: memref<1x8x16x128xf32, #tpu.memory_space<vmem>>) attributes {dimension_semantics = [#tpu.dimension_semantics<parallel>, #tpu.dimension_semantics<parallel>], iteration_bounds = array<i64: 2, 2>, scalar_prefetch = 0 : i64, scratch_operands = 0 : i64, tpu.core_type = #tpu.core_type<tc>, window_params = [{transform_indices = @transform_0, window_bounds = array<i64: 1, 20, 20, 1>}, {transform_indices = @transform_1, window_bounds = array<i64: 1, 8, 16, 128>}, {pipeline_mode = #tpu.pipeline_mode<synchronous>, transform_indices = @transform_2, window_bounds = array<i64: 9, 128>}, {pipeline_mode = #tpu.pipeline_mode<synchronous>, transform_indices = @transform_3, window_bounds = array<i64: 1, 128>}, {pipeline_mode = #tpu.pipeline_mode<synchronous>, transform_indices = @transform_4, window_bounds = array<i64: 9, 128, 256>}, {pipeline_mode = #tpu.pipeline_mode<synchronous>, transform_indices = @transform_5, window_bounds = array<i64: 1, 256>}, {pipeline_mode = #tpu.pipeline_mode<synchronous>, transform_indices = @transform_6, window_bounds = array<i64: 1, 128>}, {pipeline_mode = #tpu.pipeline_mode<synchronous>, transform_indices = @transform_7, window_bounds = array<i64: 1, 128>}, {transform_indices = @transform_8, window_bounds = array<i64: 1, 8, 16, 128>}]} {
    %c8_i32 = arith.constant 8 : i32
    %0 = arith.muli %arg1, %c8_i32 : i32
    %1 = tpu.assume_multiple %0, 8 : i32
    %c0 = arith.constant 0 : index
    %2 = arith.index_cast %1 : i32 to index
    %c0_0 = arith.constant 0 : index
    %c0_1 = arith.constant 0 : index
    %3 = vector.load %arg2[%c0, %2, %c0_0, %c0_1] : memref<1x20x20x1xf32, #tpu.memory_space<vmem>>, vector<1x12x20x1xf32>
    %4 = vector.shape_cast %3 : vector<1x12x20x1xf32> to vector<12x20x1xf32>
    %5 = arith.truncf %4 : vector<12x20x1xf32> to vector<12x20x1xbf16>
    %6 = arith.extf %5 : vector<12x20x1xbf16> to vector<12x20x1xf32>
    %7 = vector.shape_cast %6 : vector<12x20x1xf32> to vector<12x20x1xf32>
    %8 = vector.broadcast %7 : vector<12x20x1xf32> to vector<12x20x128xf32>
    %c0_2 = arith.constant 0 : index
    %c0_3 = arith.constant 0 : index
    %9 = vector.load %arg4[%c0_2, %c0_3] : memref<9x128xbf16, #tpu.memory_space<vmem>>, vector<9x128xbf16>
    %10 = arith.extf %9 : vector<9x128xbf16> to vector<9x128xf32>
    %cst = arith.constant 0.000000e+00 : f32
    %11 = vector.broadcast %cst : f32 to vector<10x18x128xf32>
    %12 = vector.extract_strided_slice %8 {offsets = [0, 0, 0], sizes = [10, 18, 128], strides = [1, 1, 1]} : vector<12x20x128xf32> to vector<10x18x128xf32>
    %13 = vector.extract_strided_slice %10 {offsets = [0, 0], sizes = [1, 128], strides = [1, 1]} : vector<9x128xf32> to vector<1x128xf32>
    %14 = vector.shape_cast %13 : vector<1x128xf32> to vector<128xf32>
    %15 = vector.shape_cast %14 : vector<128xf32> to vector<1x1x128xf32>
    %16 = vector.broadcast %15 : vector<1x1x128xf32> to vector<10x18x128xf32>
    %17 = arith.mulf %12, %16 : vector<10x18x128xf32>
    %18 = arith.addf %11, %17 : vector<10x18x128xf32>
    %19 = vector.extract_strided_slice %8 {offsets = [0, 1, 0], sizes = [10, 18, 128], strides = [1, 1, 1]} : vector<12x20x128xf32> to vector<10x18x128xf32>
    %20 = vector.extract_strided_slice %10 {offsets = [1, 0], sizes = [1, 128], strides = [1, 1]} : vector<9x128xf32> to vector<1x128xf32>
    %21 = vector.shape_cast %20 : vector<1x128xf32> to vector<128xf32>
    %22 = vector.shape_cast %21 : vector<128xf32> to vector<1x1x128xf32>
    %23 = vector.broadcast %22 : vector<1x1x128xf32> to vector<10x18x128xf32>
    %24 = arith.mulf %19, %23 : vector<10x18x128xf32>
    %25 = arith.addf %18, %24 : vector<10x18x128xf32>
    %26 = vector.extract_strided_slice %8 {offsets = [0, 2, 0], sizes = [10, 18, 128], strides = [1, 1, 1]} : vector<12x20x128xf32> to vector<10x18x128xf32>
    %27 = vector.extract_strided_slice %10 {offsets = [2, 0], sizes = [1, 128], strides = [1, 1]} : vector<9x128xf32> to vector<1x128xf32>
    %28 = vector.shape_cast %27 : vector<1x128xf32> to vector<128xf32>
    %29 = vector.shape_cast %28 : vector<128xf32> to vector<1x1x128xf32>
    %30 = vector.broadcast %29 : vector<1x1x128xf32> to vector<10x18x128xf32>
    %31 = arith.mulf %26, %30 : vector<10x18x128xf32>
    %32 = arith.addf %25, %31 : vector<10x18x128xf32>
    %33 = vector.extract_strided_slice %8 {offsets = [1, 0, 0], sizes = [10, 18, 128], strides = [1, 1, 1]} : vector<12x20x128xf32> to vector<10x18x128xf32>
    %34 = vector.extract_strided_slice %10 {offsets = [3, 0], sizes = [1, 128], strides = [1, 1]} : vector<9x128xf32> to vector<1x128xf32>
    %35 = vector.shape_cast %34 : vector<1x128xf32> to vector<128xf32>
    %36 = vector.shape_cast %35 : vector<128xf32> to vector<1x1x128xf32>
    %37 = vector.broadcast %36 : vector<1x1x128xf32> to vector<10x18x128xf32>
    %38 = arith.mulf %33, %37 : vector<10x18x128xf32>
    %39 = arith.addf %32, %38 : vector<10x18x128xf32>
    %40 = vector.extract_strided_slice %8 {offsets = [1, 1, 0], sizes = [10, 18, 128], strides = [1, 1, 1]} : vector<12x20x128xf32> to vector<10x18x128xf32>
    %41 = vector.extract_strided_slice %10 {offsets = [4, 0], sizes = [1, 128], strides = [1, 1]} : vector<9x128xf32> to vector<1x128xf32>
    %42 = vector.shape_cast %41 : vector<1x128xf32> to vector<128xf32>
    %43 = vector.shape_cast %42 : vector<128xf32> to vector<1x1x128xf32>
    %44 = vector.broadcast %43 : vector<1x1x128xf32> to vector<10x18x128xf32>
    %45 = arith.mulf %40, %44 : vector<10x18x128xf32>
    %46 = arith.addf %39, %45 : vector<10x18x128xf32>
    %47 = vector.extract_strided_slice %8 {offsets = [1, 2, 0], sizes = [10, 18, 128], strides = [1, 1, 1]} : vector<12x20x128xf32> to vector<10x18x128xf32>
    %48 = vector.extract_strided_slice %10 {offsets = [5, 0], sizes = [1, 128], strides = [1, 1]} : vector<9x128xf32> to vector<1x128xf32>
    %49 = vector.shape_cast %48 : vector<1x128xf32> to vector<128xf32>
    %50 = vector.shape_cast %49 : vector<128xf32> to vector<1x1x128xf32>
    %51 = vector.broadcast %50 : vector<1x1x128xf32> to vector<10x18x128xf32>
    %52 = arith.mulf %47, %51 : vector<10x18x128xf32>
    %53 = arith.addf %46, %52 : vector<10x18x128xf32>
    %54 = vector.extract_strided_slice %8 {offsets = [2, 0, 0], sizes = [10, 18, 128], strides = [1, 1, 1]} : vector<12x20x128xf32> to vector<10x18x128xf32>
    %55 = vector.extract_strided_slice %10 {offsets = [6, 0], sizes = [1, 128], strides = [1, 1]} : vector<9x128xf32> to vector<1x128xf32>
    %56 = vector.shape_cast %55 : vector<1x128xf32> to vector<128xf32>
    %57 = vector.shape_cast %56 : vector<128xf32> to vector<1x1x128xf32>
    %58 = vector.broadcast %57 : vector<1x1x128xf32> to vector<10x18x128xf32>
    %59 = arith.mulf %54, %58 : vector<10x18x128xf32>
    %60 = arith.addf %53, %59 : vector<10x18x128xf32>
    %61 = vector.extract_strided_slice %8 {offsets = [2, 1, 0], sizes = [10, 18, 128], strides = [1, 1, 1]} : vector<12x20x128xf32> to vector<10x18x128xf32>
    %62 = vector.extract_strided_slice %10 {offsets = [7, 0], sizes = [1, 128], strides = [1, 1]} : vector<9x128xf32> to vector<1x128xf32>
    %63 = vector.shape_cast %62 : vector<1x128xf32> to vector<128xf32>
    %64 = vector.shape_cast %63 : vector<128xf32> to vector<1x1x128xf32>
    %65 = vector.broadcast %64 : vector<1x1x128xf32> to vector<10x18x128xf32>
    %66 = arith.mulf %61, %65 : vector<10x18x128xf32>
    %67 = arith.addf %60, %66 : vector<10x18x128xf32>
    %68 = vector.extract_strided_slice %8 {offsets = [2, 2, 0], sizes = [10, 18, 128], strides = [1, 1, 1]} : vector<12x20x128xf32> to vector<10x18x128xf32>
    %69 = vector.extract_strided_slice %10 {offsets = [8, 0], sizes = [1, 128], strides = [1, 1]} : vector<9x128xf32> to vector<1x128xf32>
    %70 = vector.shape_cast %69 : vector<1x128xf32> to vector<128xf32>
    %71 = vector.shape_cast %70 : vector<128xf32> to vector<1x1x128xf32>
    %72 = vector.broadcast %71 : vector<1x1x128xf32> to vector<10x18x128xf32>
    %73 = arith.mulf %68, %72 : vector<10x18x128xf32>
    %74 = arith.addf %67, %73 : vector<10x18x128xf32>
    %c0_4 = arith.constant 0 : index
    %c0_5 = arith.constant 0 : index
    %75 = vector.load %arg5[%c0_4, %c0_5] : memref<1x128xf32, #tpu.memory_space<vmem>>, vector<1x128xf32>
    %76 = vector.shape_cast %75 : vector<1x128xf32> to vector<1x1x128xf32>
    %77 = vector.broadcast %76 : vector<1x1x128xf32> to vector<10x18x128xf32>
    %78 = arith.addf %74, %77 : vector<10x18x128xf32>
    %cst_6 = arith.constant 0.000000e+00 : f32
    %79 = vector.broadcast %cst_6 : f32 to vector<10x18x128xf32>
    %80 = arith.maximumf %78, %79 : vector<10x18x128xf32>
    %c1_i32 = arith.constant 1 : i32
    %81 = arith.subi %1, %c1_i32 : i32
    %82 = tpu.iota {dimensions = array<i32: 0>} : vector<10x18x1xi32>
    %83 = vector.broadcast %81 : i32 to vector<10x18x1xi32>
    %84 = arith.addi %83, %82 : vector<10x18x1xi32>
    %85 = tpu.iota {dimensions = array<i32: 1>} : vector<10x18x1xi32>
    %c1_i32_7 = arith.constant 1 : i32
    %86 = vector.broadcast %c1_i32_7 : i32 to vector<10x18x1xi32>
    %87 = arith.subi %85, %86 : vector<10x18x1xi32>
    %c0_i32 = arith.constant 0 : i32
    %88 = vector.broadcast %c0_i32 : i32 to vector<10x18x1xi32>
    %89 = arith.cmpi sge, %84, %88 : vector<10x18x1xi32>
    %c16_i32 = arith.constant 16 : i32
    %90 = vector.broadcast %c16_i32 : i32 to vector<10x18x1xi32>
    %91 = arith.cmpi slt, %84, %90 : vector<10x18x1xi32>
    %92 = arith.andi %89, %91 : vector<10x18x1xi1>
    %c0_i32_8 = arith.constant 0 : i32
    %93 = vector.broadcast %c0_i32_8 : i32 to vector<10x18x1xi32>
    %94 = arith.cmpi sge, %87, %93 : vector<10x18x1xi32>
    %95 = arith.andi %92, %94 : vector<10x18x1xi1>
    %c16_i32_9 = arith.constant 16 : i32
    %96 = vector.broadcast %c16_i32_9 : i32 to vector<10x18x1xi32>
    %97 = arith.cmpi slt, %87, %96 : vector<10x18x1xi32>
    %98 = arith.andi %95, %97 : vector<10x18x1xi1>
    %cst_10 = arith.constant 0.000000e+00 : f32
    %99 = vector.shape_cast %98 : vector<10x18x1xi1> to vector<10x18x1xi1>
    %100 = vector.broadcast %99 : vector<10x18x1xi1> to vector<10x18x128xi1>
    %101 = vector.broadcast %cst_10 : f32 to vector<10x18x128xf32>
    %102 = arith.select %100, %80, %101 : vector<10x18x128xi1>, vector<10x18x128xf32>
    %103 = arith.truncf %102 : vector<10x18x128xf32> to vector<10x18x128xbf16>
    %cst_11 = arith.constant 0.000000e+00 : f32
    %104 = vector.broadcast %cst_11 : f32 to vector<128x256xf32>
    %105 = vector.extract_strided_slice %103 {offsets = [0, 0, 0], sizes = [8, 16, 128], strides = [1, 1, 1]} : vector<10x18x128xbf16> to vector<8x16x128xbf16>
    %106 = vector.shape_cast %105 : vector<8x16x128xbf16> to vector<128x128xbf16>
    %c0_12 = arith.constant 0 : index
    %c0_13 = arith.constant 0 : index
    %c0_14 = arith.constant 0 : index
    %107 = vector.load %arg6[%c0_12, %c0_13, %c0_14] : memref<9x128x256xbf16, #tpu.memory_space<vmem>>, vector<1x128x256xbf16>
    %108 = vector.shape_cast %107 : vector<1x128x256xbf16> to vector<128x256xbf16>
    %cst_15 = arith.constant dense<0.000000e+00> : vector<128x256xf32>
    %109 = tpu.matmul %106, %108, %cst_15 {dimension_numbers = #tpu.dot_dimension_numbers<[1], [0], [0], [1], [0, 0, 1, 1], [], []>} : vector<128x128xbf16>, vector<128x256xbf16>, vector<128x256xf32> -> vector<128x256xf32>
    %110 = arith.addf %104, %109 : vector<128x256xf32>
    %111 = vector.extract_strided_slice %103 {offsets = [0, 1, 0], sizes = [8, 16, 128], strides = [1, 1, 1]} : vector<10x18x128xbf16> to vector<8x16x128xbf16>
    %112 = vector.shape_cast %111 : vector<8x16x128xbf16> to vector<128x128xbf16>
    %c1 = arith.constant 1 : index
    %c0_16 = arith.constant 0 : index
    %c0_17 = arith.constant 0 : index
    %113 = vector.load %arg6[%c1, %c0_16, %c0_17] : memref<9x128x256xbf16, #tpu.memory_space<vmem>>, vector<1x128x256xbf16>
    %114 = vector.shape_cast %113 : vector<1x128x256xbf16> to vector<128x256xbf16>
    %cst_18 = arith.constant dense<0.000000e+00> : vector<128x256xf32>
    %115 = tpu.matmul %112, %114, %cst_18 {dimension_numbers = #tpu.dot_dimension_numbers<[1], [0], [0], [1], [0, 0, 1, 1], [], []>} : vector<128x128xbf16>, vector<128x256xbf16>, vector<128x256xf32> -> vector<128x256xf32>
    %116 = arith.addf %110, %115 : vector<128x256xf32>
    %117 = vector.extract_strided_slice %103 {offsets = [0, 2, 0], sizes = [8, 16, 128], strides = [1, 1, 1]} : vector<10x18x128xbf16> to vector<8x16x128xbf16>
    %118 = vector.shape_cast %117 : vector<8x16x128xbf16> to vector<128x128xbf16>
    %c2 = arith.constant 2 : index
    %c0_19 = arith.constant 0 : index
    %c0_20 = arith.constant 0 : index
    %119 = vector.load %arg6[%c2, %c0_19, %c0_20] : memref<9x128x256xbf16, #tpu.memory_space<vmem>>, vector<1x128x256xbf16>
    %120 = vector.shape_cast %119 : vector<1x128x256xbf16> to vector<128x256xbf16>
    %cst_21 = arith.constant dense<0.000000e+00> : vector<128x256xf32>
    %121 = tpu.matmul %118, %120, %cst_21 {dimension_numbers = #tpu.dot_dimension_numbers<[1], [0], [0], [1], [0, 0, 1, 1], [], []>} : vector<128x128xbf16>, vector<128x256xbf16>, vector<128x256xf32> -> vector<128x256xf32>
    %122 = arith.addf %116, %121 : vector<128x256xf32>
    %123 = vector.extract_strided_slice %103 {offsets = [1, 0, 0], sizes = [8, 16, 128], strides = [1, 1, 1]} : vector<10x18x128xbf16> to vector<8x16x128xbf16>
    %124 = vector.shape_cast %123 : vector<8x16x128xbf16> to vector<128x128xbf16>
    %c3 = arith.constant 3 : index
    %c0_22 = arith.constant 0 : index
    %c0_23 = arith.constant 0 : index
    %125 = vector.load %arg6[%c3, %c0_22, %c0_23] : memref<9x128x256xbf16, #tpu.memory_space<vmem>>, vector<1x128x256xbf16>
    %126 = vector.shape_cast %125 : vector<1x128x256xbf16> to vector<128x256xbf16>
    %cst_24 = arith.constant dense<0.000000e+00> : vector<128x256xf32>
    %127 = tpu.matmul %124, %126, %cst_24 {dimension_numbers = #tpu.dot_dimension_numbers<[1], [0], [0], [1], [0, 0, 1, 1], [], []>} : vector<128x128xbf16>, vector<128x256xbf16>, vector<128x256xf32> -> vector<128x256xf32>
    %128 = arith.addf %122, %127 : vector<128x256xf32>
    %129 = vector.extract_strided_slice %103 {offsets = [1, 1, 0], sizes = [8, 16, 128], strides = [1, 1, 1]} : vector<10x18x128xbf16> to vector<8x16x128xbf16>
    %130 = vector.shape_cast %129 : vector<8x16x128xbf16> to vector<128x128xbf16>
    %c4 = arith.constant 4 : index
    %c0_25 = arith.constant 0 : index
    %c0_26 = arith.constant 0 : index
    %131 = vector.load %arg6[%c4, %c0_25, %c0_26] : memref<9x128x256xbf16, #tpu.memory_space<vmem>>, vector<1x128x256xbf16>
    %132 = vector.shape_cast %131 : vector<1x128x256xbf16> to vector<128x256xbf16>
    %cst_27 = arith.constant dense<0.000000e+00> : vector<128x256xf32>
    %133 = tpu.matmul %130, %132, %cst_27 {dimension_numbers = #tpu.dot_dimension_numbers<[1], [0], [0], [1], [0, 0, 1, 1], [], []>} : vector<128x128xbf16>, vector<128x256xbf16>, vector<128x256xf32> -> vector<128x256xf32>
    %134 = arith.addf %128, %133 : vector<128x256xf32>
    %135 = vector.extract_strided_slice %103 {offsets = [1, 2, 0], sizes = [8, 16, 128], strides = [1, 1, 1]} : vector<10x18x128xbf16> to vector<8x16x128xbf16>
    %136 = vector.shape_cast %135 : vector<8x16x128xbf16> to vector<128x128xbf16>
    %c5 = arith.constant 5 : index
    %c0_28 = arith.constant 0 : index
    %c0_29 = arith.constant 0 : index
    %137 = vector.load %arg6[%c5, %c0_28, %c0_29] : memref<9x128x256xbf16, #tpu.memory_space<vmem>>, vector<1x128x256xbf16>
    %138 = vector.shape_cast %137 : vector<1x128x256xbf16> to vector<128x256xbf16>
    %cst_30 = arith.constant dense<0.000000e+00> : vector<128x256xf32>
    %139 = tpu.matmul %136, %138, %cst_30 {dimension_numbers = #tpu.dot_dimension_numbers<[1], [0], [0], [1], [0, 0, 1, 1], [], []>} : vector<128x128xbf16>, vector<128x256xbf16>, vector<128x256xf32> -> vector<128x256xf32>
    %140 = arith.addf %134, %139 : vector<128x256xf32>
    %141 = vector.extract_strided_slice %103 {offsets = [2, 0, 0], sizes = [8, 16, 128], strides = [1, 1, 1]} : vector<10x18x128xbf16> to vector<8x16x128xbf16>
    %142 = vector.shape_cast %141 : vector<8x16x128xbf16> to vector<128x128xbf16>
    %c6 = arith.constant 6 : index
    %c0_31 = arith.constant 0 : index
    %c0_32 = arith.constant 0 : index
    %143 = vector.load %arg6[%c6, %c0_31, %c0_32] : memref<9x128x256xbf16, #tpu.memory_space<vmem>>, vector<1x128x256xbf16>
    %144 = vector.shape_cast %143 : vector<1x128x256xbf16> to vector<128x256xbf16>
    %cst_33 = arith.constant dense<0.000000e+00> : vector<128x256xf32>
    %145 = tpu.matmul %142, %144, %cst_33 {dimension_numbers = #tpu.dot_dimension_numbers<[1], [0], [0], [1], [0, 0, 1, 1], [], []>} : vector<128x128xbf16>, vector<128x256xbf16>, vector<128x256xf32> -> vector<128x256xf32>
    %146 = arith.addf %140, %145 : vector<128x256xf32>
    %147 = vector.extract_strided_slice %103 {offsets = [2, 1, 0], sizes = [8, 16, 128], strides = [1, 1, 1]} : vector<10x18x128xbf16> to vector<8x16x128xbf16>
    %148 = vector.shape_cast %147 : vector<8x16x128xbf16> to vector<128x128xbf16>
    %c7 = arith.constant 7 : index
    %c0_34 = arith.constant 0 : index
    %c0_35 = arith.constant 0 : index
    %149 = vector.load %arg6[%c7, %c0_34, %c0_35] : memref<9x128x256xbf16, #tpu.memory_space<vmem>>, vector<1x128x256xbf16>
    %150 = vector.shape_cast %149 : vector<1x128x256xbf16> to vector<128x256xbf16>
    %cst_36 = arith.constant dense<0.000000e+00> : vector<128x256xf32>
    %151 = tpu.matmul %148, %150, %cst_36 {dimension_numbers = #tpu.dot_dimension_numbers<[1], [0], [0], [1], [0, 0, 1, 1], [], []>} : vector<128x128xbf16>, vector<128x256xbf16>, vector<128x256xf32> -> vector<128x256xf32>
    %152 = arith.addf %146, %151 : vector<128x256xf32>
    %153 = vector.extract_strided_slice %103 {offsets = [2, 2, 0], sizes = [8, 16, 128], strides = [1, 1, 1]} : vector<10x18x128xbf16> to vector<8x16x128xbf16>
    %154 = vector.shape_cast %153 : vector<8x16x128xbf16> to vector<128x128xbf16>
    %c8 = arith.constant 8 : index
    %c0_37 = arith.constant 0 : index
    %c0_38 = arith.constant 0 : index
    %155 = vector.load %arg6[%c8, %c0_37, %c0_38] : memref<9x128x256xbf16, #tpu.memory_space<vmem>>, vector<1x128x256xbf16>
    %156 = vector.shape_cast %155 : vector<1x128x256xbf16> to vector<128x256xbf16>
    %cst_39 = arith.constant dense<0.000000e+00> : vector<128x256xf32>
    %157 = tpu.matmul %154, %156, %cst_39 {dimension_numbers = #tpu.dot_dimension_numbers<[1], [0], [0], [1], [0, 0, 1, 1], [], []>} : vector<128x128xbf16>, vector<128x256xbf16>, vector<128x256xf32> -> vector<128x256xf32>
    %158 = arith.addf %152, %157 : vector<128x256xf32>
    %c0_40 = arith.constant 0 : index
    %c0_41 = arith.constant 0 : index
    %159 = vector.load %arg7[%c0_40, %c0_41] : memref<1x256xf32, #tpu.memory_space<vmem>>, vector<1x256xf32>
    %160 = vector.broadcast %159 : vector<1x256xf32> to vector<128x256xf32>
    %161 = arith.addf %158, %160 : vector<128x256xf32>
    %162 = vector.extract_strided_slice %161 {offsets = [0, 0], sizes = [128, 128], strides = [1, 1]} : vector<128x256xf32> to vector<128x128xf32>
    %163 = vector.extract_strided_slice %161 {offsets = [0, 128], sizes = [128, 128], strides = [1, 1]} : vector<128x256xf32> to vector<128x128xf32>
    %c0_42 = arith.constant 0 : index
    %c0_43 = arith.constant 0 : index
    %c0_44 = arith.constant 0 : index
    %c0_45 = arith.constant 0 : index
    %164 = vector.load %arg3[%c0_42, %c0_43, %c0_44, %c0_45] : memref<1x8x16x128xbf16, #tpu.memory_space<vmem>>, vector<1x8x16x128xbf16>
    %165 = vector.shape_cast %164 : vector<1x8x16x128xbf16> to vector<8x16x128xbf16>
    %166 = vector.shape_cast %165 : vector<8x16x128xbf16> to vector<128x128xbf16>
    %167 = arith.extf %166 : vector<128x128xbf16> to vector<128x128xf32>
    %c0_46 = arith.constant 0 : index
    %c0_47 = arith.constant 0 : index
    %168 = vector.load %arg8[%c0_46, %c0_47] : memref<1x128xf32, #tpu.memory_space<vmem>>, vector<1x128xf32>
    %169 = vector.broadcast %168 : vector<1x128xf32> to vector<128x128xf32>
    %170 = arith.mulf %167, %169 : vector<128x128xf32>
    %c0_48 = arith.constant 0 : index
    %c0_49 = arith.constant 0 : index
    %171 = vector.load %arg9[%c0_48, %c0_49] : memref<1x128xf32, #tpu.memory_space<vmem>>, vector<1x128xf32>
    %172 = vector.broadcast %171 : vector<1x128xf32> to vector<128x128xf32>
    %173 = arith.addf %170, %172 : vector<128x128xf32>
    %cst_50 = arith.constant 1.000000e+00 : f32
    %174 = vector.broadcast %cst_50 : f32 to vector<128x128xf32>
    %175 = arith.addf %174, %162 : vector<128x128xf32>
    %176 = arith.mulf %173, %175 : vector<128x128xf32>
    %177 = arith.addf %176, %163 : vector<128x128xf32>
    %178 = vector.shape_cast %177 : vector<128x128xf32> to vector<8x16x128xf32>
    %c0_51 = arith.constant 0 : index
    %c0_52 = arith.constant 0 : index
    %c0_53 = arith.constant 0 : index
    %c0_54 = arith.constant 0 : index
    %179 = vector.load %arg10[%c0_51, %c0_52, %c0_53, %c0_54] : memref<1x8x16x128xf32, #tpu.memory_space<vmem>>, vector<1x8x16x128xf32>
    %180 = vector.shape_cast %179 : vector<1x8x16x128xf32> to vector<8x16x128xf32>
    %181 = vector.shape_cast %178 : vector<8x16x128xf32> to vector<1x8x16x128xf32>
    tpu.vector_store %arg10[%c0_51, %c0_52, %c0_53, %c0_54], %181 {strides = array<i32>} : memref<1x8x16x128xf32, #tpu.memory_space<vmem>>, vector<1x8x16x128xf32>,
    return
  }
  func.func @transform_0(%arg0: i32, %arg1: i32) -> (i32, i32, i32, i32) {
    %c0_i32 = arith.constant 0 : i32
    %c0_i32_0 = arith.constant 0 : i32
    %c0_i32_1 = arith.constant 0 : i32
    %c0_i32_2 = arith.constant 0 : i32
    return %arg0, %c0_i32, %c0_i32_0, %c0_i32_1 : i32, i32, i32, i32
  }
  func.func @transform_1(%arg0: i32, %arg1: i32) -> (i32, i32, i32, i32) {
    %c0_i32 = arith.constant 0 : i32
    %c0_i32_0 = arith.constant 0 : i32
    %c0_i32_1 = arith.constant 0 : i32
    return %arg0, %arg1, %c0_i32, %c0_i32_0 : i32, i32, i32, i32
  }
  func.func @transform_2(%arg0: i32, %arg1: i32) -> (i32, i32) {
    %c0_i32 = arith.constant 0 : i32
    %c0_i32_0 = arith.constant 0 : i32
    %c0_i32_1 = arith.constant 0 : i32
    return %c0_i32, %c0_i32_0 : i32, i32
  }
  func.func @transform_3(%arg0: i32, %arg1: i32) -> (i32, i32) {
    %c0_i32 = arith.constant 0 : i32
    %c0_i32_0 = arith.constant 0 : i32
    %c0_i32_1 = arith.constant 0 : i32
    return %c0_i32, %c0_i32_0 : i32, i32
  }
  func.func @transform_4(%arg0: i32, %arg1: i32) -> (i32, i32, i32) {
    %c0_i32 = arith.constant 0 : i32
    %c0_i32_0 = arith.constant 0 : i32
    %c0_i32_1 = arith.constant 0 : i32
    %c0_i32_2 = arith.constant 0 : i32
    return %c0_i32, %c0_i32_0, %c0_i32_1 : i32, i32, i32
  }
  func.func @transform_5(%arg0: i32, %arg1: i32) -> (i32, i32) {
    %c0_i32 = arith.constant 0 : i32
    %c0_i32_0 = arith.constant 0 : i32
    %c0_i32_1 = arith.constant 0 : i32
    return %c0_i32, %c0_i32_0 : i32, i32
  }
  func.func @transform_6(%arg0: i32, %arg1: i32) -> (i32, i32) {
    %c0_i32 = arith.constant 0 : i32
    %c0_i32_0 = arith.constant 0 : i32
    %c0_i32_1 = arith.constant 0 : i32
    return %c0_i32, %c0_i32_0 : i32, i32
  }
  func.func @transform_7(%arg0: i32, %arg1: i32) -> (i32, i32) {
    %c0_i32 = arith.constant 0 : i32
    %c0_i32_0 = arith.constant 0 : i32
    %c0_i32_1 = arith.constant 0 : i32
    return %c0_i32, %c0_i32_0 : i32, i32
  }
  func.func @transform_8(%arg0: i32, %arg1: i32) -> (i32, i32, i32, i32) {
    %c0_i32 = arith.constant 0 : i32
    %c0_i32_0 = arith.constant 0 : i32
    %c0_i32_1 = arith.constant 0 : i32
    return %arg0, %arg1, %c0_i32, %c0_i32_0 : i32, i32, i32, i32
  }
}

</mosaic_0001>

<llo_original>
// kernel: conv_spade_block_forward.2
$region0: #{conv_spade_block_forward.2}
  #allocation0 [shape = 'u32[]', space=smem, size = 0x4, offset = 0x4, fixed_abs, tag = 'smem constant byte address 0x4 - core index']
  #allocation1 [shape = 'u32[72,128]{1,0:T(1,128)}', space=vmem, size = 0x9000, scoped, tag = 'internal scratch']
  %s0 = inlined_call_operand.vmem [shape: bf16[2,18,18,4], index: 0, kind: input, shape index: {}]
  %s1 = inlined_call_operand.vmem [shape: bf16[9,4,128], index: 1, kind: input, shape index: {}]
  %s2 = inlined_call_operand.vmem [shape: f32[1,128], index: 2, kind: input, shape index: {}]
  %s3 = inlined_call_operand.vmem [shape: bf16[2,16,16,128], index: 3, kind: output, shape index: {0}]
  %s4 = inlined_call_operand.vmem [shape: f32[2,2,2,128], index: 4, kind: output, shape index: {1}]
  %5 = xla_tuple %s3, %s4
  %s6 = sld [smem:[#allocation0]]
  $region53: #{conv_spade_block_forward.2} parent=0
    _
  %s8 = ssub.s32 1, %s6
  %s9 = scalar_select 0, %s8, %s6
  loop: start=0, step=1, limit=6
  $region2: #{conv_spade_block_forward.2} parent=0 // loop_pre_header
    _
  $region3: #{conv_spade_block_forward.2} parent=0 // loop_header
    %s11 = sphi 0, %s15
    %p12 = scmp.ge.s32.totalorder %s11, 6
    %s18 = sphi 0, %s30
    %s19 = sphi 0, %s26
    %s20 = sphi 0, %s18
    %s21 = sphi 0, %s19
    %s22 = sphi 0, %s20
    %s23 = sphi 0, %s21
    %s33 = sphi 0, %s35
    %s36 = sphi 0, %s33
    %s37 = sphi 0, %s36
    %s53 = sphi 0, %s37
    %s57 = sphi 0, %s57
    %s59 = sphi 0, %s57
    %s60 = sphi 0, %s59
    %s74 = sphi 0, %s60
    %s78 = sphi 0, %s78
    %s80 = sphi 0, %s78
    %s81 = sphi 0, %s80
    %s95 = sphi 0, %s81
    %s103 = sphi 0, %s105
    %s106 = sphi 0, %s103
    %s107 = sphi 0, %s106
    %s123 = sphi 0, %s107
    %s131 = sphi 0, %s133
    %s134 = sphi 0, %s131
    %s135 = sphi 0, %s134
    %s151 = sphi 0, %s135
  $region4: #{conv_spade_block_forward.2} parent=0 // loop_header_branch
    %14 = sbr.rel (%p12) target = $region8
  $region5: #{conv_spade_block_forward.2} parent=0 // loop_body
    %s16 = ssub.s32 %s11, 1
    %s17 = ssub.s32 %s11, 2
    %s24 = sadd.s32 1, %s19
    %p25 = scmp.ge.s32.totalorder %s24, 2
    %s26 = scalar_select %p25, 0, %s24
    %s27 = sadd.s32 1, %s18
    %s28 = scalar_select %p25, %s27, %s18
    %p29 = scmp.ge.s32.totalorder %s28, 2
    %s30 = scalar_select %p29, 0, %s28
    %s31 = ssub.s32 %s18, %s30
    %p32 = scmp.eq.s32.totalorder %s31, 0
    %s34 = sadd.s32 %s33, 1
    %s35 = scalar_select %p32, %s33, %s34
    %p38 = pneg %p32
    %p39 = scmp.eq.s32.totalorder %s11, 3
    %p40 = por %p38, %p39
    %p41 = scmp.ne.s32.totalorder %s33, %s36
    %p42 = scmp.eq.s32.totalorder %s11, 0
    %p43 = por %p41, %p42
    %p44 = scmp.ne.s32.totalorder %s33, %s36
    %p45 = scmp.eq.s32.totalorder %s16, 3
    %p46 = por %p44, %p45
    %p47 = scmp.ne.s32.totalorder %s36, %s37
    %p48 = scmp.eq.s32.totalorder %s16, 0
    %p49 = por %p47, %p48
    %p50 = scmp.ne.s32.totalorder %s36, %s37
    %p51 = scmp.eq.s32.totalorder %s17, 3
    %p52 = por %p50, %p51
    %p54 = scmp.ne.s32.totalorder %s37, %s53
    %p55 = scmp.eq.s32.totalorder %s17, 0
    %p56 = por %p54, %p55
    %s58 = sadd.s32 %s57, 1
    %p61 = scmp.eq.s32.totalorder %s11, 3
    %p62 = scmp.ne.s32.totalorder %s57, %s59
    %p63 = scmp.eq.s32.totalorder %s11, 0
    %p64 = por %p62, %p63
    %p65 = scmp.ne.s32.totalorder %s57, %s59
    %p66 = scmp.eq.s32.totalorder %s16, 3
    %p67 = por %p65, %p66
    %p68 = scmp.ne.s32.totalorder %s59, %s60
    %p69 = scmp.eq.s32.totalorder %s16, 0
    %p70 = por %p68, %p69
    %p71 = scmp.ne.s32.totalorder %s59, %s60
    %p72 = scmp.eq.s32.totalorder %s17, 3
    %p73 = por %p71, %p72
    %p75 = scmp.ne.s32.totalorder %s60, %s74
    %p76 = scmp.eq.s32.totalorder %s17, 0
    %p77 = por %p75, %p76
    %s79 = sadd.s32 %s78, 1
    %p82 = scmp.eq.s32.totalorder %s11, 3
    %p83 = scmp.ne.s32.totalorder %s78, %s80
    %p84 = scmp.eq.s32.totalorder %s11, 0
    %p85 = por %p83, %p84
    %p86 = scmp.ne.s32.totalorder %s78, %s80
    %p87 = scmp.eq.s32.totalorder %s16, 3
    %p88 = por %p86, %p87
    %p89 = scmp.ne.s32.totalorder %s80, %s81
    %p90 = scmp.eq.s32.totalorder %s16, 0
    %p91 = por %p89, %p90
    %p92 = scmp.ne.s32.totalorder %s80, %s81
    %p93 = scmp.eq.s32.totalorder %s17, 3
    %p94 = por %p92, %p93
    %p96 = scmp.ne.s32.totalorder %s81, %s95
    %p97 = scmp.eq.s32.totalorder %s17, 0
    %p98 = por %p96, %p97
    %s99 = ssub.s32 %s18, %s30
    %s100 = ssub.s32 %s19, %s26
    %s101 = sor.u32 %s99, %s100
    %p102 = scmp.eq.s32.totalorder %s101, 0
    %s104 = sadd.s32 %s103, 1
    %s105 = scalar_select %p102, %s103, %s104
    %p108 = pneg %p102
    %p109 = scmp.eq.s32.totalorder %s11, 3
    %p110 = por %p108, %p109
    %p111 = scmp.ne.s32.totalorder %s103, %s106
    %p112 = scmp.eq.s32.totalorder %s11, 0
    %p113 = por %p111, %p112
    %p114 = scmp.ne.s32.totalorder %s103, %s106
    %p115 = scmp.eq.s32.totalorder %s16, 3
    %p116 = por %p114, %p115
    %p117 = scmp.ne.s32.totalorder %s106, %s107
    %p118 = scmp.eq.s32.totalorder %s16, 0
    %p119 = por %p117, %p118
    %p120 = scmp.ne.s32.totalorder %s106, %s107
    %p121 = scmp.eq.s32.totalorder %s17, 3
    %p122 = por %p120, %p121
    %p124 = scmp.ne.s32.totalorder %s107, %s123
    %p125 = scmp.eq.s32.totalorder %s17, 0
    %p126 = por %p124, %p125
    %s127 = ssub.s32 %s18, %s30
    %s128 = ssub.s32 %s19, %s26
    %s129 = sor.u32 %s127, %s128
    %p130 = scmp.eq.s32.totalorder %s129, 0
    %s132 = sadd.s32 %s131, 1
    %s133 = scalar_select %p130, %s131, %s132
    %p136 = pneg %p130
    %p137 = scmp.eq.s32.totalorder %s11, 3
    %p138 = por %p136, %p137
    %p139 = scmp.ne.s32.totalorder %s131, %s134
    %p140 = scmp.eq.s32.totalorder %s11, 0
    %p141 = por %p139, %p140
    %p142 = scmp.ne.s32.totalorder %s131, %s134
    %p143 = scmp.eq.s32.totalorder %s16, 3
    %p144 = por %p142, %p143
    %p145 = scmp.ne.s32.totalorder %s134, %s135
    %p146 = scmp.eq.s32.totalorder %s16, 0
    %p147 = por %p145, %p146
    %p148 = scmp.ne.s32.totalorder %s134, %s135
    %p149 = scmp.eq.s32.totalorder %s17, 3
    %p150 = por %p148, %p149
    %p152 = scmp.ne.s32.totalorder %s135, %s151
    %p153 = scmp.eq.s32.totalorder %s17, 0
    %p154 = por %p152, %p153
    %p155 = scmp.le.s32.totalorder 1, %s11
    %p156 = scmp.lt.s32.totalorder %s11, 5
    %p157 = pnand %p155, %p156
    %p158 = pneg %p157
    // Predicated region
    $region9: #{conv_spade_block_forward.2} parent=5 // pred_check
      _
    $region10: #{conv_spade_block_forward.2} parent=5 // pred_check_branch
      %160 = sbr.rel (%p157) target = $region12
    $region11: #{conv_spade_block_forward.2} parent=5 // pred_region
      %s161 = ssub.s32 %s11, 1
      // Predicated region
      $region13: #{conv_spade_block_forward.2} parent=11 // pred_check
        %p162 = pneg %p70
      $region14: #{conv_spade_block_forward.2} parent=11 // pred_check_branch
        %164 = sbr.rel (%p162) target = $region16
      $region15: #{conv_spade_block_forward.2} parent=11 // pred_region
        _
      $region16: #{conv_spade_block_forward.2} parent=11 // pred_fallthru
        _
      // Predicated region
      $region17: #{conv_spade_block_forward.2} parent=11 // pred_check
        %p165 = pneg %p91
      $region18: #{conv_spade_block_forward.2} parent=11 // pred_check_branch
        %167 = sbr.rel (%p165) target = $region20
      $region19: #{conv_spade_block_forward.2} parent=11 // pred_region
        _
      $region20: #{conv_spade_block_forward.2} parent=11 // pred_fallthru
        _
    $region12: #{conv_spade_block_forward.2} parent=5 // pred_fallthru
      _
    %p168 = scmp.lt.s32.totalorder %s11, 4
    // Predicated region
    $region21: #{conv_spade_block_forward.2} parent=5 // pred_check
      %p169 = pneg %p168
    $region22: #{conv_spade_block_forward.2} parent=5 // pred_check_branch
      %171 = sbr.rel (%p169) target = $region24
    $region23: #{conv_spade_block_forward.2} parent=5 // pred_region
      // Predicated region
      $region25: #{conv_spade_block_forward.2} parent=23 // pred_check
        %p172 = pneg %p43
      $region26: #{conv_spade_block_forward.2} parent=23 // pred_check_branch
        %174 = sbr.rel (%p172) target = $region28
      $region27: #{conv_spade_block_forward.2} parent=23 // pred_region
        %p175 = scmp.lt.s32.totalorder %s18, 1
        %s176 = scalar_select %p175, %s18, 1
        %s177 = smul.addr %s176, 54
        %s178 = smul.addr %s177, 4
        %s179 = scalar_lea.vmem %s0, %s178
      $region28: #{conv_spade_block_forward.2} parent=23 // pred_fallthru
        _
    $region24: #{conv_spade_block_forward.2} parent=5 // pred_fallthru
      _
    %p180 = scmp.le.s32.totalorder 1, %s11
    %p181 = scmp.lt.s32.totalorder %s11, 5
    %p182 = pnand %p180, %p181
    %p183 = pneg %p182
    // Predicated region
    $region29: #{conv_spade_block_forward.2} parent=5 // pred_check
      _
    $region30: #{conv_spade_block_forward.2} parent=5 // pred_check_branch
      %185 = sbr.rel (%p182) target = $region32
    $region31: #{conv_spade_block_forward.2} parent=5 // pred_region
      %s186 = ssub.s32 %s11, 1
      %p187 = scmp.lt.s32.totalorder %s20, 1
      %s188 = scalar_select %p187, %s20, 1
      %s189 = smul.addr %s188, 54
      %s190 = smul.addr %s189, 4
      %s191 = scalar_lea.vmem %s0, %s190
      %p192 = pneg %p49
      %p193 = pneg %p46
      %p194 = pneg %p70
      %p195 = pneg %p67
      %p196 = pneg %p91
      %p197 = pneg %p88
      %p198 = pneg %p119
      %p199 = pneg %p116
      %s200 = smul.u32 8, %s21
      %p201 = scmp.lt.s32.totalorder %s20, 1
      %s202 = scalar_select %p201, %s20, 1
      %p203 = scmp.lt.s32.totalorder %s200, 15
      %s204 = scalar_select %p203, %s200, 15
      %s205 = smul.addr %s204, 2
      %s206 = smul.addr %s202, 32
      %s207 = sadd.s32 %s205, %s206
      %s208 = smul.addr %s207, 4
      %s209 = scalar_lea.vmem %s3, %s208
      %p210 = pneg %p147
      %p211 = pneg %p144
      %p212 = scmp.lt.s32.totalorder %s20, 1
      %s213 = scalar_select %p212, %s20, 1
      %p214 = scmp.lt.s32.totalorder %s21, 1
      %s215 = scalar_select %p214, %s21, 1
      %s216 = smul.addr %s213, 2
      %s217 = sadd.s32 %s215, %s216
      %s218 = smul.addr %s217, 2
      %s219 = scalar_lea.vmem %s4, %s218
      %p220 = scmp.lt.s32.totalorder %s20, 1
      %s221 = scalar_select %p220, %s20, 1
      %s222 = smul.addr %s221, 54
      %s223 = smul.addr %s222, 4
      %s224 = scalar_lea.vmem %s0, %s223
      %s225 = smul.u32 8, %s21
      %p226 = scmp.lt.s32.totalorder %s20, 1
      %s227 = scalar_select %p226, %s20, 1
      %p228 = scmp.lt.s32.totalorder %s225, 15
      %s229 = scalar_select %p228, %s225, 15
      %s230 = smul.addr %s229, 2
      %s231 = smul.addr %s227, 32
      %s232 = sadd.s32 %s230, %s231
      %s233 = smul.addr %s232, 4
      %s234 = scalar_lea.vmem %s3, %s233
      %s235 = smul.u32 8, %s21
      %p236 = scmp.lt.s32.totalorder %s20, 1
      %s237 = scalar_select %p236, %s20, 1
      %p238 = scmp.lt.s32.totalorder %s21, 1
      %s239 = scalar_select %p238, %s21, 1
      %s240 = smul.addr %s237, 2
      %s241 = sadd.s32 %s239, %s240
      %s242 = smul.addr %s241, 2
      %s243 = scalar_lea.vmem %s4, %s242
      %s245 = smul.u32 %s21, 8
      %s246 = smul.u32 %s245, 3
      %s247 = smul.addr %s246, 4
      %s248 = scalar_lea.vmem %s224, %s247
      %v249 = vld [vmem:[%s248] sm:$0xf]
      %v250 = vld [vmem:[%s248 + $0x4] sm:$0xf]
      %v251 = vld [vmem:[%s248 + $0x8] sm:$0x1]
      %v252 = vld [vmem:[%s248 + $0xc] sm:$0xf]
      %v253 = vld [vmem:[%s248 + $0x10] sm:$0xf]
      %v254 = vld [vmem:[%s248 + $0x14] sm:$0x1]
      %v255 = vld [vmem:[%s248 + $0x18] sm:$0xf]
      %v256 = vld [vmem:[%s248 + $0x1c] sm:$0xf]
      %v257 = vld [vmem:[%s248 + $0x20] sm:$0x1]
      %v258 = vld [vmem:[%s248 + $0x24] sm:$0xf]
      %v259 = vld [vmem:[%s248 + $0x28] sm:$0xf]
      %v260 = vld [vmem:[%s248 + $0x2c] sm:$0x1]
      %v261 = vld [vmem:[%s248 + $0x30] sm:$0xf]
      %v262 = vld [vmem:[%s248 + $0x34] sm:$0xf]
      %v263 = vld [vmem:[%s248 + $0x38] sm:$0x1]
      %v264 = vld [vmem:[%s248 + $0x3c] sm:$0xf]
      %v265 = vld [vmem:[%s248 + $0x40] sm:$0xf]
      %v266 = vld [vmem:[%s248 + $0x44] sm:$0x1]
      %v267 = vld [vmem:[%s248 + $0x48] sm:$0xf]
      %v268 = vld [vmem:[%s248 + $0x4c] sm:$0xf]
      %v269 = vld [vmem:[%s248 + $0x50] sm:$0x1]
      %v270 = vld [vmem:[%s248 + $0x54] sm:$0xf]
      %v271 = vld [vmem:[%s248 + $0x58] sm:$0xf]
      %v272 = vld [vmem:[%s248 + $0x5c] sm:$0x1]
      %v273 = vld [vmem:[%s248 + $0x60] sm:$0xf]
      %v274 = vld [vmem:[%s248 + $0x64] sm:$0xf]
      %v275 = vld [vmem:[%s248 + $0x68] sm:$0x1]
      %v276 = vld [vmem:[%s248 + $0x6c] sm:$0xf]
      %v277 = vld [vmem:[%s248 + $0x70] sm:$0xf]
      %v278 = vld [vmem:[%s248 + $0x74] sm:$0x1]
      %v279 = vld [vmem:[%s1] sm:$0x3]
      %v280 = vld [vmem:[%s1 + $0x2] sm:$0x3]
      %v281 = vld [vmem:[%s1 + $0x4] sm:$0x3]
      %v282 = vld [vmem:[%s1 + $0x6] sm:$0x3]
      %v283 = vld [vmem:[%s1 + $0x8] sm:$0x3]
      %v284 = vld [vmem:[%s1 + $0xa] sm:$0x3]
      %v285 = vld [vmem:[%s1 + $0xc] sm:$0x3]
      %v286 = vld [vmem:[%s1 + $0xe] sm:$0x3]
      %v287 = vld [vmem:[%s1 + $0x10] sm:$0x3]
      %vm288 = vsmask.f32 3328
      %vm289 = vsmask.f32 7440
      %vm290 = vmor %vm288, %vm289
      %v292 = vshrl.u32 %v249, 16
      %v294 = vrot.slane %v292, 4
      %v295 = vshll.u32 %v249, 16
      %v297 = vrot.slane %v295, 5
      %v298 = vor.u32 %v294, %v297
      %v299 = vrot.slane %v298, 4
      %v301 = vshll.u32 %v250, 16
      %v303 = vrot.slane %v301, 5
      %v304 = vsel %vm290, %v299, %v303
      %v305 = vshrl.u32 %v250, 16
      %v307 = vrot.slane %v305, 4
      %v308 = vor.u32 %v307, %v303
      %v309 = vrot.slane %v308, 4
      %v311 = vshll.u32 %v251, 16
      %v313 = vrot.slane %v311, 5
      %v314 = vsel %vm290, %v309, %v313
      %v316 = vshrl.u32 %v252, 16
      %v318 = vrot.slane %v316, 4
      %v319 = vshll.u32 %v252, 16
      %v321 = vrot.slane %v319, 5
      %v322 = vor.u32 %v318, %v321
      %v323 = vrot.slane %v322, 4
      %v325 = vshll.u32 %v253, 16
      %v327 = vrot.slane %v325, 5
      %v328 = vsel %vm290, %v323, %v327
      %v329 = vshrl.u32 %v253, 16
      %v331 = vrot.slane %v329, 4
      %v332 = vor.u32 %v331, %v327
      %v333 = vrot.slane %v332, 4
      %v335 = vshll.u32 %v254, 16
      %v337 = vrot.slane %v335, 5
      %v338 = vsel %vm290, %v333, %v337
      %v340 = vshrl.u32 %v255, 16
      %v342 = vrot.slane %v340, 4
      %v343 = vshll.u32 %v255, 16
      %v345 = vrot.slane %v343, 5
      %v346 = vor.u32 %v342, %v345
      %v347 = vrot.slane %v346, 4
      %v349 = vshll.u32 %v256, 16
      %v351 = vrot.slane %v349, 5
      %v352 = vsel %vm290, %v347, %v351
      %v353 = vshrl.u32 %v256, 16
      %v355 = vrot.slane %v353, 4
      %v356 = vor.u32 %v355, %v351
      %v357 = vrot.slane %v356, 4
      %v359 = vshll.u32 %v257, 16
      %v361 = vrot.slane %v359, 5
      %v362 = vsel %vm290, %v357, %v361
      %v364 = vshrl.u32 %v258, 16
      %v366 = vrot.slane %v364, 4
      %v367 = vshll.u32 %v258, 16
      %v369 = vrot.slane %v367, 5
      %v370 = vor.u32 %v366, %v369
      %v371 = vrot.slane %v370, 4
      %v373 = vshll.u32 %v259, 16
      %v375 = vrot.slane %v373, 5
      %v376 = vsel %vm290, %v371, %v375
      %v377 = vshrl.u32 %v259, 16
      %v379 = vrot.slane %v377, 4
      %v380 = vor.u32 %v379, %v375
      %v381 = vrot.slane %v380, 4
      %v383 = vshll.u32 %v260, 16
      %v385 = vrot.slane %v383, 5
      %v386 = vsel %vm290, %v381, %v385
      %v388 = vshrl.u32 %v261, 16
      %v390 = vrot.slane %v388, 4
      %v391 = vshll.u32 %v261, 16
      %v393 = vrot.slane %v391, 5
      %v394 = vor.u32 %v390, %v393
      %v395 = vrot.slane %v394, 4
      %v397 = vshll.u32 %v262, 16
      %v399 = vrot.slane %v397, 5
      %v400 = vsel %vm290, %v395, %v399
      %v401 = vshrl.u32 %v262, 16
      %v403 = vrot.slane %v401, 4
      %v404 = vor.u32 %v403, %v399
      %v405 = vrot.slane %v404, 4
      %v407 = vshll.u32 %v263, 16
      %v409 = vrot.slane %v407, 5
      %v410 = vsel %vm290, %v405, %v409
      %v412 = vshrl.u32 %v264, 16
      %v414 = vrot.slane %v412, 4
      %v415 = vshll.u32 %v264, 16
      %v417 = vrot.slane %v415, 5
      %v418 = vor.u32 %v414, %v417
      %v419 = vrot.slane %v418, 4
      %v421 = vshll.u32 %v265, 16
      %v423 = vrot.slane %v421, 5
      %v424 = vsel %vm290, %v419, %v423
      %v425 = vshrl.u32 %v265, 16
      %v427 = vrot.slane %v425, 4
      %v428 = vor.u32 %v427, %v423
      %v429 = vrot.slane %v428, 4
      %v431 = vshll.u32 %v266, 16
      %v433 = vrot.slane %v431, 5
      %v434 = vsel %vm290, %v429, %v433
      %v436 = vshrl.u32 %v267, 16
      %v438 = vrot.slane %v436, 4
      %v439 = vshll.u32 %v267, 16
      %v441 = vrot.slane %v439, 5
      %v442 = vor.u32 %v438, %v441
      %v443 = vrot.slane %v442, 4
      %v445 = vshll.u32 %v268, 16
      %v447 = vrot.slane %v445, 5
      %v448 = vsel %vm290, %v443, %v447
      %v449 = vshrl.u32 %v268, 16
      %v451 = vrot.slane %v449, 4
      %v452 = vor.u32 %v451, %v447
      %v453 = vrot.slane %v452, 4
      %v455 = vshll.u32 %v269, 16
      %v457 = vrot.slane %v455, 5
      %v458 = vsel %vm290, %v453, %v457
      %v460 = vshrl.u32 %v270, 16
      %v462 = vrot.slane %v460, 4
      %v463 = vshll.u32 %v270, 16
      %v465 = vrot.slane %v463, 5
      %v466 = vor.u32 %v462, %v465
      %v467 = vrot.slane %v466, 4
      %v469 = vshll.u32 %v271, 16
      %v471 = vrot.slane %v469, 5
      %v472 = vsel %vm290, %v467, %v471
      %v473 = vshrl.u32 %v271, 16
      %v475 = vrot.slane %v473, 4
      %v476 = vor.u32 %v475, %v471
      %v477 = vrot.slane %v476, 4
      %v479 = vshll.u32 %v272, 16
      %v481 = vrot.slane %v479, 5
      %v482 = vsel %vm290, %v477, %v481
      %v483 = vunpack.c.l.b16 %v304
      %v484 = vunpack.c.l.b16 %v314
      %v485 = vunpack.c.l.b16 %v328
      %v486 = vunpack.c.l.b16 %v338
      %v487 = vunpack.c.l.b16 %v352
      %v488 = vunpack.c.l.b16 %v362
      %v489 = vunpack.c.l.b16 %v376
      %v490 = vunpack.c.l.b16 %v386
      %v491 = vunpack.c.l.b16 %v400
      %v492 = vunpack.c.l.b16 %v410
      %v493 = vunpack.c.l.b16 %v424
      %v494 = vunpack.c.l.b16 %v434
      %v495 = vunpack.c.l.b16 %v448
      %v496 = vunpack.c.l.b16 %v458
      %v497 = vunpack.c.l.b16 %v472
      %v498 = vunpack.c.l.b16 %v482
      %v499 = vpack.c.b16 %v484, %v483
      %v500 = vpack.c.b16 %v486, %v485
      %v501 = vpack.c.b16 %v488, %v487
      %v502 = vpack.c.b16 %v490, %v489
      %v503 = vpack.c.b16 %v492, %v491
      %v504 = vpack.c.b16 %v494, %v493
      %v505 = vpack.c.b16 %v496, %v495
      %v506 = vpack.c.b16 %v498, %v497
      %vm507 = vcmask 31744
      %v509 = vsel %vm507, %v499, 0
      %v512 = vsel %vm507, %v500, 0
      %v515 = vsel %vm507, %v501, 0
      %v518 = vsel %vm507, %v502, 0
      %v521 = vsel %vm507, %v503, 0
      %v524 = vsel %vm507, %v504, 0
      %v527 = vsel %vm507, %v505, 0
      %v530 = vsel %vm507, %v506, 0
      %vm532 = vcmask 1041408
      %v534 = vsel %vm532, %v280, 0
      %536 = vmatpush.bf16.msra.mxu0 0
      %537 = vmatpush.bf16.msra.mxu0 0
      %538 = vmatpush.bf16.msra.mxu0 0
      %539 = vmatpush.bf16.msra.mxu0 0
      %540 = vmatpush.bf16.msra.mxu0 0
      %541 = vmatpush.bf16.msra.mxu0 0
      %542 = vmatpush.bf16.msra.mxu0 0
      %543 = vmatpush.bf16.msra.mxu0 %v534
      %544 = vmatmul.bf16.gmra.mxu0 %v509
      %v545 = vpop.f32.mrf.mxu0
      %v546 = vadd.f32 0.0, %v545
      %v547 = vpop.f32.mrf.mxu0
      %v548 = vadd.f32 0.0, %v547
      %549 = vmatmul.bf16.gmra.mxu0 %v512
      %v550 = vpop.f32.mrf.mxu0
      %v551 = vadd.f32 0.0, %v550
      %v552 = vpop.f32.mrf.mxu0
      %v553 = vadd.f32 0.0, %v552
      %554 = vmatmul.bf16.gmra.mxu0 %v515
      %v555 = vpop.f32.mrf.mxu0
      %v556 = vadd.f32 0.0, %v555
      %v557 = vpop.f32.mrf.mxu0
      %v558 = vadd.f32 0.0, %v557
      %559 = vmatmul.bf16.gmra.mxu0 %v518
      %v560 = vpop.f32.mrf.mxu0
      %v561 = vadd.f32 0.0, %v560
      %v562 = vpop.f32.mrf.mxu0
      %v563 = vadd.f32 0.0, %v562
      %564 = vmatmul.bf16.gmra.mxu0 %v521
      %v565 = vpop.f32.mrf.mxu0
      %v566 = vadd.f32 0.0, %v565
      %v567 = vpop.f32.mrf.mxu0
      %v568 = vadd.f32 0.0, %v567
      %569 = vmatmul.bf16.gmra.mxu0 %v524
      %v570 = vpop.f32.mrf.mxu0
      %v571 = vadd.f32 0.0, %v570
      %v572 = vpop.f32.mrf.mxu0
      %v573 = vadd.f32 0.0, %v572
      %574 = vmatmul.bf16.gmra.mxu0 %v527
      %v575 = vpop.f32.mrf.mxu0
      %v576 = vadd.f32 0.0, %v575
      %v577 = vpop.f32.mrf.mxu0
      %v578 = vadd.f32 0.0, %v577
      %579 = vmatmul.bf16.gmra.mxu0 %v530
      %v580 = vpop.f32.mrf.mxu0
      %v581 = vadd.f32 0.0, %v580
      %v582 = vpop.f32.mrf.mxu0
      %v583 = vadd.f32 0.0, %v582
      %584 = vdwg.mxu0
      %v601 = vunpack.c.l.b16 %v249
      %v602 = vunpack.c.l.b16 %v250
      %v603 = vunpack.c.l.b16 %v252
      %v604 = vunpack.c.l.b16 %v253
      %v605 = vunpack.c.l.b16 %v255
      %v606 = vunpack.c.l.b16 %v256
      %v607 = vunpack.c.l.b16 %v258
      %v608 = vunpack.c.l.b16 %v259
      %v609 = vunpack.c.l.b16 %v261
      %v610 = vunpack.c.l.b16 %v262
      %v611 = vunpack.c.l.b16 %v264
      %v612 = vunpack.c.l.b16 %v265
      %v613 = vunpack.c.l.b16 %v267
      %v614 = vunpack.c.l.b16 %v268
      %v615 = vunpack.c.l.b16 %v270
      %v616 = vunpack.c.l.b16 %v271
      %v617 = vpack.c.b16 %v602, %v601
      %v618 = vpack.c.b16 %v604, %v603
      %v619 = vpack.c.b16 %v606, %v605
      %v620 = vpack.c.b16 %v608, %v607
      %v621 = vpack.c.b16 %v610, %v609
      %v622 = vpack.c.b16 %v612, %v611
      %v623 = vpack.c.b16 %v614, %v613
      %v624 = vpack.c.b16 %v616, %v615
      %v626 = vsel %vm507, %v617, 0
      %v629 = vsel %vm507, %v618, 0
      %v632 = vsel %vm507, %v619, 0
      %v635 = vsel %vm507, %v620, 0
      %v638 = vsel %vm507, %v621, 0
      %v641 = vsel %vm507, %v622, 0
      %v644 = vsel %vm507, %v623, 0
      %v647 = vsel %vm507, %v624, 0
      %v650 = vsel %vm532, %v279, 0
      %652 = vmatpush.bf16.msra.mxu0 0
      %653 = vmatpush.bf16.msra.mxu0 0
      %654 = vmatpush.bf16.msra.mxu0 0
      %655 = vmatpush.bf16.msra.mxu0 0
      %656 = vmatpush.bf16.msra.mxu0 0
      %657 = vmatpush.bf16.msra.mxu0 0
      %658 = vmatpush.bf16.msra.mxu0 0
      %659 = vmatpush.bf16.msra.mxu0 %v650
      %660 = vmatmul.bf16.gmra.mxu0 %v626
      %v661 = vpop.f32.mrf.mxu0
      %v662 = vadd.f32 %v546, %v661
      %v663 = vpop.f32.mrf.mxu0
      %v664 = vadd.f32 %v548, %v663
      %665 = vmatmul.bf16.gmra.mxu0 %v629
      %v666 = vpop.f32.mrf.mxu0
      %v667 = vadd.f32 %v551, %v666
      %v668 = vpop.f32.mrf.mxu0
      %v669 = vadd.f32 %v553, %v668
      %670 = vmatmul.bf16.gmra.mxu0 %v632
      %v671 = vpop.f32.mrf.mxu0
      %v672 = vadd.f32 %v556, %v671
      %v673 = vpop.f32.mrf.mxu0
      %v674 = vadd.f32 %v558, %v673
      %675 = vmatmul.bf16.gmra.mxu0 %v635
      %v676 = vpop.f32.mrf.mxu0
      %v677 = vadd.f32 %v561, %v676
      %v678 = vpop.f32.mrf.mxu0
      %v679 = vadd.f32 %v563, %v678
      %680 = vmatmul.bf16.gmra.mxu0 %v638
      %v681 = vpop.f32.mrf.mxu0
      %v682 = vadd.f32 %v566, %v681
      %v683 = vpop.f32.mrf.mxu0
      %v684 = vadd.f32 %v568, %v683
      %685 = vmatmul.bf16.gmra.mxu0 %v641
      %v686 = vpop.f32.mrf.mxu0
      %v687 = vadd.f32 %v571, %v686
      %v688 = vpop.f32.mrf.mxu0
      %v689 = vadd.f32 %v573, %v688
      %690 = vmatmul.bf16.gmra.mxu0 %v644
      %v691 = vpop.f32.mrf.mxu0
      %v692 = vadd.f32 %v576, %v691
      %v693 = vpop.f32.mrf.mxu0
      %v694 = vadd.f32 %v578, %v693
      %695 = vmatmul.bf16.gmra.mxu0 %v647
      %v696 = vpop.f32.mrf.mxu0
      %v697 = vadd.f32 %v581, %v696
      %v698 = vpop.f32.mrf.mxu0
      %v699 = vadd.f32 %v583, %v698
      %700 = vdwg.mxu0
      %vm709 = vcmask 1042432
      %vm710 = vcmask 1046532
      %vm711 = vmor %vm709, %vm710
      %v712 = vrot.slane %v249, 5
      %v713 = vrot.slane %v712, 4
      %v714 = vrot.slane %v250, 5
      %v715 = vsel %vm711, %v713, %v714
      %v716 = vrot.slane %v714, 4
      %v717 = vrot.slane %v251, 5
      %v718 = vsel %vm711, %v716, %v717
      %v719 = vrot.slane %v252, 5
      %v720 = vrot.slane %v719, 4
      %v721 = vrot.slane %v253, 5
      %v722 = vsel %vm711, %v720, %v721
      %v723 = vrot.slane %v721, 4
      %v724 = vrot.slane %v254, 5
      %v725 = vsel %vm711, %v723, %v724
      %v726 = vrot.slane %v255, 5
      %v727 = vrot.slane %v726, 4
      %v728 = vrot.slane %v256, 5
      %v729 = vsel %vm711, %v727, %v728
      %v730 = vrot.slane %v728, 4
      %v731 = vrot.slane %v257, 5
      %v732 = vsel %vm711, %v730, %v731
      %v733 = vrot.slane %v258, 5
      %v734 = vrot.slane %v733, 4
      %v735 = vrot.slane %v259, 5
      %v736 = vsel %vm711, %v734, %v735
      %v737 = vrot.slane %v735, 4
      %v738 = vrot.slane %v260, 5
      %v739 = vsel %vm711, %v737, %v738
      %v740 = vrot.slane %v261, 5
      %v741 = vrot.slane %v740, 4
      %v742 = vrot.slane %v262, 5
      %v743 = vsel %vm711, %v741, %v742
      %v744 = vrot.slane %v742, 4
      %v745 = vrot.slane %v263, 5
      %v746 = vsel %vm711, %v744, %v745
      %v747 = vrot.slane %v264, 5
      %v748 = vrot.slane %v747, 4
      %v749 = vrot.slane %v265, 5
      %v750 = vsel %vm711, %v748, %v749
      %v751 = vrot.slane %v749, 4
      %v752 = vrot.slane %v266, 5
      %v753 = vsel %vm711, %v751, %v752
      %v754 = vrot.slane %v267, 5
      %v755 = vrot.slane %v754, 4
      %v756 = vrot.slane %v268, 5
      %v757 = vsel %vm711, %v755, %v756
      %v758 = vrot.slane %v756, 4
      %v759 = vrot.slane %v269, 5
      %v760 = vsel %vm711, %v758, %v759
      %v761 = vrot.slane %v270, 5
      %v762 = vrot.slane %v761, 4
      %v763 = vrot.slane %v271, 5
      %v764 = vsel %vm711, %v762, %v763
      %v765 = vrot.slane %v763, 4
      %v766 = vrot.slane %v272, 5
      %v767 = vsel %vm711, %v765, %v766
      %v768 = vunpack.c.l.b16 %v715
      %v769 = vunpack.c.l.b16 %v718
      %v770 = vunpack.c.l.b16 %v722
      %v771 = vunpack.c.l.b16 %v725
      %v772 = vunpack.c.l.b16 %v729
      %v773 = vunpack.c.l.b16 %v732
      %v774 = vunpack.c.l.b16 %v736
      %v775 = vunpack.c.l.b16 %v739
      %v776 = vunpack.c.l.b16 %v743
      %v777 = vunpack.c.l.b16 %v746
      %v778 = vunpack.c.l.b16 %v750
      %v779 = vunpack.c.l.b16 %v753
      %v780 = vunpack.c.l.b16 %v757
      %v781 = vunpack.c.l.b16 %v760
      %v782 = vunpack.c.l.b16 %v764
      %v783 = vunpack.c.l.b16 %v767
      %v784 = vpack.c.b16 %v769, %v768
      %v785 = vpack.c.b16 %v771, %v770
      %v786 = vpack.c.b16 %v773, %v772
      %v787 = vpack.c.b16 %v775, %v774
      %v788 = vpack.c.b16 %v777, %v776
      %v789 = vpack.c.b16 %v779, %v778
      %v790 = vpack.c.b16 %v781, %v780
      %v791 = vpack.c.b16 %v783, %v782
      %v793 = vsel %vm507, %v784, 0
      %v796 = vsel %vm507, %v785, 0
      %v799 = vsel %vm507, %v786, 0
      %v802 = vsel %vm507, %v787, 0
      %v805 = vsel %vm507, %v788, 0
      %v808 = vsel %vm507, %v789, 0
      %v811 = vsel %vm507, %v790, 0
      %v814 = vsel %vm507, %v791, 0
      %v817 = vsel %vm532, %v281, 0
      %819 = vmatpush.bf16.msra.mxu0 0
      %820 = vmatpush.bf16.msra.mxu0 0
      %821 = vmatpush.bf16.msra.mxu0 0
      %822 = vmatpush.bf16.msra.mxu0 0
      %823 = vmatpush.bf16.msra.mxu0 0
      %824 = vmatpush.bf16.msra.mxu0 0
      %825 = vmatpush.bf16.msra.mxu0 0
      %826 = vmatpush.bf16.msra.mxu0 %v817
      %827 = vmatmul.bf16.gmra.mxu0 %v793
      %v828 = vpop.f32.mrf.mxu0
      %v829 = vadd.f32 0.0, %v828
      %v830 = vpop.f32.mrf.mxu0
      %v831 = vadd.f32 0.0, %v830
      %832 = vmatmul.bf16.gmra.mxu0 %v796
      %v833 = vpop.f32.mrf.mxu0
      %v834 = vadd.f32 0.0, %v833
      %v835 = vpop.f32.mrf.mxu0
      %v836 = vadd.f32 0.0, %v835
      %837 = vmatmul.bf16.gmra.mxu0 %v799
      %v838 = vpop.f32.mrf.mxu0
      %v839 = vadd.f32 0.0, %v838
      %v840 = vpop.f32.mrf.mxu0
      %v841 = vadd.f32 0.0, %v840
      %842 = vmatmul.bf16.gmra.mxu0 %v802
      %v843 = vpop.f32.mrf.mxu0
      %v844 = vadd.f32 0.0, %v843
      %v845 = vpop.f32.mrf.mxu0
      %v846 = vadd.f32 0.0, %v845
      %847 = vmatmul.bf16.gmra.mxu0 %v805
      %v848 = vpop.f32.mrf.mxu0
      %v849 = vadd.f32 0.0, %v848
      %v850 = vpop.f32.mrf.mxu0
      %v851 = vadd.f32 0.0, %v850
      %852 = vmatmul.bf16.gmra.mxu0 %v808
      %v853 = vpop.f32.mrf.mxu0
      %v854 = vadd.f32 0.0, %v853
      %v855 = vpop.f32.mrf.mxu0
      %v856 = vadd.f32 0.0, %v855
      %857 = vmatmul.bf16.gmra.mxu0 %v811
      %v858 = vpop.f32.mrf.mxu0
      %v859 = vadd.f32 0.0, %v858
      %v860 = vpop.f32.mrf.mxu0
      %v861 = vadd.f32 0.0, %v860
      %862 = vmatmul.bf16.gmra.mxu0 %v814
      %v863 = vpop.f32.mrf.mxu0
      %v864 = vadd.f32 0.0, %v863
      %v865 = vpop.f32.mrf.mxu0
      %v866 = vadd.f32 0.0, %v865
      %867 = vdwg.mxu0
      %v868 = vadd.f32 %v662, %v829
      %v869 = vadd.f32 %v664, %v831
      %v870 = vadd.f32 %v667, %v834
      %v871 = vadd.f32 %v669, %v836
      %v872 = vadd.f32 %v672, %v839
      %v873 = vadd.f32 %v674, %v841
      %v874 = vadd.f32 %v677, %v844
      %v875 = vadd.f32 %v679, %v846
      %v876 = vadd.f32 %v682, %v849
      %v877 = vadd.f32 %v684, %v851
      %v878 = vadd.f32 %v687, %v854
      %v879 = vadd.f32 %v689, %v856
      %v880 = vadd.f32 %v692, %v859
      %v881 = vadd.f32 %v694, %v861
      %v882 = vadd.f32 %v697, %v864
      %v883 = vadd.f32 %v699, %v866
      %v886 = vunpack.c.l.b16 %v273
      %v887 = vunpack.c.l.b16 %v274
      %v888 = vpack.c.b16 %v887, %v886
      %v890 = vsel %vm507, %v888, 0
      %v893 = vsel %vm532, %v282, 0
      %895 = vmatpush.bf16.msra.mxu0 0
      %896 = vmatpush.bf16.msra.mxu0 0
      %897 = vmatpush.bf16.msra.mxu0 0
      %898 = vmatpush.bf16.msra.mxu0 0
      %899 = vmatpush.bf16.msra.mxu0 0
      %900 = vmatpush.bf16.msra.mxu0 0
      %901 = vmatpush.bf16.msra.mxu0 0
      %902 = vmatpush.bf16.msra.mxu0 %v893
      %903 = vmatmul.bf16.gmra.mxu0 %v629
      %v904 = vpop.f32.mrf.mxu0
      %v905 = vadd.f32 0.0, %v904
      %v906 = vpop.f32.mrf.mxu0
      %v907 = vadd.f32 0.0, %v906
      %908 = vmatmul.bf16.gmra.mxu0 %v632
      %v909 = vpop.f32.mrf.mxu0
      %v910 = vadd.f32 0.0, %v909
      %v911 = vpop.f32.mrf.mxu0
      %v912 = vadd.f32 0.0, %v911
      %913 = vmatmul.bf16.gmra.mxu0 %v635
      %v914 = vpop.f32.mrf.mxu0
      %v915 = vadd.f32 0.0, %v914
      %v916 = vpop.f32.mrf.mxu0
      %v917 = vadd.f32 0.0, %v916
      %918 = vmatmul.bf16.gmra.mxu0 %v638
      %v919 = vpop.f32.mrf.mxu0
      %v920 = vadd.f32 0.0, %v919
      %v921 = vpop.f32.mrf.mxu0
      %v922 = vadd.f32 0.0, %v921
      %923 = vmatmul.bf16.gmra.mxu0 %v641
      %v924 = vpop.f32.mrf.mxu0
      %v925 = vadd.f32 0.0, %v924
      %v926 = vpop.f32.mrf.mxu0
      %v927 = vadd.f32 0.0, %v926
      %928 = vmatmul.bf16.gmra.mxu0 %v644
      %v929 = vpop.f32.mrf.mxu0
      %v930 = vadd.f32 0.0, %v929
      %v931 = vpop.f32.mrf.mxu0
      %v932 = vadd.f32 0.0, %v931
      %933 = vmatmul.bf16.gmra.mxu0 %v647
      %v934 = vpop.f32.mrf.mxu0
      %v935 = vadd.f32 0.0, %v934
      %v936 = vpop.f32.mrf.mxu0
      %v937 = vadd.f32 0.0, %v936
      %938 = vmatmul.bf16.gmra.mxu0 %v890
      %v939 = vpop.f32.mrf.mxu0
      %v940 = vadd.f32 0.0, %v939
      %v941 = vpop.f32.mrf.mxu0
      %v942 = vadd.f32 0.0, %v941
      %943 = vdwg.mxu0
      %v944 = vadd.f32 %v868, %v905
      %v945 = vadd.f32 %v869, %v907
      %v946 = vadd.f32 %v870, %v910
      %v947 = vadd.f32 %v871, %v912
      %v948 = vadd.f32 %v872, %v915
      %v949 = vadd.f32 %v873, %v917
      %v950 = vadd.f32 %v874, %v920
      %v951 = vadd.f32 %v875, %v922
      %v952 = vadd.f32 %v876, %v925
      %v953 = vadd.f32 %v877, %v927
      %v954 = vadd.f32 %v878, %v930
      %v955 = vadd.f32 %v879, %v932
      %v956 = vadd.f32 %v880, %v935
      %v957 = vadd.f32 %v881, %v937
      %v958 = vadd.f32 %v882, %v940
      %v959 = vadd.f32 %v883, %v942
      %v961 = vshrl.u32 %v273, 16
      %v963 = vrot.slane %v961, 4
      %v964 = vshll.u32 %v273, 16
      %v966 = vrot.slane %v964, 5
      %v967 = vor.u32 %v963, %v966
      %v968 = vrot.slane %v967, 4
      %v970 = vshll.u32 %v274, 16
      %v972 = vrot.slane %v970, 5
      %v973 = vsel %vm290, %v968, %v972
      %v974 = vshrl.u32 %v274, 16
      %v976 = vrot.slane %v974, 4
      %v977 = vor.u32 %v976, %v972
      %v978 = vrot.slane %v977, 4
      %v980 = vshll.u32 %v275, 16
      %v982 = vrot.slane %v980, 5
      %v983 = vsel %vm290, %v978, %v982
      %v984 = vunpack.c.l.b16 %v973
      %v985 = vunpack.c.l.b16 %v983
      %v986 = vpack.c.b16 %v985, %v984
      %v988 = vsel %vm507, %v986, 0
      %v991 = vsel %vm532, %v283, 0
      %993 = vmatpush.bf16.msra.mxu0 0
      %994 = vmatpush.bf16.msra.mxu0 0
      %995 = vmatpush.bf16.msra.mxu0 0
      %996 = vmatpush.bf16.msra.mxu0 0
      %997 = vmatpush.bf16.msra.mxu0 0
      %998 = vmatpush.bf16.msra.mxu0 0
      %999 = vmatpush.bf16.msra.mxu0 0
      %1000 = vmatpush.bf16.msra.mxu0 %v991
      %1001 = vmatmul.bf16.gmra.mxu0 %v512
      %v1002 = vpop.f32.mrf.mxu0
      %v1003 = vadd.f32 0.0, %v1002
      %v1004 = vpop.f32.mrf.mxu0
      %v1005 = vadd.f32 0.0, %v1004
      %1006 = vmatmul.bf16.gmra.mxu0 %v515
      %v1007 = vpop.f32.mrf.mxu0
      %v1008 = vadd.f32 0.0, %v1007
      %v1009 = vpop.f32.mrf.mxu0
      %v1010 = vadd.f32 0.0, %v1009
      %1011 = vmatmul.bf16.gmra.mxu0 %v518
      %v1012 = vpop.f32.mrf.mxu0
      %v1013 = vadd.f32 0.0, %v1012
      %v1014 = vpop.f32.mrf.mxu0
      %v1015 = vadd.f32 0.0, %v1014
      %1016 = vmatmul.bf16.gmra.mxu0 %v521
      %v1017 = vpop.f32.mrf.mxu0
      %v1018 = vadd.f32 0.0, %v1017
      %v1019 = vpop.f32.mrf.mxu0
      %v1020 = vadd.f32 0.0, %v1019
      %1021 = vmatmul.bf16.gmra.mxu0 %v524
      %v1022 = vpop.f32.mrf.mxu0
      %v1023 = vadd.f32 0.0, %v1022
      %v1024 = vpop.f32.mrf.mxu0
      %v1025 = vadd.f32 0.0, %v1024
      %1026 = vmatmul.bf16.gmra.mxu0 %v527
      %v1027 = vpop.f32.mrf.mxu0
      %v1028 = vadd.f32 0.0, %v1027
      %v1029 = vpop.f32.mrf.mxu0
      %v1030 = vadd.f32 0.0, %v1029
      %1031 = vmatmul.bf16.gmra.mxu0 %v530
      %v1032 = vpop.f32.mrf.mxu0
      %v1033 = vadd.f32 0.0, %v1032
      %v1034 = vpop.f32.mrf.mxu0
      %v1035 = vadd.f32 0.0, %v1034
      %1036 = vmatmul.bf16.gmra.mxu0 %v988
      %v1037 = vpop.f32.mrf.mxu0
      %v1038 = vadd.f32 0.0, %v1037
      %v1039 = vpop.f32.mrf.mxu0
      %v1040 = vadd.f32 0.0, %v1039
      %1041 = vdwg.mxu0
      %v1042 = vadd.f32 %v944, %v1003
      %v1043 = vadd.f32 %v945, %v1005
      %v1044 = vadd.f32 %v946, %v1008
      %v1045 = vadd.f32 %v947, %v1010
      %v1046 = vadd.f32 %v948, %v1013
      %v1047 = vadd.f32 %v949, %v1015
      %v1048 = vadd.f32 %v950, %v1018
      %v1049 = vadd.f32 %v951, %v1020
      %v1050 = vadd.f32 %v952, %v1023
      %v1051 = vadd.f32 %v953, %v1025
      %v1052 = vadd.f32 %v954, %v1028
      %v1053 = vadd.f32 %v955, %v1030
      %v1054 = vadd.f32 %v956, %v1033
      %v1055 = vadd.f32 %v957, %v1035
      %v1056 = vadd.f32 %v958, %v1038
      %v1057 = vadd.f32 %v959, %v1040
      %v1059 = vrot.slane %v273, 5
      %v1060 = vrot.slane %v1059, 4
      %v1061 = vrot.slane %v274, 5
      %v1062 = vsel %vm711, %v1060, %v1061
      %v1063 = vrot.slane %v1061, 4
      %v1064 = vrot.slane %v275, 5
      %v1065 = vsel %vm711, %v1063, %v1064
      %v1066 = vunpack.c.l.b16 %v1062
      %v1067 = vunpack.c.l.b16 %v1065
      %v1068 = vpack.c.b16 %v1067, %v1066
      %v1070 = vsel %vm507, %v1068, 0
      %v1073 = vsel %vm532, %v284, 0
      %1075 = vmatpush.bf16.msra.mxu0 0
      %1076 = vmatpush.bf16.msra.mxu0 0
      %1077 = vmatpush.bf16.msra.mxu0 0
      %1078 = vmatpush.bf16.msra.mxu0 0
      %1079 = vmatpush.bf16.msra.mxu0 0
      %1080 = vmatpush.bf16.msra.mxu0 0
      %1081 = vmatpush.bf16.msra.mxu0 0
      %1082 = vmatpush.bf16.msra.mxu0 %v1073
      %1083 = vmatmul.bf16.gmra.mxu0 %v796
      %v1084 = vpop.f32.mrf.mxu0
      %v1085 = vadd.f32 0.0, %v1084
      %v1086 = vpop.f32.mrf.mxu0
      %v1087 = vadd.f32 0.0, %v1086
      %1088 = vmatmul.bf16.gmra.mxu0 %v799
      %v1089 = vpop.f32.mrf.mxu0
      %v1090 = vadd.f32 0.0, %v1089
      %v1091 = vpop.f32.mrf.mxu0
      %v1092 = vadd.f32 0.0, %v1091
      %1093 = vmatmul.bf16.gmra.mxu0 %v802
      %v1094 = vpop.f32.mrf.mxu0
      %v1095 = vadd.f32 0.0, %v1094
      %v1096 = vpop.f32.mrf.mxu0
      %v1097 = vadd.f32 0.0, %v1096
      %1098 = vmatmul.bf16.gmra.mxu0 %v805
      %v1099 = vpop.f32.mrf.mxu0
      %v1100 = vadd.f32 0.0, %v1099
      %v1101 = vpop.f32.mrf.mxu0
      %v1102 = vadd.f32 0.0, %v1101
      %1103 = vmatmul.bf16.gmra.mxu0 %v808
      %v1104 = vpop.f32.mrf.mxu0
      %v1105 = vadd.f32 0.0, %v1104
      %v1106 = vpop.f32.mrf.mxu0
      %v1107 = vadd.f32 0.0, %v1106
      %1108 = vmatmul.bf16.gmra.mxu0 %v811
      %v1109 = vpop.f32.mrf.mxu0
      %v1110 = vadd.f32 0.0, %v1109
      %v1111 = vpop.f32.mrf.mxu0
      %v1112 = vadd.f32 0.0, %v1111
      %1113 = vmatmul.bf16.gmra.mxu0 %v814
      %v1114 = vpop.f32.mrf.mxu0
      %v1115 = vadd.f32 0.0, %v1114
      %v1116 = vpop.f32.mrf.mxu0
      %v1117 = vadd.f32 0.0, %v1116
      %1118 = vmatmul.bf16.gmra.mxu0 %v1070
      %v1119 = vpop.f32.mrf.mxu0
      %v1120 = vadd.f32 0.0, %v1119
      %v1121 = vpop.f32.mrf.mxu0
      %v1122 = vadd.f32 0.0, %v1121
      %1123 = vdwg.mxu0
      %v1124 = vadd.f32 %v1042, %v1085
      %v1125 = vadd.f32 %v1043, %v1087
      %v1126 = vadd.f32 %v1044, %v1090
      %v1127 = vadd.f32 %v1045, %v1092
      %v1128 = vadd.f32 %v1046, %v1095
      %v1129 = vadd.f32 %v1047, %v1097
      %v1130 = vadd.f32 %v1048, %v1100
      %v1131 = vadd.f32 %v1049, %v1102
      %v1132 = vadd.f32 %v1050, %v1105
      %v1133 = vadd.f32 %v1051, %v1107
      %v1134 = vadd.f32 %v1052, %v1110
      %v1135 = vadd.f32 %v1053, %v1112
      %v1136 = vadd.f32 %v1054, %v1115
      %v1137 = vadd.f32 %v1055, %v1117
      %v1138 = vadd.f32 %v1056, %v1120
      %v1139 = vadd.f32 %v1057, %v1122
      %v1142 = vunpack.c.l.b16 %v276
      %v1143 = vunpack.c.l.b16 %v277
      %v1144 = vpack.c.b16 %v1143, %v1142
      %v1146 = vsel %vm507, %v1144, 0
      %v1149 = vsel %vm532, %v285, 0
      %1151 = vmatpush.bf16.msra.mxu0 0
      %1152 = vmatpush.bf16.msra.mxu0 0
      %1153 = vmatpush.bf16.msra.mxu0 0
      %1154 = vmatpush.bf16.msra.mxu0 0
      %1155 = vmatpush.bf16.msra.mxu0 0
      %1156 = vmatpush.bf16.msra.mxu0 0
      %1157 = vmatpush.bf16.msra.mxu0 0
      %1158 = vmatpush.bf16.msra.mxu0 %v1149
      %1159 = vmatmul.bf16.gmra.mxu0 %v632
      %v1160 = vpop.f32.mrf.mxu0
      %v1161 = vadd.f32 0.0, %v1160
      %v1162 = vpop.f32.mrf.mxu0
      %v1163 = vadd.f32 0.0, %v1162
      %1164 = vmatmul.bf16.gmra.mxu0 %v635
      %v1165 = vpop.f32.mrf.mxu0
      %v1166 = vadd.f32 0.0, %v1165
      %v1167 = vpop.f32.mrf.mxu0
      %v1168 = vadd.f32 0.0, %v1167
      %1169 = vmatmul.bf16.gmra.mxu0 %v638
      %v1170 = vpop.f32.mrf.mxu0
      %v1171 = vadd.f32 0.0, %v1170
      %v1172 = vpop.f32.mrf.mxu0
      %v1173 = vadd.f32 0.0, %v1172
      %1174 = vmatmul.bf16.gmra.mxu0 %v641
      %v1175 = vpop.f32.mrf.mxu0
      %v1176 = vadd.f32 0.0, %v1175
      %v1177 = vpop.f32.mrf.mxu0
      %v1178 = vadd.f32 0.0, %v1177
      %1179 = vmatmul.bf16.gmra.mxu0 %v644
      %v1180 = vpop.f32.mrf.mxu0
      %v1181 = vadd.f32 0.0, %v1180
      %v1182 = vpop.f32.mrf.mxu0
      %v1183 = vadd.f32 0.0, %v1182
      %1184 = vmatmul.bf16.gmra.mxu0 %v647
      %v1185 = vpop.f32.mrf.mxu0
      %v1186 = vadd.f32 0.0, %v1185
      %v1187 = vpop.f32.mrf.mxu0
      %v1188 = vadd.f32 0.0, %v1187
      %1189 = vmatmul.bf16.gmra.mxu0 %v890
      %v1190 = vpop.f32.mrf.mxu0
      %v1191 = vadd.f32 0.0, %v1190
      %v1192 = vpop.f32.mrf.mxu0
      %v1193 = vadd.f32 0.0, %v1192
      %1194 = vmatmul.bf16.gmra.mxu0 %v1146
      %v1195 = vpop.f32.mrf.mxu0
      %v1196 = vadd.f32 0.0, %v1195
      %v1197 = vpop.f32.mrf.mxu0
      %v1198 = vadd.f32 0.0, %v1197
      %1199 = vdwg.mxu0
      %v1200 = vadd.f32 %v1124, %v1161
      %v1201 = vadd.f32 %v1125, %v1163
      %v1202 = vadd.f32 %v1126, %v1166
      %v1203 = vadd.f32 %v1127, %v1168
      %v1204 = vadd.f32 %v1128, %v1171
      %v1205 = vadd.f32 %v1129, %v1173
      %v1206 = vadd.f32 %v1130, %v1176
      %v1207 = vadd.f32 %v1131, %v1178
      %v1208 = vadd.f32 %v1132, %v1181
      %v1209 = vadd.f32 %v1133, %v1183
      %v1210 = vadd.f32 %v1134, %v1186
      %v1211 = vadd.f32 %v1135, %v1188
      %v1212 = vadd.f32 %v1136, %v1191
      %v1213 = vadd.f32 %v1137, %v1193
      %v1214 = vadd.f32 %v1138, %v1196
      %v1215 = vadd.f32 %v1139, %v1198
      %v1217 = vshrl.u32 %v276, 16
      %v1219 = vrot.slane %v1217, 4
      %v1220 = vshll.u32 %v276, 16
      %v1222 = vrot.slane %v1220, 5
      %v1223 = vor.u32 %v1219, %v1222
      %v1224 = vrot.slane %v1223, 4
      %v1226 = vshll.u32 %v277, 16
      %v1228 = vrot.slane %v1226, 5
      %v1229 = vsel %vm290, %v1224, %v1228
      %v1230 = vshrl.u32 %v277, 16
      %v1232 = vrot.slane %v1230, 4
      %v1233 = vor.u32 %v1232, %v1228
      %v1234 = vrot.slane %v1233, 4
      %v1236 = vshll.u32 %v278, 16
      %v1238 = vrot.slane %v1236, 5
      %v1239 = vsel %vm290, %v1234, %v1238
      %v1240 = vunpack.c.l.b16 %v1229
      %v1241 = vunpack.c.l.b16 %v1239
      %v1242 = vpack.c.b16 %v1241, %v1240
      %v1244 = vsel %vm507, %v1242, 0
      %v1247 = vsel %vm532, %v286, 0
      %1249 = vmatpush.bf16.msra.mxu0 0
      %1250 = vmatpush.bf16.msra.mxu0 0
      %1251 = vmatpush.bf16.msra.mxu0 0
      %1252 = vmatpush.bf16.msra.mxu0 0
      %1253 = vmatpush.bf16.msra.mxu0 0
      %1254 = vmatpush.bf16.msra.mxu0 0
      %1255 = vmatpush.bf16.msra.mxu0 0
      %1256 = vmatpush.bf16.msra.mxu0 %v1247
      %1257 = vmatmul.bf16.gmra.mxu0 %v515
      %v1258 = vpop.f32.mrf.mxu0
      %v1259 = vadd.f32 0.0, %v1258
      %v1260 = vpop.f32.mrf.mxu0
      %v1261 = vadd.f32 0.0, %v1260
      %1262 = vmatmul.bf16.gmra.mxu0 %v518
      %v1263 = vpop.f32.mrf.mxu0
      %v1264 = vadd.f32 0.0, %v1263
      %v1265 = vpop.f32.mrf.mxu0
      %v1266 = vadd.f32 0.0, %v1265
      %1267 = vmatmul.bf16.gmra.mxu0 %v521
      %v1268 = vpop.f32.mrf.mxu0
      %v1269 = vadd.f32 0.0, %v1268
      %v1270 = vpop.f32.mrf.mxu0
      %v1271 = vadd.f32 0.0, %v1270
      %1272 = vmatmul.bf16.gmra.mxu0 %v524
      %v1273 = vpop.f32.mrf.mxu0
      %v1274 = vadd.f32 0.0, %v1273
      %v1275 = vpop.f32.mrf.mxu0
      %v1276 = vadd.f32 0.0, %v1275
      %1277 = vmatmul.bf16.gmra.mxu0 %v527
      %v1278 = vpop.f32.mrf.mxu0
      %v1279 = vadd.f32 0.0, %v1278
      %v1280 = vpop.f32.mrf.mxu0
      %v1281 = vadd.f32 0.0, %v1280
      %1282 = vmatmul.bf16.gmra.mxu0 %v530
      %v1283 = vpop.f32.mrf.mxu0
      %v1284 = vadd.f32 0.0, %v1283
      %v1285 = vpop.f32.mrf.mxu0
      %v1286 = vadd.f32 0.0, %v1285
      %1287 = vmatmul.bf16.gmra.mxu0 %v988
      %v1288 = vpop.f32.mrf.mxu0
      %v1289 = vadd.f32 0.0, %v1288
      %v1290 = vpop.f32.mrf.mxu0
      %v1291 = vadd.f32 0.0, %v1290
      %1292 = vmatmul.bf16.gmra.mxu0 %v1244
      %v1293 = vpop.f32.mrf.mxu0
      %v1294 = vadd.f32 0.0, %v1293
      %v1295 = vpop.f32.mrf.mxu0
      %v1296 = vadd.f32 0.0, %v1295
      %1297 = vdwg.mxu0
      %v1298 = vadd.f32 %v1200, %v1259
      %v1299 = vadd.f32 %v1201, %v1261
      %v1300 = vadd.f32 %v1202, %v1264
      %v1301 = vadd.f32 %v1203, %v1266
      %v1302 = vadd.f32 %v1204, %v1269
      %v1303 = vadd.f32 %v1205, %v1271
      %v1304 = vadd.f32 %v1206, %v1274
      %v1305 = vadd.f32 %v1207, %v1276
      %v1306 = vadd.f32 %v1208, %v1279
      %v1307 = vadd.f32 %v1209, %v1281
      %v1308 = vadd.f32 %v1210, %v1284
      %v1309 = vadd.f32 %v1211, %v1286
      %v1310 = vadd.f32 %v1212, %v1289
      %v1311 = vadd.f32 %v1213, %v1291
      %v1312 = vadd.f32 %v1214, %v1294
      %v1313 = vadd.f32 %v1215, %v1296
      %v1315 = vrot.slane %v276, 5
      %v1316 = vrot.slane %v1315, 4
      %v1317 = vrot.slane %v277, 5
      %v1318 = vsel %vm711, %v1316, %v1317
      %v1319 = vrot.slane %v1317, 4
      %v1320 = vrot.slane %v278, 5
      %v1321 = vsel %vm711, %v1319, %v1320
      %v1322 = vunpack.c.l.b16 %v1318
      %v1323 = vunpack.c.l.b16 %v1321
      %v1324 = vpack.c.b16 %v1323, %v1322
      %v1326 = vsel %vm507, %v1324, 0
      %v1329 = vsel %vm532, %v287, 0
      %1331 = vmatpush.bf16.msra.mxu0 0
      %1332 = vmatpush.bf16.msra.mxu0 0
      %1333 = vmatpush.bf16.msra.mxu0 0
      %1334 = vmatpush.bf16.msra.mxu0 0
      %1335 = vmatpush.bf16.msra.mxu0 0
      %1336 = vmatpush.bf16.msra.mxu0 0
      %1337 = vmatpush.bf16.msra.mxu0 0
      %1338 = vmatpush.bf16.msra.mxu0 %v1329
      %1339 = vmatmul.bf16.gmra.mxu0 %v799
      %v1340 = vpop.f32.mrf.mxu0
      %v1341 = vadd.f32 0.0, %v1340
      %v1342 = vpop.f32.mrf.mxu0
      %v1343 = vadd.f32 0.0, %v1342
      %1344 = vmatmul.bf16.gmra.mxu0 %v802
      %v1345 = vpop.f32.mrf.mxu0
      %v1346 = vadd.f32 0.0, %v1345
      %v1347 = vpop.f32.mrf.mxu0
      %v1348 = vadd.f32 0.0, %v1347
      %1349 = vmatmul.bf16.gmra.mxu0 %v805
      %v1350 = vpop.f32.mrf.mxu0
      %v1351 = vadd.f32 0.0, %v1350
      %v1352 = vpop.f32.mrf.mxu0
      %v1353 = vadd.f32 0.0, %v1352
      %1354 = vmatmul.bf16.gmra.mxu0 %v808
      %v1355 = vpop.f32.mrf.mxu0
      %v1356 = vadd.f32 0.0, %v1355
      %v1357 = vpop.f32.mrf.mxu0
      %v1358 = vadd.f32 0.0, %v1357
      %1359 = vmatmul.bf16.gmra.mxu0 %v811
      %v1360 = vpop.f32.mrf.mxu0
      %v1361 = vadd.f32 0.0, %v1360
      %v1362 = vpop.f32.mrf.mxu0
      %v1363 = vadd.f32 0.0, %v1362
      %1364 = vmatmul.bf16.gmra.mxu0 %v814
      %v1365 = vpop.f32.mrf.mxu0
      %v1366 = vadd.f32 0.0, %v1365
      %v1367 = vpop.f32.mrf.mxu0
      %v1368 = vadd.f32 0.0, %v1367
      %1369 = vmatmul.bf16.gmra.mxu0 %v1070
      %v1370 = vpop.f32.mrf.mxu0
      %v1371 = vadd.f32 0.0, %v1370
      %v1372 = vpop.f32.mrf.mxu0
      %v1373 = vadd.f32 0.0, %v1372
      %1374 = vmatmul.bf16.gmra.mxu0 %v1326
      %v1375 = vpop.f32.mrf.mxu0
      %v1376 = vadd.f32 0.0, %v1375
      %v1377 = vpop.f32.mrf.mxu0
      %v1378 = vadd.f32 0.0, %v1377
      %1379 = vdwg.mxu0
      %v1380 = vadd.f32 %v1298, %v1341
      %v1381 = vadd.f32 %v1299, %v1343
      %v1382 = vadd.f32 %v1300, %v1346
      %v1383 = vadd.f32 %v1301, %v1348
      %v1384 = vadd.f32 %v1302, %v1351
      %v1385 = vadd.f32 %v1303, %v1353
      %v1386 = vadd.f32 %v1304, %v1356
      %v1387 = vadd.f32 %v1305, %v1358
      %v1388 = vadd.f32 %v1306, %v1361
      %v1389 = vadd.f32 %v1307, %v1363
      %v1390 = vadd.f32 %v1308, %v1366
      %v1391 = vadd.f32 %v1309, %v1368
      %v1392 = vadd.f32 %v1310, %v1371
      %v1393 = vadd.f32 %v1311, %v1373
      %v1394 = vadd.f32 %v1312, %v1376
      %v1395 = vadd.f32 %v1313, %v1378
      %v1396 = vld [vmem:[%s2] sm:$0x1]
      %v1398 = vperm.slane %v1396, 0
      %v1400 = vadd.f32 %v1380, %v1398
      %v1401 = vadd.f32 %v1381, %v1398
      %v1402 = vadd.f32 %v1382, %v1398
      %v1403 = vadd.f32 %v1383, %v1398
      %v1404 = vadd.f32 %v1384, %v1398
      %v1405 = vadd.f32 %v1385, %v1398
      %v1406 = vadd.f32 %v1386, %v1398
      %v1407 = vadd.f32 %v1387, %v1398
      %v1408 = vadd.f32 %v1388, %v1398
      %v1409 = vadd.f32 %v1389, %v1398
      %v1410 = vadd.f32 %v1390, %v1398
      %v1411 = vadd.f32 %v1391, %v1398
      %v1412 = vadd.f32 %v1392, %v1398
      %v1413 = vadd.f32 %v1393, %v1398
      %v1414 = vadd.f32 %v1394, %v1398
      %v1415 = vadd.f32 %v1395, %v1398
      %vm1416 = vcmp.gt.f32.partialorder %v1400, 0.0
      %vm1417 = vcmp.gt.f32.partialorder %v1401, 0.0
      %vm1418 = vcmp.gt.f32.partialorder %v1402, 0.0
      %vm1419 = vcmp.gt.f32.partialorder %v1403, 0.0
      %vm1420 = vcmp.gt.f32.partialorder %v1404, 0.0
      %vm1421 = vcmp.gt.f32.partialorder %v1405, 0.0
      %vm1422 = vcmp.gt.f32.partialorder %v1406, 0.0
      %vm1423 = vcmp.gt.f32.partialorder %v1407, 0.0
      %vm1424 = vcmp.gt.f32.partialorder %v1408, 0.0
      %vm1425 = vcmp.gt.f32.partialorder %v1409, 0.0
      %vm1426 = vcmp.gt.f32.partialorder %v1410, 0.0
      %vm1427 = vcmp.gt.f32.partialorder %v1411, 0.0
      %vm1428 = vcmp.gt.f32.partialorder %v1412, 0.0
      %vm1429 = vcmp.gt.f32.partialorder %v1413, 0.0
      %vm1430 = vcmp.gt.f32.partialorder %v1414, 0.0
      %vm1431 = vcmp.gt.f32.partialorder %v1415, 0.0
      %v1432 = vmul.f32 %v1400, 0.2
      %v1433 = vmul.f32 %v1401, 0.2
      %v1434 = vmul.f32 %v1402, 0.2
      %v1435 = vmul.f32 %v1403, 0.2
      %v1436 = vmul.f32 %v1404, 0.2
      %v1437 = vmul.f32 %v1405, 0.2
      %v1438 = vmul.f32 %v1406, 0.2
      %v1439 = vmul.f32 %v1407, 0.2
      %v1440 = vmul.f32 %v1408, 0.2
      %v1441 = vmul.f32 %v1409, 0.2
      %v1442 = vmul.f32 %v1410, 0.2
      %v1443 = vmul.f32 %v1411, 0.2
      %v1444 = vmul.f32 %v1412, 0.2
      %v1445 = vmul.f32 %v1413, 0.2
      %v1446 = vmul.f32 %v1414, 0.2
      %v1447 = vmul.f32 %v1415, 0.2
      %v1448 = vsel %vm1416, %v1400, %v1432
      %v1449 = vsel %vm1417, %v1401, %v1433
      %v1450 = vsel %vm1418, %v1402, %v1434
      %v1451 = vsel %vm1419, %v1403, %v1435
      %v1452 = vsel %vm1420, %v1404, %v1436
      %v1453 = vsel %vm1421, %v1405, %v1437
      %v1454 = vsel %vm1422, %v1406, %v1438
      %v1455 = vsel %vm1423, %v1407, %v1439
      %v1456 = vsel %vm1424, %v1408, %v1440
      %v1457 = vsel %vm1425, %v1409, %v1441
      %v1458 = vsel %vm1426, %v1410, %v1442
      %v1459 = vsel %vm1427, %v1411, %v1443
      %v1460 = vsel %vm1428, %v1412, %v1444
      %v1461 = vsel %vm1429, %v1413, %v1445
      %v1462 = vsel %vm1430, %v1414, %v1446
      %v1463 = vsel %vm1431, %v1415, %v1447
      %v1464 = vadd.f32 %v1448, %v1449
      %v1465 = vadd.f32 %v1464, %v1450
      %v1466 = vadd.f32 %v1465, %v1451
      %v1467 = vadd.f32 %v1466, %v1452
      %v1468 = vadd.f32 %v1467, %v1453
      %v1469 = vadd.f32 %v1468, %v1454
      %v1470 = vadd.f32 %v1469, %v1455
      %v1471 = vadd.f32 %v1470, %v1456
      %v1472 = vadd.f32 %v1471, %v1457
      %v1473 = vadd.f32 %v1472, %v1458
      %v1474 = vadd.f32 %v1473, %v1459
      %v1475 = vadd.f32 %v1474, %v1460
      %v1476 = vadd.f32 %v1475, %v1461
      %v1477 = vadd.f32 %v1476, %v1462
      %v1478 = vadd.f32 %v1477, %v1463
      %v1479 = vrot.slane %v1478, 4
      %v1480 = vadd.f32 %v1478, %v1479
      %v1481 = vrot.slane %v1480, 2
      %v1482 = vadd.f32 %v1480, %v1481
      %v1483 = vrot.slane %v1482, 1
      %v1484 = vadd.f32 %v1482, %v1483
      %v1485 = vmul.f32 %v1448, %v1448
      %v1486 = vmul.f32 %v1449, %v1449
      %v1487 = vmul.f32 %v1450, %v1450
      %v1488 = vmul.f32 %v1451, %v1451
      %v1489 = vmul.f32 %v1452, %v1452
      %v1490 = vmul.f32 %v1453, %v1453
      %v1491 = vmul.f32 %v1454, %v1454
      %v1492 = vmul.f32 %v1455, %v1455
      %v1493 = vmul.f32 %v1456, %v1456
      %v1494 = vmul.f32 %v1457, %v1457
      %v1495 = vmul.f32 %v1458, %v1458
      %v1496 = vmul.f32 %v1459, %v1459
      %v1497 = vmul.f32 %v1460, %v1460
      %v1498 = vmul.f32 %v1461, %v1461
      %v1499 = vmul.f32 %v1462, %v1462
      %v1500 = vmul.f32 %v1463, %v1463
      %v1501 = vadd.f32 %v1485, %v1486
      %v1502 = vadd.f32 %v1501, %v1487
      %v1503 = vadd.f32 %v1502, %v1488
      %v1504 = vadd.f32 %v1503, %v1489
      %v1505 = vadd.f32 %v1504, %v1490
      %v1506 = vadd.f32 %v1505, %v1491
      %v1507 = vadd.f32 %v1506, %v1492
      %v1508 = vadd.f32 %v1507, %v1493
      %v1509 = vadd.f32 %v1508, %v1494
      %v1510 = vadd.f32 %v1509, %v1495
      %v1511 = vadd.f32 %v1510, %v1496
      %v1512 = vadd.f32 %v1511, %v1497
      %v1513 = vadd.f32 %v1512, %v1498
      %v1514 = vadd.f32 %v1513, %v1499
      %v1515 = vadd.f32 %v1514, %v1500
      %v1516 = vrot.slane %v1515, 4
      %v1517 = vadd.f32 %v1515, %v1516
      %v1518 = vrot.slane %v1517, 2
      %v1519 = vadd.f32 %v1517, %v1518
      %v1520 = vrot.slane %v1519, 1
      %v1521 = vadd.f32 %v1519, %v1520
      %vm1522 = vcmask 1040384
      %v1523 = vsel %vm1522, %v1484, %v1521
      %1524 = vst [vmem:[%s243] sm:$0x3] %v1523
      %v1525 = vpack.c.bf16 %v1448, %v1448
      %v1526 = vpack.c.bf16 %v1449, %v1449
      %v1527 = vpack.c.bf16 %v1450, %v1450
      %v1528 = vpack.c.bf16 %v1451, %v1451
      %v1529 = vpack.c.bf16 %v1452, %v1452
      %v1530 = vpack.c.bf16 %v1453, %v1453
      %v1531 = vpack.c.bf16 %v1454, %v1454
      %v1532 = vpack.c.bf16 %v1455, %v1455
      %v1533 = vpack.c.bf16 %v1456, %v1456
      %v1534 = vpack.c.bf16 %v1457, %v1457
      %v1535 = vpack.c.bf16 %v1458, %v1458
      %v1536 = vpack.c.bf16 %v1459, %v1459
      %v1537 = vpack.c.bf16 %v1460, %v1460
      %v1538 = vpack.c.bf16 %v1461, %v1461
      %v1539 = vpack.c.bf16 %v1462, %v1462
      %v1540 = vpack.c.bf16 %v1463, %v1463
      %1541 = vst [vmem:[%s234] sm:$0xf] %v1525
      %1542 = vst [vmem:[%s234 + $0x4] sm:$0xf] %v1526
      %1543 = vst [vmem:[%s234 + $0x8] sm:$0xf] %v1527
      %1544 = vst [vmem:[%s234 + $0xc] sm:$0xf] %v1528
      %1545 = vst [vmem:[%s234 + $0x10] sm:$0xf] %v1529
      %1546 = vst [vmem:[%s234 + $0x14] sm:$0xf] %v1530
      %1547 = vst [vmem:[%s234 + $0x18] sm:$0xf] %v1531
      %1548 = vst [vmem:[%s234 + $0x1c] sm:$0xf] %v1532
      %1549 = vst [vmem:[%s234 + $0x20] sm:$0xf] %v1533
      %1550 = vst [vmem:[%s234 + $0x24] sm:$0xf] %v1534
      %1551 = vst [vmem:[%s234 + $0x28] sm:$0xf] %v1535
      %1552 = vst [vmem:[%s234 + $0x2c] sm:$0xf] %v1536
      %1553 = vst [vmem:[%s234 + $0x30] sm:$0xf] %v1537
      %1554 = vst [vmem:[%s234 + $0x34] sm:$0xf] %v1538
      %1555 = vst [vmem:[%s234 + $0x38] sm:$0xf] %v1539
      %1556 = vst [vmem:[%s234 + $0x3c] sm:$0xf] %v1540
      %s1557 = smul.u32 8, %s21
      %p1558 = scmp.lt.s32.totalorder %s20, 1
      %s1559 = scalar_select %p1558, %s20, 1
      %p1560 = scmp.lt.s32.totalorder %s1557, 15
      %s1561 = scalar_select %p1560, %s1557, 15
      %s1562 = smul.addr %s1561, 2
      %s1563 = smul.addr %s1559, 32
      %s1564 = sadd.s32 %s1562, %s1563
      %s1565 = smul.addr %s1564, 4
      %s1566 = scalar_lea.vmem %s3, %s1565
      %p1567 = scmp.lt.s32.totalorder %s20, 1
      %s1568 = scalar_select %p1567, %s20, 1
      %p1569 = scmp.lt.s32.totalorder %s21, 1
      %s1570 = scalar_select %p1569, %s21, 1
      %s1571 = smul.addr %s1568, 2
      %s1572 = sadd.s32 %s1570, %s1571
      %s1573 = smul.addr %s1572, 2
      %s1574 = scalar_lea.vmem %s4, %s1573
      // Predicated region
      $region33: #{conv_spade_block_forward.2} parent=31 // pred_check
        %p1575 = pneg %p116
      $region34: #{conv_spade_block_forward.2} parent=31 // pred_check_branch
        %1577 = sbr.rel (%p1575) target = $region36
      $region35: #{conv_spade_block_forward.2} parent=31 // pred_region
        %s1578 = smul.u32 8, %s21
      $region36: #{conv_spade_block_forward.2} parent=31 // pred_fallthru
        _
      // Predicated region
      $region37: #{conv_spade_block_forward.2} parent=31 // pred_check
        %p1579 = pneg %p144
      $region38: #{conv_spade_block_forward.2} parent=31 // pred_check_branch
        %1581 = sbr.rel (%p1579) target = $region40
      $region39: #{conv_spade_block_forward.2} parent=31 // pred_region
        _
      $region40: #{conv_spade_block_forward.2} parent=31 // pred_fallthru
        _
    $region32: #{conv_spade_block_forward.2} parent=5 // pred_fallthru
      _
    %p1582 = scmp.le.s32.totalorder 2, %s11
    // Predicated region
    $region41: #{conv_spade_block_forward.2} parent=5 // pred_check
      %p1583 = pneg %p1582
    $region42: #{conv_spade_block_forward.2} parent=5 // pred_check_branch
      %1585 = sbr.rel (%p1583) target = $region44
    $region43: #{conv_spade_block_forward.2} parent=5 // pred_region
      %s1586 = ssub.s32 %s11, 2
      // Predicated region
      $region45: #{conv_spade_block_forward.2} parent=43 // pred_check
        %p1587 = pneg %p122
      $region46: #{conv_spade_block_forward.2} parent=43 // pred_check_branch
        %1589 = sbr.rel (%p1587) target = $region48
      $region47: #{conv_spade_block_forward.2} parent=43 // pred_region
        %s1590 = smul.u32 8, %s23
        %p1591 = scmp.lt.s32.totalorder %s22, 1
        %s1592 = scalar_select %p1591, %s22, 1
        %p1593 = scmp.lt.s32.totalorder %s1590, 15
        %s1594 = scalar_select %p1593, %s1590, 15
        %s1595 = smul.addr %s1594, 2
        %s1596 = smul.addr %s1592, 32
        %s1597 = sadd.s32 %s1595, %s1596
        %s1598 = smul.addr %s1597, 4
        %s1599 = scalar_lea.vmem %s3, %s1598
      $region48: #{conv_spade_block_forward.2} parent=43 // pred_fallthru
        _
      // Predicated region
      $region49: #{conv_spade_block_forward.2} parent=43 // pred_check
        %p1600 = pneg %p150
      $region50: #{conv_spade_block_forward.2} parent=43 // pred_check_branch
        %1602 = sbr.rel (%p1600) target = $region52
      $region51: #{conv_spade_block_forward.2} parent=43 // pred_region
        %p1603 = scmp.lt.s32.totalorder %s22, 1
        %s1604 = scalar_select %p1603, %s22, 1
        %p1605 = scmp.lt.s32.totalorder %s23, 1
        %s1606 = scalar_select %p1605, %s23, 1
        %s1607 = smul.addr %s1604, 2
        %s1608 = sadd.s32 %s1606, %s1607
        %s1609 = smul.addr %s1608, 2
        %s1610 = scalar_lea.vmem %s4, %s1609
      $region52: #{conv_spade_block_forward.2} parent=43 // pred_fallthru
        _
    $region44: #{conv_spade_block_forward.2} parent=5 // pred_fallthru
      _
  $region6: #{conv_spade_block_forward.2} parent=0 // loop_footer
    %s15 = sadd.s32 1, %s11
  $region7: #{conv_spade_block_forward.2} parent=0 // loop_footer_branch
    %10 = sbr.rel target = $region3
  $region8: #{conv_spade_block_forward.2} parent=0 // loop_exit
    _

// kernel: conv_spade_block_forward.3
$region0: #{conv_spade_block_forward.3}
  #allocation0 [shape = 'u32[]', space=smem, size = 0x4, offset = 0x4, fixed_abs, tag = 'smem constant byte address 0x4 - core index']
  #allocation1 [shape = 'u32[72,128]{1,0:T(1,128)}', space=vmem, size = 0x9000, scoped, tag = 'internal scratch']
  %s0 = inlined_call_operand.vmem [shape: f32[2,20,20,1], index: 0, kind: input, shape index: {}]
  %s1 = inlined_call_operand.vmem [shape: bf16[2,16,16,128], index: 1, kind: input, shape index: {}]
  %s2 = inlined_call_operand.vmem [shape: bf16[9,128], index: 2, kind: input, shape index: {}]
  %s3 = inlined_call_operand.vmem [shape: f32[1,128], index: 3, kind: input, shape index: {}]
  %s4 = inlined_call_operand.vmem [shape: bf16[9,128,256], index: 4, kind: input, shape index: {}]
  %s5 = inlined_call_operand.vmem [shape: f32[1,256], index: 5, kind: input, shape index: {}]
  %s6 = inlined_call_operand.vmem [shape: f32[1,128], index: 6, kind: input, shape index: {}]
  %s7 = inlined_call_operand.vmem [shape: f32[1,128], index: 7, kind: input, shape index: {}]
  %s8 = inlined_call_operand.vmem [shape: f32[2,16,16,128], index: 8, kind: output, shape index: {}]
  %s9 = sld [smem:[#allocation0]]
  $region65: #{conv_spade_block_forward.3} parent=0
    _
  %s11 = ssub.s32 1, %s9
  %s12 = scalar_select 0, %s11, %s9
  loop: start=0, step=1, limit=6
  $region2: #{conv_spade_block_forward.3} parent=0 // loop_pre_header
    _
  $region3: #{conv_spade_block_forward.3} parent=0 // loop_header
    %s14 = sphi 0, %s18
    %p15 = scmp.ge.s32.totalorder %s14, 6
    %s21 = sphi 0, %s33
    %s22 = sphi 0, %s29
    %s23 = sphi 0, %s21
    %s24 = sphi 0, %s22
    %s25 = sphi 0, %s23
    %s26 = sphi 0, %s24
    %s36 = sphi 0, %s38
    %s39 = sphi 0, %s36
    %s40 = sphi 0, %s39
    %s56 = sphi 0, %s40
    %s64 = sphi 0, %s66
    %s67 = sphi 0, %s64
    %s68 = sphi 0, %s67
    %s84 = sphi 0, %s68
    %s88 = sphi 0, %s88
    %s90 = sphi 0, %s88
    %s91 = sphi 0, %s90
    %s105 = sphi 0, %s91
    %s109 = sphi 0, %s109
    %s111 = sphi 0, %s109
    %s112 = sphi 0, %s111
    %s126 = sphi 0, %s112
    %s130 = sphi 0, %s130
    %s132 = sphi 0, %s130
    %s133 = sphi 0, %s132
    %s147 = sphi 0, %s133
    %s151 = sphi 0, %s151
    %s153 = sphi 0, %s151
    %s154 = sphi 0, %s153
    %s168 = sphi 0, %s154
    %s172 = sphi 0, %s172
    %s174 = sphi 0, %s172
    %s175 = sphi 0, %s174
    %s189 = sphi 0, %s175
    %s193 = sphi 0, %s193
    %s195 = sphi 0, %s193
    %s196 = sphi 0, %s195
    %s210 = sphi 0, %s196
    %s218 = sphi 0, %s220
    %s221 = sphi 0, %s218
    %s222 = sphi 0, %s221
    %s238 = sphi 0, %s222
  $region4: #{conv_spade_block_forward.3} parent=0 // loop_header_branch
    %17 = sbr.rel (%p15) target = $region8
  $region5: #{conv_spade_block_forward.3} parent=0 // loop_body
    %s19 = ssub.s32 %s14, 1
    %s20 = ssub.s32 %s14, 2
    %s27 = sadd.s32 1, %s22
    %p28 = scmp.ge.s32.totalorder %s27, 2
    %s29 = scalar_select %p28, 0, %s27
    %s30 = sadd.s32 1, %s21
    %s31 = scalar_select %p28, %s30, %s21
    %p32 = scmp.ge.s32.totalorder %s31, 2
    %s33 = scalar_select %p32, 0, %s31
    %s34 = ssub.s32 %s21, %s33
    %p35 = scmp.eq.s32.totalorder %s34, 0
    %s37 = sadd.s32 %s36, 1
    %s38 = scalar_select %p35, %s36, %s37
    %p41 = pneg %p35
    %p42 = scmp.eq.s32.totalorder %s14, 3
    %p43 = por %p41, %p42
    %p44 = scmp.ne.s32.totalorder %s36, %s39
    %p45 = scmp.eq.s32.totalorder %s14, 0
    %p46 = por %p44, %p45
    %p47 = scmp.ne.s32.totalorder %s36, %s39
    %p48 = scmp.eq.s32.totalorder %s19, 3
    %p49 = por %p47, %p48
    %p50 = scmp.ne.s32.totalorder %s39, %s40
    %p51 = scmp.eq.s32.totalorder %s19, 0
    %p52 = por %p50, %p51
    %p53 = scmp.ne.s32.totalorder %s39, %s40
    %p54 = scmp.eq.s32.totalorder %s20, 3
    %p55 = por %p53, %p54
    %p57 = scmp.ne.s32.totalorder %s40, %s56
    %p58 = scmp.eq.s32.totalorder %s20, 0
    %p59 = por %p57, %p58
    %s60 = ssub.s32 %s21, %s33
    %s61 = ssub.s32 %s22, %s29
    %s62 = sor.u32 %s60, %s61
    %p63 = scmp.eq.s32.totalorder %s62, 0
    %s65 = sadd.s32 %s64, 1
    %s66 = scalar_select %p63, %s64, %s65
    %p69 = pneg %p63
    %p70 = scmp.eq.s32.totalorder %s14, 3
    %p71 = por %p69, %p70
    %p72 = scmp.ne.s32.totalorder %s64, %s67
    %p73 = scmp.eq.s32.totalorder %s14, 0
    %p74 = por %p72, %p73
    %p75 = scmp.ne.s32.totalorder %s64, %s67
    %p76 = scmp.eq.s32.totalorder %s19, 3
    %p77 = por %p75, %p76
    %p78 = scmp.ne.s32.totalorder %s67, %s68
    %p79 = scmp.eq.s32.totalorder %s19, 0
    %p80 = por %p78, %p79
    %p81 = scmp.ne.s32.totalorder %s67, %s68
    %p82 = scmp.eq.s32.totalorder %s20, 3
    %p83 = por %p81, %p82
    %p85 = scmp.ne.s32.totalorder %s68, %s84
    %p86 = scmp.eq.s32.totalorder %s20, 0
    %p87 = por %p85, %p86
    %s89 = sadd.s32 %s88, 1
    %p92 = scmp.eq.s32.totalorder %s14, 3
    %p93 = scmp.ne.s32.totalorder %s88, %s90
    %p94 = scmp.eq.s32.totalorder %s14, 0
    %p95 = por %p93, %p94
    %p96 = scmp.ne.s32.totalorder %s88, %s90
    %p97 = scmp.eq.s32.totalorder %s19, 3
    %p98 = por %p96, %p97
    %p99 = scmp.ne.s32.totalorder %s90, %s91
    %p100 = scmp.eq.s32.totalorder %s19, 0
    %p101 = por %p99, %p100
    %p102 = scmp.ne.s32.totalorder %s90, %s91
    %p103 = scmp.eq.s32.totalorder %s20, 3
    %p104 = por %p102, %p103
    %p106 = scmp.ne.s32.totalorder %s91, %s105
    %p107 = scmp.eq.s32.totalorder %s20, 0
    %p108 = por %p106, %p107
    %s110 = sadd.s32 %s109, 1
    %p113 = scmp.eq.s32.totalorder %s14, 3
    %p114 = scmp.ne.s32.totalorder %s109, %s111
    %p115 = scmp.eq.s32.totalorder %s14, 0
    %p116 = por %p114, %p115
    %p117 = scmp.ne.s32.totalorder %s109, %s111
    %p118 = scmp.eq.s32.totalorder %s19, 3
    %p119 = por %p117, %p118
    %p120 = scmp.ne.s32.totalorder %s111, %s112
    %p121 = scmp.eq.s32.totalorder %s19, 0
    %p122 = por %p120, %p121
    %p123 = scmp.ne.s32.totalorder %s111, %s112
    %p124 = scmp.eq.s32.totalorder %s20, 3
    %p125 = por %p123, %p124
    %p127 = scmp.ne.s32.totalorder %s112, %s126
    %p128 = scmp.eq.s32.totalorder %s20, 0
    %p129 = por %p127, %p128
    %s131 = sadd.s32 %s130, 1
    %p134 = scmp.eq.s32.totalorder %s14, 3
    %p135 = scmp.ne.s32.totalorder %s130, %s132
    %p136 = scmp.eq.s32.totalorder %s14, 0
    %p137 = por %p135, %p136
    %p138 = scmp.ne.s32.totalorder %s130, %s132
    %p139 = scmp.eq.s32.totalorder %s19, 3
    %p140 = por %p138, %p139
    %p141 = scmp.ne.s32.totalorder %s132, %s133
    %p142 = scmp.eq.s32.totalorder %s19, 0
    %p143 = por %p141, %p142
    %p144 = scmp.ne.s32.totalorder %s132, %s133
    %p145 = scmp.eq.s32.totalorder %s20, 3
    %p146 = por %p144, %p145
    %p148 = scmp.ne.s32.totalorder %s133, %s147
    %p149 = scmp.eq.s32.totalorder %s20, 0
    %p150 = por %p148, %p149
    %s152 = sadd.s32 %s151, 1
    %p155 = scmp.eq.s32.totalorder %s14, 3
    %p156 = scmp.ne.s32.totalorder %s151, %s153
    %p157 = scmp.eq.s32.totalorder %s14, 0
    %p158 = por %p156, %p157
    %p159 = scmp.ne.s32.totalorder %s151, %s153
    %p160 = scmp.eq.s32.totalorder %s19, 3
    %p161 = por %p159, %p160
    %p162 = scmp.ne.s32.totalorder %s153, %s154
    %p163 = scmp.eq.s32.totalorder %s19, 0
    %p164 = por %p162, %p163
    %p165 = scmp.ne.s32.totalorder %s153, %s154
    %p166 = scmp.eq.s32.totalorder %s20, 3
    %p167 = por %p165, %p166
    %p169 = scmp.ne.s32.totalorder %s154, %s168
    %p170 = scmp.eq.s32.totalorder %s20, 0
    %p171 = por %p169, %p170
    %s173 = sadd.s32 %s172, 1
    %p176 = scmp.eq.s32.totalorder %s14, 3
    %p177 = scmp.ne.s32.totalorder %s172, %s174
    %p178 = scmp.eq.s32.totalorder %s14, 0
    %p179 = por %p177, %p178
    %p180 = scmp.ne.s32.totalorder %s172, %s174
    %p181 = scmp.eq.s32.totalorder %s19, 3
    %p182 = por %p180, %p181
    %p183 = scmp.ne.s32.totalorder %s174, %s175
    %p184 = scmp.eq.s32.totalorder %s19, 0
    %p185 = por %p183, %p184
    %p186 = scmp.ne.s32.totalorder %s174, %s175
    %p187 = scmp.eq.s32.totalorder %s20, 3
    %p188 = por %p186, %p187
    %p190 = scmp.ne.s32.totalorder %s175, %s189
    %p191 = scmp.eq.s32.totalorder %s20, 0
    %p192 = por %p190, %p191
    %s194 = sadd.s32 %s193, 1
    %p197 = scmp.eq.s32.totalorder %s14, 3
    %p198 = scmp.ne.s32.totalorder %s193, %s195
    %p199 = scmp.eq.s32.totalorder %s14, 0
    %p200 = por %p198, %p199
    %p201 = scmp.ne.s32.totalorder %s193, %s195
    %p202 = scmp.eq.s32.totalorder %s19, 3
    %p203 = por %p201, %p202
    %p204 = scmp.ne.s32.totalorder %s195, %s196
    %p205 = scmp.eq.s32.totalorder %s19, 0
    %p206 = por %p204, %p205
    %p207 = scmp.ne.s32.totalorder %s195, %s196
    %p208 = scmp.eq.s32.totalorder %s20, 3
    %p209 = por %p207, %p208
    %p211 = scmp.ne.s32.totalorder %s196, %s210
    %p212 = scmp.eq.s32.totalorder %s20, 0
    %p213 = por %p211, %p212
    %s214 = ssub.s32 %s21, %s33
    %s215 = ssub.s32 %s22, %s29
    %s216 = sor.u32 %s214, %s215
    %p217 = scmp.eq.s32.totalorder %s216, 0
    %s219 = sadd.s32 %s218, 1
    %s220 = scalar_select %p217, %s218, %s219
    %p223 = pneg %p217
    %p224 = scmp.eq.s32.totalorder %s14, 3
    %p225 = por %p223, %p224
    %p226 = scmp.ne.s32.totalorder %s218, %s221
    %p227 = scmp.eq.s32.totalorder %s14, 0
    %p228 = por %p226, %p227
    %p229 = scmp.ne.s32.totalorder %s218, %s221
    %p230 = scmp.eq.s32.totalorder %s19, 3
    %p231 = por %p229, %p230
    %p232 = scmp.ne.s32.totalorder %s221, %s222
    %p233 = scmp.eq.s32.totalorder %s19, 0
    %p234 = por %p232, %p233
    %p235 = scmp.ne.s32.totalorder %s221, %s222
    %p236 = scmp.eq.s32.totalorder %s20, 3
    %p237 = por %p235, %p236
    %p239 = scmp.ne.s32.totalorder %s222, %s238
    %p240 = scmp.eq.s32.totalorder %s20, 0
    %p241 = por %p239, %p240
    %p242 = scmp.le.s32.totalorder 1, %s14
    %p243 = scmp.lt.s32.totalorder %s14, 5
    %p244 = pnand %p242, %p243
    %p245 = pneg %p244
    // Predicated region
    $region9: #{conv_spade_block_forward.3} parent=5 // pred_check
      _
    $region10: #{conv_spade_block_forward.3} parent=5 // pred_check_branch
      %247 = sbr.rel (%p244) target = $region12
    $region11: #{conv_spade_block_forward.3} parent=5 // pred_region
      %s248 = ssub.s32 %s14, 1
      // Predicated region
      $region13: #{conv_spade_block_forward.3} parent=11 // pred_check
        %p249 = pneg %p101
      $region14: #{conv_spade_block_forward.3} parent=11 // pred_check_branch
        %251 = sbr.rel (%p249) target = $region16
      $region15: #{conv_spade_block_forward.3} parent=11 // pred_region
        _
      $region16: #{conv_spade_block_forward.3} parent=11 // pred_fallthru
        _
      // Predicated region
      $region17: #{conv_spade_block_forward.3} parent=11 // pred_check
        %p252 = pneg %p122
      $region18: #{conv_spade_block_forward.3} parent=11 // pred_check_branch
        %254 = sbr.rel (%p252) target = $region20
      $region19: #{conv_spade_block_forward.3} parent=11 // pred_region
        _
      $region20: #{conv_spade_block_forward.3} parent=11 // pred_fallthru
        _
      // Predicated region
      $region21: #{conv_spade_block_forward.3} parent=11 // pred_check
        %p255 = pneg %p143
      $region22: #{conv_spade_block_forward.3} parent=11 // pred_check_branch
        %257 = sbr.rel (%p255) target = $region24
      $region23: #{conv_spade_block_forward.3} parent=11 // pred_region
        _
      $region24: #{conv_spade_block_forward.3} parent=11 // pred_fallthru
        _
      // Predicated region
      $region25: #{conv_spade_block_forward.3} parent=11 // pred_check
        %p258 = pneg %p164
      $region26: #{conv_spade_block_forward.3} parent=11 // pred_check_branch
        %260 = sbr.rel (%p258) target = $region28
      $region27: #{conv_spade_block_forward.3} parent=11 // pred_region
        _
      $region28: #{conv_spade_block_forward.3} parent=11 // pred_fallthru
        _
      // Predicated region
      $region29: #{conv_spade_block_forward.3} parent=11 // pred_check
        %p261 = pneg %p185
      $region30: #{conv_spade_block_forward.3} parent=11 // pred_check_branch
        %263 = sbr.rel (%p261) target = $region32
      $region31: #{conv_spade_block_forward.3} parent=11 // pred_region
        _
      $region32: #{conv_spade_block_forward.3} parent=11 // pred_fallthru
        _
      // Predicated region
      $region33: #{conv_spade_block_forward.3} parent=11 // pred_check
        %p264 = pneg %p206
      $region34: #{conv_spade_block_forward.3} parent=11 // pred_check_branch
        %266 = sbr.rel (%p264) target = $region36
      $region35: #{conv_spade_block_forward.3} parent=11 // pred_region
        _
      $region36: #{conv_spade_block_forward.3} parent=11 // pred_fallthru
        _
    $region12: #{conv_spade_block_forward.3} parent=5 // pred_fallthru
      _
    %p267 = scmp.lt.s32.totalorder %s14, 4
    // Predicated region
    $region37: #{conv_spade_block_forward.3} parent=5 // pred_check
      %p268 = pneg %p267
    $region38: #{conv_spade_block_forward.3} parent=5 // pred_check_branch
      %270 = sbr.rel (%p268) target = $region40
    $region39: #{conv_spade_block_forward.3} parent=5 // pred_region
      // Predicated region
      $region41: #{conv_spade_block_forward.3} parent=39 // pred_check
        %p271 = pneg %p46
      $region42: #{conv_spade_block_forward.3} parent=39 // pred_check_branch
        %273 = sbr.rel (%p271) target = $region44
      $region43: #{conv_spade_block_forward.3} parent=39 // pred_region
        %p274 = scmp.lt.s32.totalorder %s21, 1
        %s275 = scalar_select %p274, %s21, 1
        %s276 = smul.addr %s275, 60
        %s277 = smul.addr %s276, 8
        %s278 = scalar_lea.vmem %s0, %s277
      $region44: #{conv_spade_block_forward.3} parent=39 // pred_fallthru
        _
      // Predicated region
      $region45: #{conv_spade_block_forward.3} parent=39 // pred_check
        %p279 = pneg %p74
      $region46: #{conv_spade_block_forward.3} parent=39 // pred_check_branch
        %281 = sbr.rel (%p279) target = $region48
      $region47: #{conv_spade_block_forward.3} parent=39 // pred_region
        %s282 = smul.u32 8, %s22
        %p283 = scmp.lt.s32.totalorder %s21, 1
        %s284 = scalar_select %p283, %s21, 1
        %p285 = scmp.lt.s32.totalorder %s282, 15
        %s286 = scalar_select %p285, %s282, 15
        %s287 = smul.addr %s286, 2
        %s288 = smul.addr %s284, 32
        %s289 = sadd.s32 %s287, %s288
        %s290 = smul.addr %s289, 4
        %s291 = scalar_lea.vmem %s1, %s290
        %s292 = smul.u32 8, %s22
      $region48: #{conv_spade_block_forward.3} parent=39 // pred_fallthru
        _
    $region40: #{conv_spade_block_forward.3} parent=5 // pred_fallthru
      _
    %p293 = scmp.le.s32.totalorder 1, %s14
    %p294 = scmp.lt.s32.totalorder %s14, 5
    %p295 = pnand %p293, %p294
    %p296 = pneg %p295
    // Predicated region
    $region49: #{conv_spade_block_forward.3} parent=5 // pred_check
      _
    $region50: #{conv_spade_block_forward.3} parent=5 // pred_check_branch
      %298 = sbr.rel (%p295) target = $region52
    $region51: #{conv_spade_block_forward.3} parent=5 // pred_region
      %s299 = ssub.s32 %s14, 1
      %p300 = scmp.lt.s32.totalorder %s23, 1
      %s301 = scalar_select %p300, %s23, 1
      %s302 = smul.addr %s301, 60
      %s303 = smul.addr %s302, 8
      %s304 = scalar_lea.vmem %s0, %s303
      %p305 = pneg %p52
      %p306 = pneg %p49
      %s307 = smul.u32 8, %s24
      %p308 = scmp.lt.s32.totalorder %s23, 1
      %s309 = scalar_select %p308, %s23, 1
      %p310 = scmp.lt.s32.totalorder %s307, 15
      %s311 = scalar_select %p310, %s307, 15
      %s312 = smul.addr %s311, 2
      %s313 = smul.addr %s309, 32
      %s314 = sadd.s32 %s312, %s313
      %s315 = smul.addr %s314, 4
      %s316 = scalar_lea.vmem %s1, %s315
      %p317 = pneg %p80
      %p318 = pneg %p77
      %p319 = pneg %p101
      %p320 = pneg %p98
      %p321 = pneg %p122
      %p322 = pneg %p119
      %p323 = pneg %p143
      %p324 = pneg %p140
      %p325 = pneg %p164
      %p326 = pneg %p161
      %p327 = pneg %p185
      %p328 = pneg %p182
      %p329 = pneg %p206
      %p330 = pneg %p203
      %p331 = pneg %p234
      %p332 = pneg %p231
      %s333 = smul.u32 8, %s24
      %p334 = scmp.lt.s32.totalorder %s23, 1
      %s335 = scalar_select %p334, %s23, 1
      %p336 = scmp.lt.s32.totalorder %s333, 15
      %s337 = scalar_select %p336, %s333, 15
      %s338 = smul.addr %s337, 2
      %s339 = smul.addr %s335, 32
      %s340 = sadd.s32 %s338, %s339
      %s341 = smul.addr %s340, 8
      %s342 = scalar_lea.vmem %s8, %s341
      %p343 = scmp.lt.s32.totalorder %s23, 1
      %s344 = scalar_select %p343, %s23, 1
      %s345 = smul.addr %s344, 60
      %s346 = smul.addr %s345, 8
      %s347 = scalar_lea.vmem %s0, %s346
      %s348 = smul.u32 8, %s24
      %p349 = scmp.lt.s32.totalorder %s23, 1
      %s350 = scalar_select %p349, %s23, 1
      %p351 = scmp.lt.s32.totalorder %s348, 15
      %s352 = scalar_select %p351, %s348, 15
      %s353 = smul.addr %s352, 2
      %s354 = smul.addr %s350, 32
      %s355 = sadd.s32 %s353, %s354
      %s356 = smul.addr %s355, 4
      %s357 = scalar_lea.vmem %s1, %s356
      %s358 = smul.u32 8, %s24
      %s359 = smul.u32 8, %s24
      %p360 = scmp.lt.s32.totalorder %s23, 1
      %s361 = scalar_select %p360, %s23, 1
      %p362 = scmp.lt.s32.totalorder %s359, 15
      %s363 = scalar_select %p362, %s359, 15
      %s364 = smul.addr %s363, 2
      %s365 = smul.addr %s361, 32
      %s366 = sadd.s32 %s364, %s365
      %s367 = smul.addr %s366, 8
      %s368 = scalar_lea.vmem %s8, %s367
      %s369 = smul.u32 8, %s24
      %s370 = smul.u32 %s24, 8
      %s371 = smul.u32 %s370, 24
      %s372 = scalar_lea.vmem %s347, %s371
      %v373 = vld [vmem:[%s372] sm:$0xff]
      %v374 = vld [vmem:[%s372 + $0x8] sm:$0xff]
      %v375 = vld [vmem:[%s372 + $0x10] sm:$0xf]
      %v376 = vld [vmem:[%s372 + $0x18] sm:$0xff]
      %v377 = vld [vmem:[%s372 + $0x20] sm:$0xff]
      %v378 = vld [vmem:[%s372 + $0x28] sm:$0xf]
      %v379 = vld [vmem:[%s372 + $0x30] sm:$0xff]
      %v380 = vld [vmem:[%s372 + $0x38] sm:$0xff]
      %v381 = vld [vmem:[%s372 + $0x40] sm:$0xf]
      %v382 = vld [vmem:[%s372 + $0x48] sm:$0xff]
      %v383 = vld [vmem:[%s372 + $0x50] sm:$0xff]
      %v384 = vld [vmem:[%s372 + $0x58] sm:$0xf]
      %v385 = vld [vmem:[%s372 + $0x60] sm:$0xff]
      %v386 = vld [vmem:[%s372 + $0x68] sm:$0xff]
      %v387 = vld [vmem:[%s372 + $0x70] sm:$0xf]
      %v388 = vld [vmem:[%s372 + $0x78] sm:$0xff]
      %v389 = vld [vmem:[%s372 + $0x80] sm:$0xff]
      %v390 = vld [vmem:[%s372 + $0x88] sm:$0xf]
      %v391 = vld [vmem:[%s372 + $0x90] sm:$0xff]
      %v392 = vld [vmem:[%s372 + $0x98] sm:$0xff]
      %v393 = vld [vmem:[%s372 + $0xa0] sm:$0xf]
      %v394 = vld [vmem:[%s372 + $0xa8] sm:$0xff]
      %v395 = vld [vmem:[%s372 + $0xb0] sm:$0xff]
      %v396 = vld [vmem:[%s372 + $0xb8] sm:$0xf]
      %v397 = vld [vmem:[%s372 + $0xc0] sm:$0xff]
      %v398 = vld [vmem:[%s372 + $0xc8] sm:$0xff]
      %v399 = vld [vmem:[%s372 + $0xd0] sm:$0xf]
      %v400 = vld [vmem:[%s372 + $0xd8] sm:$0xff]
      %v401 = vld [vmem:[%s372 + $0xe0] sm:$0xff]
      %v402 = vld [vmem:[%s372 + $0xe8] sm:$0xf]
      %v403 = vld [vmem:[%s372 + $0xf0] sm:$0xff]
      %v404 = vld [vmem:[%s372 + $0xf8] sm:$0xff]
      %v405 = vld [vmem:[%s372 + $0x100] sm:$0xf]
      %v406 = vld [vmem:[%s372 + $0x108] sm:$0xff]
      %v407 = vld [vmem:[%s372 + $0x110] sm:$0xff]
      %v408 = vld [vmem:[%s372 + $0x118] sm:$0xf]
      %v409 = vpack.c.bf16 %v373, %v373
      %v410 = vpack.c.bf16 %v374, %v374
      %v411 = vpack.c.bf16 %v375, %v375
      %v412 = vpack.c.bf16 %v376, %v376
      %v413 = vpack.c.bf16 %v377, %v377
      %v414 = vpack.c.bf16 %v378, %v378
      %v415 = vpack.c.bf16 %v379, %v379
      %v416 = vpack.c.bf16 %v380, %v380
      %v417 = vpack.c.bf16 %v381, %v381
      %v418 = vpack.c.bf16 %v382, %v382
      %v419 = vpack.c.bf16 %v383, %v383
      %v420 = vpack.c.bf16 %v384, %v384
      %v421 = vpack.c.bf16 %v385, %v385
      %v422 = vpack.c.bf16 %v386, %v386
      %v423 = vpack.c.bf16 %v387, %v387
      %v424 = vpack.c.bf16 %v388, %v388
      %v425 = vpack.c.bf16 %v389, %v389
      %v426 = vpack.c.bf16 %v390, %v390
      %v427 = vpack.c.bf16 %v391, %v391
      %v428 = vpack.c.bf16 %v392, %v392
      %v429 = vpack.c.bf16 %v393, %v393
      %v430 = vpack.c.bf16 %v394, %v394
      %v431 = vpack.c.bf16 %v395, %v395
      %v432 = vpack.c.bf16 %v396, %v396
      %v433 = vpack.c.bf16 %v397, %v397
      %v434 = vpack.c.bf16 %v398, %v398
      %v435 = vpack.c.bf16 %v399, %v399
      %v436 = vpack.c.bf16 %v400, %v400
      %v437 = vpack.c.bf16 %v401, %v401
      %v438 = vpack.c.bf16 %v402, %v402
      %v439 = vpack.c.bf16 %v403, %v403
      %v440 = vpack.c.bf16 %v404, %v404
      %v441 = vpack.c.bf16 %v405, %v405
      %v442 = vpack.c.bf16 %v406, %v406
      %v443 = vpack.c.bf16 %v407, %v407
      %v444 = vpack.c.bf16 %v408, %v408
      %v445 = vunpack.c.l.bf16 %v409
      %v446 = vunpack.c.l.bf16 %v410
      %v447 = vunpack.c.l.bf16 %v411
      %v448 = vunpack.c.l.bf16 %v412
      %v449 = vunpack.c.l.bf16 %v413
      %v450 = vunpack.c.l.bf16 %v414
      %v451 = vunpack.c.l.bf16 %v415
      %v452 = vunpack.c.l.bf16 %v416
      %v453 = vunpack.c.l.bf16 %v417
      %v454 = vunpack.c.l.bf16 %v418
      %v455 = vunpack.c.l.bf16 %v419
      %v456 = vunpack.c.l.bf16 %v420
      %v457 = vunpack.c.l.bf16 %v421
      %v458 = vunpack.c.l.bf16 %v422
      %v459 = vunpack.c.l.bf16 %v423
      %v460 = vunpack.c.l.bf16 %v424
      %v461 = vunpack.c.l.bf16 %v425
      %v462 = vunpack.c.l.bf16 %v426
      %v463 = vunpack.c.l.bf16 %v427
      %v464 = vunpack.c.l.bf16 %v428
      %v465 = vunpack.c.l.bf16 %v429
      %v466 = vunpack.c.l.bf16 %v430
      %v467 = vunpack.c.l.bf16 %v431
      %v468 = vunpack.c.l.bf16 %v432
      %v469 = vunpack.c.l.bf16 %v433
      %v470 = vunpack.c.l.bf16 %v434
      %v471 = vunpack.c.l.bf16 %v435
      %v472 = vunpack.c.l.bf16 %v436
      %v473 = vunpack.c.l.bf16 %v437
      %v474 = vunpack.c.l.bf16 %v438
      %v475 = vunpack.c.l.bf16 %v439
      %v476 = vunpack.c.l.bf16 %v440
      %v477 = vunpack.c.l.bf16 %v441
      %v478 = vunpack.c.l.bf16 %v442
      %v479 = vunpack.c.l.bf16 %v443
      %v480 = vunpack.c.l.bf16 %v444
      %v481 = vld [vmem:[%s2] sm:$0xf]
      %v482 = vld [vmem:[%s2 + $0x4] sm:$0x1]
      %v483 = vunpack.c.l.bf16 %v481
      %v484 = vunpack.c.l.bf16 %v482
      %486 = vset.pattern.permute.xlu0 0
      %487 = vperm.xlu0 %486, %v445
      %v488 = vpop.permute.xlu0 %487
      %491 = vset.pattern.permute.xlu0 0
      %492 = vperm.xlu0 %491, %v446
      %v493 = vpop.permute.xlu0 %492
      %496 = vset.pattern.permute.xlu0 0
      %497 = vperm.xlu0 %496, %v447
      %v498 = vpop.permute.xlu0 %497
      %501 = vset.pattern.permute.xlu0 0
      %502 = vperm.xlu0 %501, %v448
      %v503 = vpop.permute.xlu0 %502
      %506 = vset.pattern.permute.xlu0 0
      %507 = vperm.xlu0 %506, %v449
      %v508 = vpop.permute.xlu0 %507
      %511 = vset.pattern.permute.xlu0 0
      %512 = vperm.xlu0 %511, %v450
      %v513 = vpop.permute.xlu0 %512
      %516 = vset.pattern.permute.xlu0 0
      %517 = vperm.xlu0 %516, %v451
      %v518 = vpop.permute.xlu0 %517
      %521 = vset.pattern.permute.xlu0 0
      %522 = vperm.xlu0 %521, %v452
      %v523 = vpop.permute.xlu0 %522
      %526 = vset.pattern.permute.xlu0 0
      %527 = vperm.xlu0 %526, %v453
      %v528 = vpop.permute.xlu0 %527
      %531 = vset.pattern.permute.xlu0 0
      %532 = vperm.xlu0 %531, %v454
      %v533 = vpop.permute.xlu0 %532
      %536 = vset.pattern.permute.xlu0 0
      %537 = vperm.xlu0 %536, %v455
      %v538 = vpop.permute.xlu0 %537
      %541 = vset.pattern.permute.xlu0 0
      %542 = vperm.xlu0 %541, %v456
      %v543 = vpop.permute.xlu0 %542
      %546 = vset.pattern.permute.xlu0 0
      %547 = vperm.xlu0 %546, %v457
      %v548 = vpop.permute.xlu0 %547
      %551 = vset.pattern.permute.xlu0 0
      %552 = vperm.xlu0 %551, %v458
      %v553 = vpop.permute.xlu0 %552
      %556 = vset.pattern.permute.xlu0 0
      %557 = vperm.xlu0 %556, %v459
      %v558 = vpop.permute.xlu0 %557
      %561 = vset.pattern.permute.xlu0 0
      %562 = vperm.xlu0 %561, %v460
      %v563 = vpop.permute.xlu0 %562
      %566 = vset.pattern.permute.xlu0 0
      %567 = vperm.xlu0 %566, %v461
      %v568 = vpop.permute.xlu0 %567
      %571 = vset.pattern.permute.xlu0 0
      %572 = vperm.xlu0 %571, %v462
      %v573 = vpop.permute.xlu0 %572
      %576 = vset.pattern.permute.xlu0 0
      %577 = vperm.xlu0 %576, %v463
      %v578 = vpop.permute.xlu0 %577
      %581 = vset.pattern.permute.xlu0 0
      %582 = vperm.xlu0 %581, %v464
      %v583 = vpop.permute.xlu0 %582
      %586 = vset.pattern.permute.xlu0 0
      %587 = vperm.xlu0 %586, %v465
      %v588 = vpop.permute.xlu0 %587
      %591 = vset.pattern.permute.xlu0 0
      %592 = vperm.xlu0 %591, %v466
      %v593 = vpop.permute.xlu0 %592
      %596 = vset.pattern.permute.xlu0 0
      %597 = vperm.xlu0 %596, %v467
      %v598 = vpop.permute.xlu0 %597
      %601 = vset.pattern.permute.xlu0 0
      %602 = vperm.xlu0 %601, %v468
      %v603 = vpop.permute.xlu0 %602
      %606 = vset.pattern.permute.xlu0 0
      %607 = vperm.xlu0 %606, %v469
      %v608 = vpop.permute.xlu0 %607
      %611 = vset.pattern.permute.xlu0 0
      %612 = vperm.xlu0 %611, %v470
      %v613 = vpop.permute.xlu0 %612
      %616 = vset.pattern.permute.xlu0 0
      %617 = vperm.xlu0 %616, %v471
      %v618 = vpop.permute.xlu0 %617
      %621 = vset.pattern.permute.xlu0 0
      %622 = vperm.xlu0 %621, %v472
      %v623 = vpop.permute.xlu0 %622
      %626 = vset.pattern.permute.xlu0 0
      %627 = vperm.xlu0 %626, %v473
      %v628 = vpop.permute.xlu0 %627
      %631 = vset.pattern.permute.xlu0 0
      %632 = vperm.xlu0 %631, %v474
      %v633 = vpop.permute.xlu0 %632
      %v635 = vperm.slane %v483, 0
      %v636 = vmul.f32 %v488, %v635
      %v637 = vmul.f32 %v493, %v635
      %v638 = vmul.f32 %v498, %v635
      %v639 = vmul.f32 %v503, %v635
      %v640 = vmul.f32 %v508, %v635
      %v641 = vmul.f32 %v513, %v635
      %v642 = vmul.f32 %v518, %v635
      %v643 = vmul.f32 %v523, %v635
      %v644 = vmul.f32 %v528, %v635
      %v645 = vmul.f32 %v533, %v635
      %v646 = vmul.f32 %v538, %v635
      %v647 = vmul.f32 %v543, %v635
      %v648 = vmul.f32 %v548, %v635
      %v649 = vmul.f32 %v553, %v635
      %v650 = vmul.f32 %v558, %v635
      %v651 = vmul.f32 %v563, %v635
      %v652 = vmul.f32 %v568, %v635
      %v653 = vmul.f32 %v573, %v635
      %v654 = vmul.f32 %v578, %v635
      %v655 = vmul.f32 %v583, %v635
      %v656 = vmul.f32 %v588, %v635
      %v657 = vmul.f32 %v593, %v635
      %v658 = vmul.f32 %v598, %v635
      %v659 = vmul.f32 %v603, %v635
      %v660 = vmul.f32 %v608, %v635
      %v661 = vmul.f32 %v613, %v635
      %v662 = vmul.f32 %v618, %v635
      %v663 = vmul.f32 %v623, %v635
      %v664 = vmul.f32 %v628, %v635
      %v665 = vmul.f32 %v633, %v635
      %v666 = vadd.f32 %v636, 0.0
      %v667 = vadd.f32 %v637, 0.0
      %v668 = vadd.f32 %v638, 0.0
      %v669 = vadd.f32 %v639, 0.0
      %v670 = vadd.f32 %v640, 0.0
      %v671 = vadd.f32 %v641, 0.0
      %v672 = vadd.f32 %v642, 0.0
      %v673 = vadd.f32 %v643, 0.0
      %v674 = vadd.f32 %v644, 0.0
      %v675 = vadd.f32 %v645, 0.0
      %v676 = vadd.f32 %v646, 0.0
      %v677 = vadd.f32 %v647, 0.0
      %v678 = vadd.f32 %v648, 0.0
      %v679 = vadd.f32 %v649, 0.0
      %v680 = vadd.f32 %v650, 0.0
      %v681 = vadd.f32 %v651, 0.0
      %v682 = vadd.f32 %v652, 0.0
      %v683 = vadd.f32 %v653, 0.0
      %v684 = vadd.f32 %v654, 0.0
      %v685 = vadd.f32 %v655, 0.0
      %v686 = vadd.f32 %v656, 0.0
      %v687 = vadd.f32 %v657, 0.0
      %v688 = vadd.f32 %v658, 0.0
      %v689 = vadd.f32 %v659, 0.0
      %v690 = vadd.f32 %v660, 0.0
      %v691 = vadd.f32 %v661, 0.0
      %v692 = vadd.f32 %v662, 0.0
      %v693 = vadd.f32 %v663, 0.0
      %v694 = vadd.f32 %v664, 0.0
      %v695 = vadd.f32 %v665, 0.0
      %v696 = vperm.slane %v483, 1
      %v697 = vmul.f32 %v488, %v696
      %v698 = vmul.f32 %v493, %v696
      %v699 = vmul.f32 %v498, %v696
      %v700 = vmul.f32 %v503, %v696
      %v701 = vmul.f32 %v508, %v696
      %v702 = vmul.f32 %v513, %v696
      %v703 = vmul.f32 %v518, %v696
      %v704 = vmul.f32 %v523, %v696
      %v705 = vmul.f32 %v528, %v696
      %v706 = vmul.f32 %v533, %v696
      %v707 = vmul.f32 %v538, %v696
      %v708 = vmul.f32 %v543, %v696
      %v709 = vmul.f32 %v548, %v696
      %v710 = vmul.f32 %v553, %v696
      %v711 = vmul.f32 %v558, %v696
      %v712 = vmul.f32 %v563, %v696
      %v713 = vmul.f32 %v568, %v696
      %v714 = vmul.f32 %v573, %v696
      %v715 = vmul.f32 %v578, %v696
      %v716 = vmul.f32 %v583, %v696
      %v717 = vmul.f32 %v588, %v696
      %v718 = vmul.f32 %v593, %v696
      %v719 = vmul.f32 %v598, %v696
      %v720 = vmul.f32 %v603, %v696
      %v721 = vmul.f32 %v608, %v696
      %v722 = vmul.f32 %v613, %v696
      %v723 = vmul.f32 %v618, %v696
      %v724 = vmul.f32 %v623, %v696
      %v725 = vmul.f32 %v628, %v696
      %v726 = vmul.f32 %v633, %v696
      %vm757 = vcmask 1046528
      %v758 = vrot.slane %v697, 1
      %v759 = vrot.slane %v698, 1
      %v760 = vsel %vm757, %v758, %v759
      %v761 = vrot.slane %v699, 1
      %v762 = vsel %vm757, %v759, %v761
      %v763 = vrot.slane %v700, 1
      %v764 = vrot.slane %v701, 1
      %v765 = vsel %vm757, %v763, %v764
      %v766 = vrot.slane %v702, 1
      %v767 = vsel %vm757, %v764, %v766
      %v768 = vrot.slane %v703, 1
      %v769 = vrot.slane %v704, 1
      %v770 = vsel %vm757, %v768, %v769
      %v771 = vrot.slane %v705, 1
      %v772 = vsel %vm757, %v769, %v771
      %v773 = vrot.slane %v706, 1
      %v774 = vrot.slane %v707, 1
      %v775 = vsel %vm757, %v773, %v774
      %v776 = vrot.slane %v708, 1
      %v777 = vsel %vm757, %v774, %v776
      %v778 = vrot.slane %v709, 1
      %v779 = vrot.slane %v710, 1
      %v780 = vsel %vm757, %v778, %v779
      %v781 = vrot.slane %v711, 1
      %v782 = vsel %vm757, %v779, %v781
      %v783 = vrot.slane %v712, 1
      %v784 = vrot.slane %v713, 1
      %v785 = vsel %vm757, %v783, %v784
      %v786 = vrot.slane %v714, 1
      %v787 = vsel %vm757, %v784, %v786
      %v788 = vrot.slane %v715, 1
      %v789 = vrot.slane %v716, 1
      %v790 = vsel %vm757, %v788, %v789
      %v791 = vrot.slane %v717, 1
      %v792 = vsel %vm757, %v789, %v791
      %v793 = vrot.slane %v718, 1
      %v794 = vrot.slane %v719, 1
      %v795 = vsel %vm757, %v793, %v794
      %v796 = vrot.slane %v720, 1
      %v797 = vsel %vm757, %v794, %v796
      %v798 = vrot.slane %v721, 1
      %v799 = vrot.slane %v722, 1
      %v800 = vsel %vm757, %v798, %v799
      %v801 = vrot.slane %v723, 1
      %v802 = vsel %vm757, %v799, %v801
      %v803 = vrot.slane %v724, 1
      %v804 = vrot.slane %v725, 1
      %v805 = vsel %vm757, %v803, %v804
      %v806 = vrot.slane %v726, 1
      %v807 = vsel %vm757, %v804, %v806
      %v838 = vadd.f32 %v666, %v760
      %v839 = vadd.f32 %v667, %v762
      %v840 = vadd.f32 %v668, %v761
      %v841 = vadd.f32 %v669, %v765
      %v842 = vadd.f32 %v670, %v767
      %v843 = vadd.f32 %v671, %v766
      %v844 = vadd.f32 %v672, %v770
      %v845 = vadd.f32 %v673, %v772
      %v846 = vadd.f32 %v674, %v771
      %v847 = vadd.f32 %v675, %v775
      %v848 = vadd.f32 %v676, %v777
      %v849 = vadd.f32 %v677, %v776
      %v850 = vadd.f32 %v678, %v780
      %v851 = vadd.f32 %v679, %v782
      %v852 = vadd.f32 %v680, %v781
      %v853 = vadd.f32 %v681, %v785
      %v854 = vadd.f32 %v682, %v787
      %v855 = vadd.f32 %v683, %v786
      %v856 = vadd.f32 %v684, %v790
      %v857 = vadd.f32 %v685, %v792
      %v858 = vadd.f32 %v686, %v791
      %v859 = vadd.f32 %v687, %v795
      %v860 = vadd.f32 %v688, %v797
      %v861 = vadd.f32 %v689, %v796
      %v862 = vadd.f32 %v690, %v800
      %v863 = vadd.f32 %v691, %v802
      %v864 = vadd.f32 %v692, %v801
      %v865 = vadd.f32 %v693, %v805
      %v866 = vadd.f32 %v694, %v807
      %v867 = vadd.f32 %v695, %v806
      %v868 = vperm.slane %v483, 2
      %v869 = vmul.f32 %v488, %v868
      %v870 = vmul.f32 %v493, %v868
      %v871 = vmul.f32 %v498, %v868
      %v872 = vmul.f32 %v503, %v868
      %v873 = vmul.f32 %v508, %v868
      %v874 = vmul.f32 %v513, %v868
      %v875 = vmul.f32 %v518, %v868
      %v876 = vmul.f32 %v523, %v868
      %v877 = vmul.f32 %v528, %v868
      %v878 = vmul.f32 %v533, %v868
      %v879 = vmul.f32 %v538, %v868
      %v880 = vmul.f32 %v543, %v868
      %v881 = vmul.f32 %v548, %v868
      %v882 = vmul.f32 %v553, %v868
      %v883 = vmul.f32 %v558, %v868
      %v884 = vmul.f32 %v563, %v868
      %v885 = vmul.f32 %v568, %v868
      %v886 = vmul.f32 %v573, %v868
      %v887 = vmul.f32 %v578, %v868
      %v888 = vmul.f32 %v583, %v868
      %v889 = vmul.f32 %v588, %v868
      %v890 = vmul.f32 %v593, %v868
      %v891 = vmul.f32 %v598, %v868
      %v892 = vmul.f32 %v603, %v868
      %v893 = vmul.f32 %v608, %v868
      %v894 = vmul.f32 %v613, %v868
      %v895 = vmul.f32 %v618, %v868
      %v896 = vmul.f32 %v623, %v868
      %v897 = vmul.f32 %v628, %v868
      %v898 = vmul.f32 %v633, %v868
      %vm929 = vcmask 1045504
      %v930 = vrot.slane %v869, 2
      %v931 = vrot.slane %v870, 2
      %v932 = vsel %vm929, %v930, %v931
      %v933 = vrot.slane %v871, 2
      %v934 = vsel %vm929, %v931, %v933
      %v935 = vrot.slane %v872, 2
      %v936 = vrot.slane %v873, 2
      %v937 = vsel %vm929, %v935, %v936
      %v938 = vrot.slane %v874, 2
      %v939 = vsel %vm929, %v936, %v938
      %v940 = vrot.slane %v875, 2
      %v941 = vrot.slane %v876, 2
      %v942 = vsel %vm929, %v940, %v941
      %v943 = vrot.slane %v877, 2
      %v944 = vsel %vm929, %v941, %v943
      %v945 = vrot.slane %v878, 2
      %v946 = vrot.slane %v879, 2
      %v947 = vsel %vm929, %v945, %v946
      %v948 = vrot.slane %v880, 2
      %v949 = vsel %vm929, %v946, %v948
      %v950 = vrot.slane %v881, 2
      %v951 = vrot.slane %v882, 2
      %v952 = vsel %vm929, %v950, %v951
      %v953 = vrot.slane %v883, 2
      %v954 = vsel %vm929, %v951, %v953
      %v955 = vrot.slane %v884, 2
      %v956 = vrot.slane %v885, 2
      %v957 = vsel %vm929, %v955, %v956
      %v958 = vrot.slane %v886, 2
      %v959 = vsel %vm929, %v956, %v958
      %v960 = vrot.slane %v887, 2
      %v961 = vrot.slane %v888, 2
      %v962 = vsel %vm929, %v960, %v961
      %v963 = vrot.slane %v889, 2
      %v964 = vsel %vm929, %v961, %v963
      %v965 = vrot.slane %v890, 2
      %v966 = vrot.slane %v891, 2
      %v967 = vsel %vm929, %v965, %v966
      %v968 = vrot.slane %v892, 2
      %v969 = vsel %vm929, %v966, %v968
      %v970 = vrot.slane %v893, 2
      %v971 = vrot.slane %v894, 2
      %v972 = vsel %vm929, %v970, %v971
      %v973 = vrot.slane %v895, 2
      %v974 = vsel %vm929, %v971, %v973
      %v975 = vrot.slane %v896, 2
      %v976 = vrot.slane %v897, 2
      %v977 = vsel %vm929, %v975, %v976
      %v978 = vrot.slane %v898, 2
      %v979 = vsel %vm929, %v976, %v978
      %v1010 = vadd.f32 %v838, %v932
      %v1011 = vadd.f32 %v839, %v934
      %v1012 = vadd.f32 %v840, %v933
      %v1013 = vadd.f32 %v841, %v937
      %v1014 = vadd.f32 %v842, %v939
      %v1015 = vadd.f32 %v843, %v938
      %v1016 = vadd.f32 %v844, %v942
      %v1017 = vadd.f32 %v845, %v944
      %v1018 = vadd.f32 %v846, %v943
      %v1019 = vadd.f32 %v847, %v947
      %v1020 = vadd.f32 %v848, %v949
      %v1021 = vadd.f32 %v849, %v948
      %v1022 = vadd.f32 %v850, %v952
      %v1023 = vadd.f32 %v851, %v954
      %v1024 = vadd.f32 %v852, %v953
      %v1025 = vadd.f32 %v853, %v957
      %v1026 = vadd.f32 %v854, %v959
      %v1027 = vadd.f32 %v855, %v958
      %v1028 = vadd.f32 %v856, %v962
      %v1029 = vadd.f32 %v857, %v964
      %v1030 = vadd.f32 %v858, %v963
      %v1031 = vadd.f32 %v859, %v967
      %v1032 = vadd.f32 %v860, %v969
      %v1033 = vadd.f32 %v861, %v968
      %v1034 = vadd.f32 %v862, %v972
      %v1035 = vadd.f32 %v863, %v974
      %v1036 = vadd.f32 %v864, %v973
      %v1037 = vadd.f32 %v865, %v977
      %v1038 = vadd.f32 %v866, %v979
      %v1039 = vadd.f32 %v867, %v978
      %1041 = vset.pattern.permute.xlu0 0
      %1042 = vperm.xlu0 %1041, %v475
      %v1043 = vpop.permute.xlu0 %1042
      %1046 = vset.pattern.permute.xlu0 0
      %1047 = vperm.xlu0 %1046, %v476
      %v1048 = vpop.permute.xlu0 %1047
      %1051 = vset.pattern.permute.xlu0 0
      %1052 = vperm.xlu0 %1051, %v477
      %v1053 = vpop.permute.xlu0 %1052
      %v1055 = vperm.slane %v483, 3
      %v1056 = vmul.f32 %v503, %v1055
      %v1057 = vmul.f32 %v508, %v1055
      %v1058 = vmul.f32 %v513, %v1055
      %v1059 = vmul.f32 %v518, %v1055
      %v1060 = vmul.f32 %v523, %v1055
      %v1061 = vmul.f32 %v528, %v1055
      %v1062 = vmul.f32 %v533, %v1055
      %v1063 = vmul.f32 %v538, %v1055
      %v1064 = vmul.f32 %v543, %v1055
      %v1065 = vmul.f32 %v548, %v1055
      %v1066 = vmul.f32 %v553, %v1055
      %v1067 = vmul.f32 %v558, %v1055
      %v1068 = vmul.f32 %v563, %v1055
      %v1069 = vmul.f32 %v568, %v1055
      %v1070 = vmul.f32 %v573, %v1055
      %v1071 = vmul.f32 %v578, %v1055
      %v1072 = vmul.f32 %v583, %v1055
      %v1073 = vmul.f32 %v588, %v1055
      %v1074 = vmul.f32 %v593, %v1055
      %v1075 = vmul.f32 %v598, %v1055
      %v1076 = vmul.f32 %v603, %v1055
      %v1077 = vmul.f32 %v608, %v1055
      %v1078 = vmul.f32 %v613, %v1055
      %v1079 = vmul.f32 %v618, %v1055
      %v1080 = vmul.f32 %v623, %v1055
      %v1081 = vmul.f32 %v628, %v1055
      %v1082 = vmul.f32 %v633, %v1055
      %v1083 = vmul.f32 %v1043, %v1055
      %v1084 = vmul.f32 %v1048, %v1055
      %v1085 = vmul.f32 %v1053, %v1055
      %v1086 = vadd.f32 %v1010, %v1056
      %v1087 = vadd.f32 %v1011, %v1057
      %v1088 = vadd.f32 %v1012, %v1058
      %v1089 = vadd.f32 %v1013, %v1059
      %v1090 = vadd.f32 %v1014, %v1060
      %v1091 = vadd.f32 %v1015, %v1061
      %v1092 = vadd.f32 %v1016, %v1062
      %v1093 = vadd.f32 %v1017, %v1063
      %v1094 = vadd.f32 %v1018, %v1064
      %v1095 = vadd.f32 %v1019, %v1065
      %v1096 = vadd.f32 %v1020, %v1066
      %v1097 = vadd.f32 %v1021, %v1067
      %v1098 = vadd.f32 %v1022, %v1068
      %v1099 = vadd.f32 %v1023, %v1069
      %v1100 = vadd.f32 %v1024, %v1070
      %v1101 = vadd.f32 %v1025, %v1071
      %v1102 = vadd.f32 %v1026, %v1072
      %v1103 = vadd.f32 %v1027, %v1073
      %v1104 = vadd.f32 %v1028, %v1074
      %v1105 = vadd.f32 %v1029, %v1075
      %v1106 = vadd.f32 %v1030, %v1076
      %v1107 = vadd.f32 %v1031, %v1077
      %v1108 = vadd.f32 %v1032, %v1078
      %v1109 = vadd.f32 %v1033, %v1079
      %v1110 = vadd.f32 %v1034, %v1080
      %v1111 = vadd.f32 %v1035, %v1081
      %v1112 = vadd.f32 %v1036, %v1082
      %v1113 = vadd.f32 %v1037, %v1083
      %v1114 = vadd.f32 %v1038, %v1084
      %v1115 = vadd.f32 %v1039, %v1085
      %v1116 = vperm.slane %v483, 4
      %v1117 = vmul.f32 %v503, %v1116
      %v1118 = vmul.f32 %v508, %v1116
      %v1119 = vmul.f32 %v513, %v1116
      %v1120 = vmul.f32 %v518, %v1116
      %v1121 = vmul.f32 %v523, %v1116
      %v1122 = vmul.f32 %v528, %v1116
      %v1123 = vmul.f32 %v533, %v1116
      %v1124 = vmul.f32 %v538, %v1116
      %v1125 = vmul.f32 %v543, %v1116
      %v1126 = vmul.f32 %v548, %v1116
      %v1127 = vmul.f32 %v553, %v1116
      %v1128 = vmul.f32 %v558, %v1116
      %v1129 = vmul.f32 %v563, %v1116
      %v1130 = vmul.f32 %v568, %v1116
      %v1131 = vmul.f32 %v573, %v1116
      %v1132 = vmul.f32 %v578, %v1116
      %v1133 = vmul.f32 %v583, %v1116
      %v1134 = vmul.f32 %v588, %v1116
      %v1135 = vmul.f32 %v593, %v1116
      %v1136 = vmul.f32 %v598, %v1116
      %v1137 = vmul.f32 %v603, %v1116
      %v1138 = vmul.f32 %v608, %v1116
      %v1139 = vmul.f32 %v613, %v1116
      %v1140 = vmul.f32 %v618, %v1116
      %v1141 = vmul.f32 %v623, %v1116
      %v1142 = vmul.f32 %v628, %v1116
      %v1143 = vmul.f32 %v633, %v1116
      %v1144 = vmul.f32 %v1043, %v1116
      %v1145 = vmul.f32 %v1048, %v1116
      %v1146 = vmul.f32 %v1053, %v1116
      %v1177 = vrot.slane %v1117, 1
      %v1178 = vrot.slane %v1118, 1
      %v1179 = vsel %vm757, %v1177, %v1178
      %v1180 = vrot.slane %v1119, 1
      %v1181 = vsel %vm757, %v1178, %v1180
      %v1182 = vrot.slane %v1120, 1
      %v1183 = vrot.slane %v1121, 1
      %v1184 = vsel %vm757, %v1182, %v1183
      %v1185 = vrot.slane %v1122, 1
      %v1186 = vsel %vm757, %v1183, %v1185
      %v1187 = vrot.slane %v1123, 1
      %v1188 = vrot.slane %v1124, 1
      %v1189 = vsel %vm757, %v1187, %v1188
      %v1190 = vrot.slane %v1125, 1
      %v1191 = vsel %vm757, %v1188, %v1190
      %v1192 = vrot.slane %v1126, 1
      %v1193 = vrot.slane %v1127, 1
      %v1194 = vsel %vm757, %v1192, %v1193
      %v1195 = vrot.slane %v1128, 1
      %v1196 = vsel %vm757, %v1193, %v1195
      %v1197 = vrot.slane %v1129, 1
      %v1198 = vrot.slane %v1130, 1
      %v1199 = vsel %vm757, %v1197, %v1198
      %v1200 = vrot.slane %v1131, 1
      %v1201 = vsel %vm757, %v1198, %v1200
      %v1202 = vrot.slane %v1132, 1
      %v1203 = vrot.slane %v1133, 1
      %v1204 = vsel %vm757, %v1202, %v1203
      %v1205 = vrot.slane %v1134, 1
      %v1206 = vsel %vm757, %v1203, %v1205
      %v1207 = vrot.slane %v1135, 1
      %v1208 = vrot.slane %v1136, 1
      %v1209 = vsel %vm757, %v1207, %v1208
      %v1210 = vrot.slane %v1137, 1
      %v1211 = vsel %vm757, %v1208, %v1210
      %v1212 = vrot.slane %v1138, 1
      %v1213 = vrot.slane %v1139, 1
      %v1214 = vsel %vm757, %v1212, %v1213
      %v1215 = vrot.slane %v1140, 1
      %v1216 = vsel %vm757, %v1213, %v1215
      %v1217 = vrot.slane %v1141, 1
      %v1218 = vrot.slane %v1142, 1
      %v1219 = vsel %vm757, %v1217, %v1218
      %v1220 = vrot.slane %v1143, 1
      %v1221 = vsel %vm757, %v1218, %v1220
      %v1222 = vrot.slane %v1144, 1
      %v1223 = vrot.slane %v1145, 1
      %v1224 = vsel %vm757, %v1222, %v1223
      %v1225 = vrot.slane %v1146, 1
      %v1226 = vsel %vm757, %v1223, %v1225
      %v1257 = vadd.f32 %v1086, %v1179
      %v1258 = vadd.f32 %v1087, %v1181
      %v1259 = vadd.f32 %v1088, %v1180
      %v1260 = vadd.f32 %v1089, %v1184
      %v1261 = vadd.f32 %v1090, %v1186
      %v1262 = vadd.f32 %v1091, %v1185
      %v1263 = vadd.f32 %v1092, %v1189
      %v1264 = vadd.f32 %v1093, %v1191
      %v1265 = vadd.f32 %v1094, %v1190
      %v1266 = vadd.f32 %v1095, %v1194
      %v1267 = vadd.f32 %v1096, %v1196
      %v1268 = vadd.f32 %v1097, %v1195
      %v1269 = vadd.f32 %v1098, %v1199
      %v1270 = vadd.f32 %v1099, %v1201
      %v1271 = vadd.f32 %v1100, %v1200
      %v1272 = vadd.f32 %v1101, %v1204
      %v1273 = vadd.f32 %v1102, %v1206
      %v1274 = vadd.f32 %v1103, %v1205
      %v1275 = vadd.f32 %v1104, %v1209
      %v1276 = vadd.f32 %v1105, %v1211
      %v1277 = vadd.f32 %v1106, %v1210
      %v1278 = vadd.f32 %v1107, %v1214
      %v1279 = vadd.f32 %v1108, %v1216
      %v1280 = vadd.f32 %v1109, %v1215
      %v1281 = vadd.f32 %v1110, %v1219
      %v1282 = vadd.f32 %v1111, %v1221
      %v1283 = vadd.f32 %v1112, %v1220
      %v1284 = vadd.f32 %v1113, %v1224
      %v1285 = vadd.f32 %v1114, %v1226
      %v1286 = vadd.f32 %v1115, %v1225
      %v1287 = vperm.slane %v483, 5
      %v1288 = vmul.f32 %v503, %v1287
      %v1289 = vmul.f32 %v508, %v1287
      %v1290 = vmul.f32 %v513, %v1287
      %v1291 = vmul.f32 %v518, %v1287
      %v1292 = vmul.f32 %v523, %v1287
      %v1293 = vmul.f32 %v528, %v1287
      %v1294 = vmul.f32 %v533, %v1287
      %v1295 = vmul.f32 %v538, %v1287
      %v1296 = vmul.f32 %v543, %v1287
      %v1297 = vmul.f32 %v548, %v1287
      %v1298 = vmul.f32 %v553, %v1287
      %v1299 = vmul.f32 %v558, %v1287
      %v1300 = vmul.f32 %v563, %v1287
      %v1301 = vmul.f32 %v568, %v1287
      %v1302 = vmul.f32 %v573, %v1287
      %v1303 = vmul.f32 %v578, %v1287
      %v1304 = vmul.f32 %v583, %v1287
      %v1305 = vmul.f32 %v588, %v1287
      %v1306 = vmul.f32 %v593, %v1287
      %v1307 = vmul.f32 %v598, %v1287
      %v1308 = vmul.f32 %v603, %v1287
      %v1309 = vmul.f32 %v608, %v1287
      %v1310 = vmul.f32 %v613, %v1287
      %v1311 = vmul.f32 %v618, %v1287
      %v1312 = vmul.f32 %v623, %v1287
      %v1313 = vmul.f32 %v628, %v1287
      %v1314 = vmul.f32 %v633, %v1287
      %v1315 = vmul.f32 %v1043, %v1287
      %v1316 = vmul.f32 %v1048, %v1287
      %v1317 = vmul.f32 %v1053, %v1287
      %v1348 = vrot.slane %v1288, 2
      %v1349 = vrot.slane %v1289, 2
      %v1350 = vsel %vm929, %v1348, %v1349
      %v1351 = vrot.slane %v1290, 2
      %v1352 = vsel %vm929, %v1349, %v1351
      %v1353 = vrot.slane %v1291, 2
      %v1354 = vrot.slane %v1292, 2
      %v1355 = vsel %vm929, %v1353, %v1354
      %v1356 = vrot.slane %v1293, 2
      %v1357 = vsel %vm929, %v1354, %v1356
      %v1358 = vrot.slane %v1294, 2
      %v1359 = vrot.slane %v1295, 2
      %v1360 = vsel %vm929, %v1358, %v1359
      %v1361 = vrot.slane %v1296, 2
      %v1362 = vsel %vm929, %v1359, %v1361
      %v1363 = vrot.slane %v1297, 2
      %v1364 = vrot.slane %v1298, 2
      %v1365 = vsel %vm929, %v1363, %v1364
      %v1366 = vrot.slane %v1299, 2
      %v1367 = vsel %vm929, %v1364, %v1366
      %v1368 = vrot.slane %v1300, 2
      %v1369 = vrot.slane %v1301, 2
      %v1370 = vsel %vm929, %v1368, %v1369
      %v1371 = vrot.slane %v1302, 2
      %v1372 = vsel %vm929, %v1369, %v1371
      %v1373 = vrot.slane %v1303, 2
      %v1374 = vrot.slane %v1304, 2
      %v1375 = vsel %vm929, %v1373, %v1374
      %v1376 = vrot.slane %v1305, 2
      %v1377 = vsel %vm929, %v1374, %v1376
      %v1378 = vrot.slane %v1306, 2
      %v1379 = vrot.slane %v1307, 2
      %v1380 = vsel %vm929, %v1378, %v1379
      %v1381 = vrot.slane %v1308, 2
      %v1382 = vsel %vm929, %v1379, %v1381
      %v1383 = vrot.slane %v1309, 2
      %v1384 = vrot.slane %v1310, 2
      %v1385 = vsel %vm929, %v1383, %v1384
      %v1386 = vrot.slane %v1311, 2
      %v1387 = vsel %vm929, %v1384, %v1386
      %v1388 = vrot.slane %v1312, 2
      %v1389 = vrot.slane %v1313, 2
      %v1390 = vsel %vm929, %v1388, %v1389
      %v1391 = vrot.slane %v1314, 2
      %v1392 = vsel %vm929, %v1389, %v1391
      %v1393 = vrot.slane %v1315, 2
      %v1394 = vrot.slane %v1316, 2
      %v1395 = vsel %vm929, %v1393, %v1394
      %v1396 = vrot.slane %v1317, 2
      %v1397 = vsel %vm929, %v1394, %v1396
      %v1428 = vadd.f32 %v1257, %v1350
      %v1429 = vadd.f32 %v1258, %v1352
      %v1430 = vadd.f32 %v1259, %v1351
      %v1431 = vadd.f32 %v1260, %v1355
      %v1432 = vadd.f32 %v1261, %v1357
      %v1433 = vadd.f32 %v1262, %v1356
      %v1434 = vadd.f32 %v1263, %v1360
      %v1435 = vadd.f32 %v1264, %v1362
      %v1436 = vadd.f32 %v1265, %v1361
      %v1437 = vadd.f32 %v1266, %v1365
      %v1438 = vadd.f32 %v1267, %v1367
      %v1439 = vadd.f32 %v1268, %v1366
      %v1440 = vadd.f32 %v1269, %v1370
      %v1441 = vadd.f32 %v1270, %v1372
      %v1442 = vadd.f32 %v1271, %v1371
      %v1443 = vadd.f32 %v1272, %v1375
      %v1444 = vadd.f32 %v1273, %v1377
      %v1445 = vadd.f32 %v1274, %v1376
      %v1446 = vadd.f32 %v1275, %v1380
      %v1447 = vadd.f32 %v1276, %v1382
      %v1448 = vadd.f32 %v1277, %v1381
      %v1449 = vadd.f32 %v1278, %v1385
      %v1450 = vadd.f32 %v1279, %v1387
      %v1451 = vadd.f32 %v1280, %v1386
      %v1452 = vadd.f32 %v1281, %v1390
      %v1453 = vadd.f32 %v1282, %v1392
      %v1454 = vadd.f32 %v1283, %v1391
      %v1455 = vadd.f32 %v1284, %v1395
      %v1456 = vadd.f32 %v1285, %v1397
      %v1457 = vadd.f32 %v1286, %v1396
      %1459 = vset.pattern.permute.xlu0 0
      %1460 = vperm.xlu0 %1459, %v478
      %v1461 = vpop.permute.xlu0 %1460
      %1464 = vset.pattern.permute.xlu0 0
      %1465 = vperm.xlu0 %1464, %v479
      %v1466 = vpop.permute.xlu0 %1465
      %1469 = vset.pattern.permute.xlu0 0
      %1470 = vperm.xlu0 %1469, %v480
      %v1471 = vpop.permute.xlu0 %1470
      %v1473 = vperm.slane %v483, 6
      %v1474 = vmul.f32 %v518, %v1473
      %v1475 = vmul.f32 %v523, %v1473
      %v1476 = vmul.f32 %v528, %v1473
      %v1477 = vmul.f32 %v533, %v1473
      %v1478 = vmul.f32 %v538, %v1473
      %v1479 = vmul.f32 %v543, %v1473
      %v1480 = vmul.f32 %v548, %v1473
      %v1481 = vmul.f32 %v553, %v1473
      %v1482 = vmul.f32 %v558, %v1473
      %v1483 = vmul.f32 %v563, %v1473
      %v1484 = vmul.f32 %v568, %v1473
      %v1485 = vmul.f32 %v573, %v1473
      %v1486 = vmul.f32 %v578, %v1473
      %v1487 = vmul.f32 %v583, %v1473
      %v1488 = vmul.f32 %v588, %v1473
      %v1489 = vmul.f32 %v593, %v1473
      %v1490 = vmul.f32 %v598, %v1473
      %v1491 = vmul.f32 %v603, %v1473
      %v1492 = vmul.f32 %v608, %v1473
      %v1493 = vmul.f32 %v613, %v1473
      %v1494 = vmul.f32 %v618, %v1473
      %v1495 = vmul.f32 %v623, %v1473
      %v1496 = vmul.f32 %v628, %v1473
      %v1497 = vmul.f32 %v633, %v1473
      %v1498 = vmul.f32 %v1043, %v1473
      %v1499 = vmul.f32 %v1048, %v1473
      %v1500 = vmul.f32 %v1053, %v1473
      %v1501 = vmul.f32 %v1461, %v1473
      %v1502 = vmul.f32 %v1466, %v1473
      %v1503 = vmul.f32 %v1471, %v1473
      %v1504 = vadd.f32 %v1428, %v1474
      %v1505 = vadd.f32 %v1429, %v1475
      %v1506 = vadd.f32 %v1430, %v1476
      %v1507 = vadd.f32 %v1431, %v1477
      %v1508 = vadd.f32 %v1432, %v1478
      %v1509 = vadd.f32 %v1433, %v1479
      %v1510 = vadd.f32 %v1434, %v1480
      %v1511 = vadd.f32 %v1435, %v1481
      %v1512 = vadd.f32 %v1436, %v1482
      %v1513 = vadd.f32 %v1437, %v1483
      %v1514 = vadd.f32 %v1438, %v1484
      %v1515 = vadd.f32 %v1439, %v1485
      %v1516 = vadd.f32 %v1440, %v1486
      %v1517 = vadd.f32 %v1441, %v1487
      %v1518 = vadd.f32 %v1442, %v1488
      %v1519 = vadd.f32 %v1443, %v1489
      %v1520 = vadd.f32 %v1444, %v1490
      %v1521 = vadd.f32 %v1445, %v1491
      %v1522 = vadd.f32 %v1446, %v1492
      %v1523 = vadd.f32 %v1447, %v1493
      %v1524 = vadd.f32 %v1448, %v1494
      %v1525 = vadd.f32 %v1449, %v1495
      %v1526 = vadd.f32 %v1450, %v1496
      %v1527 = vadd.f32 %v1451, %v1497
      %v1528 = vadd.f32 %v1452, %v1498
      %v1529 = vadd.f32 %v1453, %v1499
      %v1530 = vadd.f32 %v1454, %v1500
      %v1531 = vadd.f32 %v1455, %v1501
      %v1532 = vadd.f32 %v1456, %v1502
      %v1533 = vadd.f32 %v1457, %v1503
      %v1534 = vperm.slane %v483, 7
      %v1535 = vmul.f32 %v518, %v1534
      %v1536 = vmul.f32 %v523, %v1534
      %v1537 = vmul.f32 %v528, %v1534
      %v1538 = vmul.f32 %v533, %v1534
      %v1539 = vmul.f32 %v538, %v1534
      %v1540 = vmul.f32 %v543, %v1534
      %v1541 = vmul.f32 %v548, %v1534
      %v1542 = vmul.f32 %v553, %v1534
      %v1543 = vmul.f32 %v558, %v1534
      %v1544 = vmul.f32 %v563, %v1534
      %v1545 = vmul.f32 %v568, %v1534
      %v1546 = vmul.f32 %v573, %v1534
      %v1547 = vmul.f32 %v578, %v1534
      %v1548 = vmul.f32 %v583, %v1534
      %v1549 = vmul.f32 %v588, %v1534
      %v1550 = vmul.f32 %v593, %v1534
      %v1551 = vmul.f32 %v598, %v1534
      %v1552 = vmul.f32 %v603, %v1534
      %v1553 = vmul.f32 %v608, %v1534
      %v1554 = vmul.f32 %v613, %v1534
      %v1555 = vmul.f32 %v618, %v1534
      %v1556 = vmul.f32 %v623, %v1534
      %v1557 = vmul.f32 %v628, %v1534
      %v1558 = vmul.f32 %v633, %v1534
      %v1559 = vmul.f32 %v1043, %v1534
      %v1560 = vmul.f32 %v1048, %v1534
      %v1561 = vmul.f32 %v1053, %v1534
      %v1562 = vmul.f32 %v1461, %v1534
      %v1563 = vmul.f32 %v1466, %v1534
      %v1564 = vmul.f32 %v1471, %v1534
      %v1595 = vrot.slane %v1535, 1
      %v1596 = vrot.slane %v1536, 1
      %v1597 = vsel %vm757, %v1595, %v1596
      %v1598 = vrot.slane %v1537, 1
      %v1599 = vsel %vm757, %v1596, %v1598
      %v1600 = vrot.slane %v1538, 1
      %v1601 = vrot.slane %v1539, 1
      %v1602 = vsel %vm757, %v1600, %v1601
      %v1603 = vrot.slane %v1540, 1
      %v1604 = vsel %vm757, %v1601, %v1603
      %v1605 = vrot.slane %v1541, 1
      %v1606 = vrot.slane %v1542, 1
      %v1607 = vsel %vm757, %v1605, %v1606
      %v1608 = vrot.slane %v1543, 1
      %v1609 = vsel %vm757, %v1606, %v1608
      %v1610 = vrot.slane %v1544, 1
      %v1611 = vrot.slane %v1545, 1
      %v1612 = vsel %vm757, %v1610, %v1611
      %v1613 = vrot.slane %v1546, 1
      %v1614 = vsel %vm757, %v1611, %v1613
      %v1615 = vrot.slane %v1547, 1
      %v1616 = vrot.slane %v1548, 1
      %v1617 = vsel %vm757, %v1615, %v1616
      %v1618 = vrot.slane %v1549, 1
      %v1619 = vsel %vm757, %v1616, %v1618
      %v1620 = vrot.slane %v1550, 1
      %v1621 = vrot.slane %v1551, 1
      %v1622 = vsel %vm757, %v1620, %v1621
      %v1623 = vrot.slane %v1552, 1
      %v1624 = vsel %vm757, %v1621, %v1623
      %v1625 = vrot.slane %v1553, 1
      %v1626 = vrot.slane %v1554, 1
      %v1627 = vsel %vm757, %v1625, %v1626
      %v1628 = vrot.slane %v1555, 1
      %v1629 = vsel %vm757, %v1626, %v1628
      %v1630 = vrot.slane %v1556, 1
      %v1631 = vrot.slane %v1557, 1
      %v1632 = vsel %vm757, %v1630, %v1631
      %v1633 = vrot.slane %v1558, 1
      %v1634 = vsel %vm757, %v1631, %v1633
      %v1635 = vrot.slane %v1559, 1
      %v1636 = vrot.slane %v1560, 1
      %v1637 = vsel %vm757, %v1635, %v1636
      %v1638 = vrot.slane %v1561, 1
      %v1639 = vsel %vm757, %v1636, %v1638
      %v1640 = vrot.slane %v1562, 1
      %v1641 = vrot.slane %v1563, 1
      %v1642 = vsel %vm757, %v1640, %v1641
      %v1643 = vrot.slane %v1564, 1
      %v1644 = vsel %vm757, %v1641, %v1643
      %v1675 = vadd.f32 %v1504, %v1597
      %v1676 = vadd.f32 %v1505, %v1599
      %v1677 = vadd.f32 %v1506, %v1598
      %v1678 = vadd.f32 %v1507, %v1602
      %v1679 = vadd.f32 %v1508, %v1604
      %v1680 = vadd.f32 %v1509, %v1603
      %v1681 = vadd.f32 %v1510, %v1607
      %v1682 = vadd.f32 %v1511, %v1609
      %v1683 = vadd.f32 %v1512, %v1608
      %v1684 = vadd.f32 %v1513, %v1612
      %v1685 = vadd.f32 %v1514, %v1614
      %v1686 = vadd.f32 %v1515, %v1613
      %v1687 = vadd.f32 %v1516, %v1617
      %v1688 = vadd.f32 %v1517, %v1619
      %v1689 = vadd.f32 %v1518, %v1618
      %v1690 = vadd.f32 %v1519, %v1622
      %v1691 = vadd.f32 %v1520, %v1624
      %v1692 = vadd.f32 %v1521, %v1623
      %v1693 = vadd.f32 %v1522, %v1627
      %v1694 = vadd.f32 %v1523, %v1629
      %v1695 = vadd.f32 %v1524, %v1628
      %v1696 = vadd.f32 %v1525, %v1632
      %v1697 = vadd.f32 %v1526, %v1634
      %v1698 = vadd.f32 %v1527, %v1633
      %v1699 = vadd.f32 %v1528, %v1637
      %v1700 = vadd.f32 %v1529, %v1639
      %v1701 = vadd.f32 %v1530, %v1638
      %v1702 = vadd.f32 %v1531, %v1642
      %v1703 = vadd.f32 %v1532, %v1644
      %v1704 = vadd.f32 %v1533, %v1643
      %v1705 = vperm.slane %v484, 0
      %v1706 = vmul.f32 %v518, %v1705
      %v1707 = vmul.f32 %v523, %v1705
      %v1708 = vmul.f32 %v528, %v1705
      %v1709 = vmul.f32 %v533, %v1705
      %v1710 = vmul.f32 %v538, %v1705
      %v1711 = vmul.f32 %v543, %v1705
      %v1712 = vmul.f32 %v548, %v1705
      %v1713 = vmul.f32 %v553, %v1705
      %v1714 = vmul.f32 %v558, %v1705
      %v1715 = vmul.f32 %v563, %v1705
      %v1716 = vmul.f32 %v568, %v1705
      %v1717 = vmul.f32 %v573, %v1705
      %v1718 = vmul.f32 %v578, %v1705
      %v1719 = vmul.f32 %v583, %v1705
      %v1720 = vmul.f32 %v588, %v1705
      %v1721 = vmul.f32 %v593, %v1705
      %v1722 = vmul.f32 %v598, %v1705
      %v1723 = vmul.f32 %v603, %v1705
      %v1724 = vmul.f32 %v608, %v1705
      %v1725 = vmul.f32 %v613, %v1705
      %v1726 = vmul.f32 %v618, %v1705
      %v1727 = vmul.f32 %v623, %v1705
      %v1728 = vmul.f32 %v628, %v1705
      %v1729 = vmul.f32 %v633, %v1705
      %v1730 = vmul.f32 %v1043, %v1705
      %v1731 = vmul.f32 %v1048, %v1705
      %v1732 = vmul.f32 %v1053, %v1705
      %v1733 = vmul.f32 %v1461, %v1705
      %v1734 = vmul.f32 %v1466, %v1705
      %v1735 = vmul.f32 %v1471, %v1705
      %v1766 = vrot.slane %v1706, 2
      %v1767 = vrot.slane %v1707, 2
      %v1768 = vsel %vm929, %v1766, %v1767
      %v1769 = vrot.slane %v1708, 2
      %v1770 = vsel %vm929, %v1767, %v1769
      %v1771 = vrot.slane %v1709, 2
      %v1772 = vrot.slane %v1710, 2
      %v1773 = vsel %vm929, %v1771, %v1772
      %v1774 = vrot.slane %v1711, 2
      %v1775 = vsel %vm929, %v1772, %v1774
      %v1776 = vrot.slane %v1712, 2
      %v1777 = vrot.slane %v1713, 2
      %v1778 = vsel %vm929, %v1776, %v1777
      %v1779 = vrot.slane %v1714, 2
      %v1780 = vsel %vm929, %v1777, %v1779
      %v1781 = vrot.slane %v1715, 2
      %v1782 = vrot.slane %v1716, 2
      %v1783 = vsel %vm929, %v1781, %v1782
      %v1784 = vrot.slane %v1717, 2
      %v1785 = vsel %vm929, %v1782, %v1784
      %v1786 = vrot.slane %v1718, 2
      %v1787 = vrot.slane %v1719, 2
      %v1788 = vsel %vm929, %v1786, %v1787
      %v1789 = vrot.slane %v1720, 2
      %v1790 = vsel %vm929, %v1787, %v1789
      %v1791 = vrot.slane %v1721, 2
      %v1792 = vrot.slane %v1722, 2
      %v1793 = vsel %vm929, %v1791, %v1792
      %v1794 = vrot.slane %v1723, 2
      %v1795 = vsel %vm929, %v1792, %v1794
      %v1796 = vrot.slane %v1724, 2
      %v1797 = vrot.slane %v1725, 2
      %v1798 = vsel %vm929, %v1796, %v1797
      %v1799 = vrot.slane %v1726, 2
      %v1800 = vsel %vm929, %v1797, %v1799
      %v1801 = vrot.slane %v1727, 2
      %v1802 = vrot.slane %v1728, 2
      %v1803 = vsel %vm929, %v1801, %v1802
      %v1804 = vrot.slane %v1729, 2
      %v1805 = vsel %vm929, %v1802, %v1804
      %v1806 = vrot.slane %v1730, 2
      %v1807 = vrot.slane %v1731, 2
      %v1808 = vsel %vm929, %v1806, %v1807
      %v1809 = vrot.slane %v1732, 2
      %v1810 = vsel %vm929, %v1807, %v1809
      %v1811 = vrot.slane %v1733, 2
      %v1812 = vrot.slane %v1734, 2
      %v1813 = vsel %vm929, %v1811, %v1812
      %v1814 = vrot.slane %v1735, 2
      %v1815 = vsel %vm929, %v1812, %v1814
      %v1846 = vadd.f32 %v1675, %v1768
      %v1847 = vadd.f32 %v1676, %v1770
      %v1848 = vadd.f32 %v1677, %v1769
      %v1849 = vadd.f32 %v1678, %v1773
      %v1850 = vadd.f32 %v1679, %v1775
      %v1851 = vadd.f32 %v1680, %v1774
      %v1852 = vadd.f32 %v1681, %v1778
      %v1853 = vadd.f32 %v1682, %v1780
      %v1854 = vadd.f32 %v1683, %v1779
      %v1855 = vadd.f32 %v1684, %v1783
      %v1856 = vadd.f32 %v1685, %v1785
      %v1857 = vadd.f32 %v1686, %v1784
      %v1858 = vadd.f32 %v1687, %v1788
      %v1859 = vadd.f32 %v1688, %v1790
      %v1860 = vadd.f32 %v1689, %v1789
      %v1861 = vadd.f32 %v1690, %v1793
      %v1862 = vadd.f32 %v1691, %v1795
      %v1863 = vadd.f32 %v1692, %v1794
      %v1864 = vadd.f32 %v1693, %v1798
      %v1865 = vadd.f32 %v1694, %v1800
      %v1866 = vadd.f32 %v1695, %v1799
      %v1867 = vadd.f32 %v1696, %v1803
      %v1868 = vadd.f32 %v1697, %v1805
      %v1869 = vadd.f32 %v1698, %v1804
      %v1870 = vadd.f32 %v1699, %v1808
      %v1871 = vadd.f32 %v1700, %v1810
      %v1872 = vadd.f32 %v1701, %v1809
      %v1873 = vadd.f32 %v1702, %v1813
      %v1874 = vadd.f32 %v1703, %v1815
      %v1875 = vadd.f32 %v1704, %v1814
      %v1876 = vld [vmem:[%s3] sm:$0x1]
      %v1878 = vperm.slane %v1876, 0
      %v1880 = vadd.f32 %v1846, %v1878
      %v1881 = vadd.f32 %v1847, %v1878
      %v1882 = vadd.f32 %v1848, %v1878
      %v1883 = vadd.f32 %v1849, %v1878
      %v1884 = vadd.f32 %v1850, %v1878
      %v1885 = vadd.f32 %v1851, %v1878
      %v1886 = vadd.f32 %v1852, %v1878
      %v1887 = vadd.f32 %v1853, %v1878
      %v1888 = vadd.f32 %v1854, %v1878
      %v1889 = vadd.f32 %v1855, %v1878
      %v1890 = vadd.f32 %v1856, %v1878
      %v1891 = vadd.f32 %v1857, %v1878
      %v1892 = vadd.f32 %v1858, %v1878
      %v1893 = vadd.f32 %v1859, %v1878
      %v1894 = vadd.f32 %v1860, %v1878
      %v1895 = vadd.f32 %v1861, %v1878
      %v1896 = vadd.f32 %v1862, %v1878
      %v1897 = vadd.f32 %v1863, %v1878
      %v1898 = vadd.f32 %v1864, %v1878
      %v1899 = vadd.f32 %v1865, %v1878
      %v1900 = vadd.f32 %v1866, %v1878
      %v1901 = vadd.f32 %v1867, %v1878
      %v1902 = vadd.f32 %v1868, %v1878
      %v1903 = vadd.f32 %v1869, %v1878
      %v1904 = vadd.f32 %v1870, %v1878
      %v1905 = vadd.f32 %v1871, %v1878
      %v1906 = vadd.f32 %v1872, %v1878
      %v1907 = vadd.f32 %v1873, %v1878
      %v1908 = vadd.f32 %v1874, %v1878
      %v1909 = vadd.f32 %v1875, %v1878
      %v1910 = vmax.f32 %v1880, 0.0
      %v1911 = vmax.f32 %v1881, 0.0
      %v1912 = vmax.f32 %v1882, 0.0
      %v1913 = vmax.f32 %v1883, 0.0
      %v1914 = vmax.f32 %v1884, 0.0
      %v1915 = vmax.f32 %v1885, 0.0
      %v1916 = vmax.f32 %v1886, 0.0
      %v1917 = vmax.f32 %v1887, 0.0
      %v1918 = vmax.f32 %v1888, 0.0
      %v1919 = vmax.f32 %v1889, 0.0
      %v1920 = vmax.f32 %v1890, 0.0
      %v1921 = vmax.f32 %v1891, 0.0
      %v1922 = vmax.f32 %v1892, 0.0
      %v1923 = vmax.f32 %v1893, 0.0
      %v1924 = vmax.f32 %v1894, 0.0
      %v1925 = vmax.f32 %v1895, 0.0
      %v1926 = vmax.f32 %v1896, 0.0
      %v1927 = vmax.f32 %v1897, 0.0
      %v1928 = vmax.f32 %v1898, 0.0
      %v1929 = vmax.f32 %v1899, 0.0
      %v1930 = vmax.f32 %v1900, 0.0
      %v1931 = vmax.f32 %v1901, 0.0
      %v1932 = vmax.f32 %v1902, 0.0
      %v1933 = vmax.f32 %v1903, 0.0
      %v1934 = vmax.f32 %v1904, 0.0
      %v1935 = vmax.f32 %v1905, 0.0
      %v1936 = vmax.f32 %v1906, 0.0
      %v1937 = vmax.f32 %v1907, 0.0
      %v1938 = vmax.f32 %v1908, 0.0
      %v1939 = vmax.f32 %v1909, 0.0
      %s1940 = ssub.s32 %s370, 1
      %v1941 = vstv %s1940
      %v1942 = vadd.s32 %v1941, 1
      %v1943 = vadd.s32 %v1941, 2
      %v1944 = vadd.s32 %v1941, 3
      %v1945 = vadd.s32 %v1941, 4
      %v1946 = vadd.s32 %v1941, 5
      %v1947 = vadd.s32 %v1941, 6
      %v1948 = vadd.s32 %v1941, 7
      %v1949 = vadd.s32 %v1941, 8
      %v1950 = vadd.s32 %v1941, 9
      %v1951 = vlaneseq
      %v1952 = vshrl.u32 %v1951, 7
      %v1953 = vadd.s32 %v1952, 8
      %v1954 = vadd.s32 %v1952, 16
      %v1955 = vsub.s32 %v1952, 1
      %v1956 = vsub.s32 %v1953, 1
      %v1957 = vsub.s32 %v1954, 1
      %vm1958 = vcmp.ge.s32.totalorder %v1941, 0
      %vm1959 = vcmp.ge.s32.totalorder %v1942, 0
      %vm1960 = vcmp.ge.s32.totalorder %v1943, 0
      %vm1961 = vcmp.ge.s32.totalorder %v1944, 0
      %vm1962 = vcmp.ge.s32.totalorder %v1945, 0
      %vm1963 = vcmp.ge.s32.totalorder %v1946, 0
      %vm1964 = vcmp.ge.s32.totalorder %v1947, 0
      %vm1965 = vcmp.ge.s32.totalorder %v1948, 0
      %vm1966 = vcmp.ge.s32.totalorder %v1949, 0
      %vm1967 = vcmp.ge.s32.totalorder %v1950, 0
      %vm1968 = vcmp.lt.s32.totalorder %v1941, 16
      %vm1969 = vcmp.lt.s32.totalorder %v1942, 16
      %vm1970 = vcmp.lt.s32.totalorder %v1943, 16
      %vm1971 = vcmp.lt.s32.totalorder %v1944, 16
      %vm1972 = vcmp.lt.s32.totalorder %v1945, 16
      %vm1973 = vcmp.lt.s32.totalorder %v1946, 16
      %vm1974 = vcmp.lt.s32.totalorder %v1947, 16
      %vm1975 = vcmp.lt.s32.totalorder %v1948, 16
      %vm1976 = vcmp.lt.s32.totalorder %v1949, 16
      %vm1977 = vcmp.lt.s32.totalorder %v1950, 16
      %vm1978 = vmand %vm1958, %vm1968
      %vm1979 = vmand %vm1959, %vm1969
      %vm1980 = vmand %vm1960, %vm1970
      %vm1981 = vmand %vm1961, %vm1971
      %vm1982 = vmand %vm1962, %vm1972
      %vm1983 = vmand %vm1963, %vm1973
      %vm1984 = vmand %vm1964, %vm1974
      %vm1985 = vmand %vm1965, %vm1975
      %vm1986 = vmand %vm1966, %vm1976
      %vm1987 = vmand %vm1967, %vm1977
      %vm1988 = vcmp.ge.s32.totalorder %v1955, 0
      %vm1989 = vcmp.ge.s32.totalorder %v1956, 0
      %vm1990 = vcmp.ge.s32.totalorder %v1957, 0
      %vm1991 = vmand %vm1978, %vm1988
      %vm1992 = vmand %vm1978, %vm1989
      %vm1993 = vmand %vm1978, %vm1990
      %vm1994 = vmand %vm1979, %vm1988
      %vm1995 = vmand %vm1979, %vm1989
      %vm1996 = vmand %vm1979, %vm1990
      %vm1997 = vmand %vm1980, %vm1988
      %vm1998 = vmand %vm1980, %vm1989
      %vm1999 = vmand %vm1980, %vm1990
      %vm2000 = vmand %vm1981, %vm1988
      %vm2001 = vmand %vm1981, %vm1989
      %vm2002 = vmand %vm1981, %vm1990
      %vm2003 = vmand %vm1982, %vm1988
      %vm2004 = vmand %vm1982, %vm1989
      %vm2005 = vmand %vm1982, %vm1990
      %vm2006 = vmand %vm1983, %vm1988
      %vm2007 = vmand %vm1983, %vm1989
      %vm2008 = vmand %vm1983, %vm1990
      %vm2009 = vmand %vm1984, %vm1988
      %vm2010 = vmand %vm1984, %vm1989
      %vm2011 = vmand %vm1984, %vm1990
      %vm2012 = vmand %vm1985, %vm1988
      %vm2013 = vmand %vm1985, %vm1989
      %vm2014 = vmand %vm1985, %vm1990
      %vm2015 = vmand %vm1986, %vm1988
      %vm2016 = vmand %vm1986, %vm1989
      %vm2017 = vmand %vm1986, %vm1990
      %vm2018 = vmand %vm1987, %vm1988
      %vm2019 = vmand %vm1987, %vm1989
      %vm2020 = vmand %vm1987, %vm1990
      %vm2021 = vcmp.lt.s32.totalorder %v1955, 16
      %vm2022 = vcmp.lt.s32.totalorder %v1956, 16
      %vm2023 = vcmp.lt.s32.totalorder %v1957, 16
      %vm2024 = vmand %vm1991, %vm2021
      %vm2025 = vmand %vm1992, %vm2022
      %vm2026 = vmand %vm1993, %vm2023
      %vm2027 = vmand %vm1994, %vm2021
      %vm2028 = vmand %vm1995, %vm2022
      %vm2029 = vmand %vm1996, %vm2023
      %vm2030 = vmand %vm1997, %vm2021
      %vm2031 = vmand %vm1998, %vm2022
      %vm2032 = vmand %vm1999, %vm2023
      %vm2033 = vmand %vm2000, %vm2021
      %vm2034 = vmand %vm2001, %vm2022
      %vm2035 = vmand %vm2002, %vm2023
      %vm2036 = vmand %vm2003, %vm2021
      %vm2037 = vmand %vm2004, %vm2022
      %vm2038 = vmand %vm2005, %vm2023
      %vm2039 = vmand %vm2006, %vm2021
      %vm2040 = vmand %vm2007, %vm2022
      %vm2041 = vmand %vm2008, %vm2023
      %vm2042 = vmand %vm2009, %vm2021
      %vm2043 = vmand %vm2010, %vm2022
      %vm2044 = vmand %vm2011, %vm2023
      %vm2045 = vmand %vm2012, %vm2021
      %vm2046 = vmand %vm2013, %vm2022
      %vm2047 = vmand %vm2014, %vm2023
      %vm2048 = vmand %vm2015, %vm2021
      %vm2049 = vmand %vm2016, %vm2022
      %vm2050 = vmand %vm2017, %vm2023
      %vm2051 = vmand %vm2018, %vm2021
      %vm2052 = vmand %vm2019, %vm2022
      %vm2053 = vmand %vm2020, %vm2023
      %v2054 = vsel %vm2024, 1, 0
      %v2055 = vsel %vm2025, 1, 0
      %v2056 = vsel %vm2026, 1, 0
      %v2057 = vsel %vm2027, 1, 0
      %v2058 = vsel %vm2028, 1, 0
      %v2059 = vsel %vm2029, 1, 0
      %v2060 = vsel %vm2030, 1, 0
      %v2061 = vsel %vm2031, 1, 0
      %v2062 = vsel %vm2032, 1, 0
      %v2063 = vsel %vm2033, 1, 0
      %v2064 = vsel %vm2034, 1, 0
      %v2065 = vsel %vm2035, 1, 0
      %v2066 = vsel %vm2036, 1, 0
      %v2067 = vsel %vm2037, 1, 0
      %v2068 = vsel %vm2038, 1, 0
      %v2069 = vsel %vm2039, 1, 0
      %v2070 = vsel %vm2040, 1, 0
      %v2071 = vsel %vm2041, 1, 0
      %v2072 = vsel %vm2042, 1, 0
      %v2073 = vsel %vm2043, 1, 0
      %v2074 = vsel %vm2044, 1, 0
      %v2075 = vsel %vm2045, 1, 0
      %v2076 = vsel %vm2046, 1, 0
      %v2077 = vsel %vm2047, 1, 0
      %v2078 = vsel %vm2048, 1, 0
      %v2079 = vsel %vm2049, 1, 0
      %v2080 = vsel %vm2050, 1, 0
      %v2081 = vsel %vm2051, 1, 0
      %v2082 = vsel %vm2052, 1, 0
      %v2083 = vsel %vm2053, 1, 0
      %vm2084 = vcmp.eq.s32.totalorder %v2054, 1
      %vm2085 = vcmp.eq.s32.totalorder %v2055, 1
      %vm2086 = vcmp.eq.s32.totalorder %v2056, 1
      %vm2087 = vcmp.eq.s32.totalorder %v2057, 1
      %vm2088 = vcmp.eq.s32.totalorder %v2058, 1
      %vm2089 = vcmp.eq.s32.totalorder %v2059, 1
      %vm2090 = vcmp.eq.s32.totalorder %v2060, 1
      %vm2091 = vcmp.eq.s32.totalorder %v2061, 1
      %vm2092 = vcmp.eq.s32.totalorder %v2062, 1
      %vm2093 = vcmp.eq.s32.totalorder %v2063, 1
      %vm2094 = vcmp.eq.s32.totalorder %v2064, 1
      %vm2095 = vcmp.eq.s32.totalorder %v2065, 1
      %vm2096 = vcmp.eq.s32.totalorder %v2066, 1
      %vm2097 = vcmp.eq.s32.totalorder %v2067, 1
      %vm2098 = vcmp.eq.s32.totalorder %v2068, 1
      %vm2099 = vcmp.eq.s32.totalorder %v2069, 1
      %vm2100 = vcmp.eq.s32.totalorder %v2070, 1
      %vm2101 = vcmp.eq.s32.totalorder %v2071, 1
      %vm2102 = vcmp.eq.s32.totalorder %v2072, 1
      %vm2103 = vcmp.eq.s32.totalorder %v2073, 1
      %vm2104 = vcmp.eq.s32.totalorder %v2074, 1
      %vm2105 = vcmp.eq.s32.totalorder %v2075, 1
      %vm2106 = vcmp.eq.s32.totalorder %v2076, 1
      %vm2107 = vcmp.eq.s32.totalorder %v2077, 1
      %vm2108 = vcmp.eq.s32.totalorder %v2078, 1
      %vm2109 = vcmp.eq.s32.totalorder %v2079, 1
      %vm2110 = vcmp.eq.s32.totalorder %v2080, 1
      %vm2111 = vcmp.eq.s32.totalorder %v2081, 1
      %vm2112 = vcmp.eq.s32.totalorder %v2082, 1
      %vm2113 = vcmp.eq.s32.totalorder %v2083, 1
      %v2114 = vsel %vm2084, %v1910, 0.0
      %v2115 = vsel %vm2085, %v1911, 0.0
      %v2116 = vsel %vm2086, %v1912, 0.0
      %v2117 = vsel %vm2087, %v1913, 0.0
      %v2118 = vsel %vm2088, %v1914, 0.0
      %v2119 = vsel %vm2089, %v1915, 0.0
      %v2120 = vsel %vm2090, %v1916, 0.0
      %v2121 = vsel %vm2091, %v1917, 0.0
      %v2122 = vsel %vm2092, %v1918, 0.0
      %v2123 = vsel %vm2093, %v1919, 0.0
      %v2124 = vsel %vm2094, %v1920, 0.0
      %v2125 = vsel %vm2095, %v1921, 0.0
      %v2126 = vsel %vm2096, %v1922, 0.0
      %v2127 = vsel %vm2097, %v1923, 0.0
      %v2128 = vsel %vm2098, %v1924, 0.0
      %v2129 = vsel %vm2099, %v1925, 0.0
      %v2130 = vsel %vm2100, %v1926, 0.0
      %v2131 = vsel %vm2101, %v1927, 0.0
      %v2132 = vsel %vm2102, %v1928, 0.0
      %v2133 = vsel %vm2103, %v1929, 0.0
      %v2134 = vsel %vm2104, %v1930, 0.0
      %v2135 = vsel %vm2105, %v1931, 0.0
      %v2136 = vsel %vm2106, %v1932, 0.0
      %v2137 = vsel %vm2107, %v1933, 0.0
      %v2138 = vsel %vm2108, %v1934, 0.0
      %v2139 = vsel %vm2109, %v1935, 0.0
      %v2140 = vsel %vm2110, %v1936, 0.0
      %v2141 = vsel %vm2111, %v1937, 0.0
      %v2142 = vsel %vm2112, %v1938, 0.0
      %v2143 = vsel %vm2113, %v1939, 0.0
      %v2144 = vpack.c.bf16 %v2114, %v2114
      %v2145 = vpack.c.bf16 %v2115, %v2115
      %v2146 = vpack.c.bf16 %v2116, %v2116
      %v2147 = vpack.c.bf16 %v2117, %v2117
      %v2148 = vpack.c.bf16 %v2118, %v2118
      %v2149 = vpack.c.bf16 %v2119, %v2119
      %v2150 = vpack.c.bf16 %v2120, %v2120
      %v2151 = vpack.c.bf16 %v2121, %v2121
      %v2152 = vpack.c.bf16 %v2122, %v2122
      %v2153 = vpack.c.bf16 %v2123, %v2123
      %v2154 = vpack.c.bf16 %v2124, %v2124
      %v2155 = vpack.c.bf16 %v2125, %v2125
      %v2156 = vpack.c.bf16 %v2126, %v2126
      %v2157 = vpack.c.bf16 %v2127, %v2127
      %v2158 = vpack.c.bf16 %v2128, %v2128
      %v2159 = vpack.c.bf16 %v2129, %v2129
      %v2160 = vpack.c.bf16 %v2130, %v2130
      %v2161 = vpack.c.bf16 %v2131, %v2131
      %v2162 = vpack.c.bf16 %v2132, %v2132
      %v2163 = vpack.c.bf16 %v2133, %v2133
      %v2164 = vpack.c.bf16 %v2134, %v2134
      %v2165 = vpack.c.bf16 %v2135, %v2135
      %v2166 = vpack.c.bf16 %v2136, %v2136
      %v2167 = vpack.c.bf16 %v2137, %v2137
      %v2168 = vpack.c.bf16 %v2138, %v2138
      %v2169 = vpack.c.bf16 %v2139, %v2139
      %v2170 = vpack.c.bf16 %v2140, %v2140
      %v2171 = vpack.c.bf16 %v2141, %v2141
      %v2172 = vpack.c.bf16 %v2142, %v2142
      %v2173 = vpack.c.bf16 %v2143, %v2143
      %v2174 = vld [vmem:[%s4] sm:$0xff]
      %v2175 = vld [vmem:[%s4 + $0x8] sm:$0xff]
      %v2176 = vld [vmem:[%s4 + $0x10] sm:$0xff]
      %v2177 = vld [vmem:[%s4 + $0x18] sm:$0xff]
      %v2178 = vld [vmem:[%s4 + $0x20] sm:$0xff]
      %v2179 = vld [vmem:[%s4 + $0x28] sm:$0xff]
      %v2180 = vld [vmem:[%s4 + $0x30] sm:$0xff]
      %v2181 = vld [vmem:[%s4 + $0x38] sm:$0xff]
      %v2182 = vld [vmem:[%s4 + $0x40] sm:$0xff]
      %v2183 = vld [vmem:[%s4 + $0x48] sm:$0xff]
      %v2184 = vld [vmem:[%s4 + $0x50] sm:$0xff]
      %v2185 = vld [vmem:[%s4 + $0x58] sm:$0xff]
      %v2186 = vld [vmem:[%s4 + $0x60] sm:$0xff]
      %v2187 = vld [vmem:[%s4 + $0x68] sm:$0xff]
      %v2188 = vld [vmem:[%s4 + $0x70] sm:$0xff]
      %v2189 = vld [vmem:[%s4 + $0x78] sm:$0xff]
      %vm2190 = vsmask.f32 3328
      %vm2191 = vsmask.f32 7440
      %vm2192 = vmor %vm2190, %vm2191
      %v2194 = vshrl.u32 %v2144, 16
      %v2196 = vrot.slane %v2194, 4
      %v2197 = vshll.u32 %v2144, 16
      %v2199 = vrot.slane %v2197, 5
      %v2200 = vor.u32 %v2196, %v2199
      %v2201 = vrot.slane %v2200, 4
      %v2203 = vshll.u32 %v2145, 16
      %v2205 = vrot.slane %v2203, 5
      %v2206 = vsel %vm2192, %v2201, %v2205
      %v2207 = vshrl.u32 %v2145, 16
      %v2209 = vrot.slane %v2207, 4
      %v2210 = vor.u32 %v2209, %v2205
      %v2211 = vrot.slane %v2210, 4
      %v2213 = vshll.u32 %v2146, 16
      %v2215 = vrot.slane %v2213, 5
      %v2216 = vsel %vm2192, %v2211, %v2215
      %v2218 = vshrl.u32 %v2147, 16
      %v2220 = vrot.slane %v2218, 4
      %v2221 = vshll.u32 %v2147, 16
      %v2223 = vrot.slane %v2221, 5
      %v2224 = vor.u32 %v2220, %v2223
      %v2225 = vrot.slane %v2224, 4
      %v2227 = vshll.u32 %v2148, 16
      %v2229 = vrot.slane %v2227, 5
      %v2230 = vsel %vm2192, %v2225, %v2229
      %v2231 = vshrl.u32 %v2148, 16
      %v2233 = vrot.slane %v2231, 4
      %v2234 = vor.u32 %v2233, %v2229
      %v2235 = vrot.slane %v2234, 4
      %v2237 = vshll.u32 %v2149, 16
      %v2239 = vrot.slane %v2237, 5
      %v2240 = vsel %vm2192, %v2235, %v2239
      %v2242 = vshrl.u32 %v2150, 16
      %v2244 = vrot.slane %v2242, 4
      %v2245 = vshll.u32 %v2150, 16
      %v2247 = vrot.slane %v2245, 5
      %v2248 = vor.u32 %v2244, %v2247
      %v2249 = vrot.slane %v2248, 4
      %v2251 = vshll.u32 %v2151, 16
      %v2253 = vrot.slane %v2251, 5
      %v2254 = vsel %vm2192, %v2249, %v2253
      %v2255 = vshrl.u32 %v2151, 16
      %v2257 = vrot.slane %v2255, 4
      %v2258 = vor.u32 %v2257, %v2253
      %v2259 = vrot.slane %v2258, 4
      %v2261 = vshll.u32 %v2152, 16
      %v2263 = vrot.slane %v2261, 5
      %v2264 = vsel %vm2192, %v2259, %v2263
      %v2266 = vshrl.u32 %v2153, 16
      %v2268 = vrot.slane %v2266, 4
      %v2269 = vshll.u32 %v2153, 16
      %v2271 = vrot.slane %v2269, 5
      %v2272 = vor.u32 %v2268, %v2271
      %v2273 = vrot.slane %v2272, 4
      %v2275 = vshll.u32 %v2154, 16
      %v2277 = vrot.slane %v2275, 5
      %v2278 = vsel %vm2192, %v2273, %v2277
      %v2279 = vshrl.u32 %v2154, 16
      %v2281 = vrot.slane %v2279, 4
      %v2282 = vor.u32 %v2281, %v2277
      %v2283 = vrot.slane %v2282, 4
      %v2285 = vshll.u32 %v2155, 16
      %v2287 = vrot.slane %v2285, 5
      %v2288 = vsel %vm2192, %v2283, %v2287
      %v2290 = vshrl.u32 %v2156, 16
      %v2292 = vrot.slane %v2290, 4
      %v2293 = vshll.u32 %v2156, 16
      %v2295 = vrot.slane %v2293, 5
      %v2296 = vor.u32 %v2292, %v2295
      %v2297 = vrot.slane %v2296, 4
      %v2299 = vshll.u32 %v2157, 16
      %v2301 = vrot.slane %v2299, 5
      %v2302 = vsel %vm2192, %v2297, %v2301
      %v2303 = vshrl.u32 %v2157, 16
      %v2305 = vrot.slane %v2303, 4
      %v2306 = vor.u32 %v2305, %v2301
      %v2307 = vrot.slane %v2306, 4
      %v2309 = vshll.u32 %v2158, 16
      %v2311 = vrot.slane %v2309, 5
      %v2312 = vsel %vm2192, %v2307, %v2311
      %v2314 = vshrl.u32 %v2159, 16
      %v2316 = vrot.slane %v2314, 4
      %v2317 = vshll.u32 %v2159, 16
      %v2319 = vrot.slane %v2317, 5
      %v2320 = vor.u32 %v2316, %v2319
      %v2321 = vrot.slane %v2320, 4
      %v2323 = vshll.u32 %v2160, 16
      %v2325 = vrot.slane %v2323, 5
      %v2326 = vsel %vm2192, %v2321, %v2325
      %v2327 = vshrl.u32 %v2160, 16
      %v2329 = vrot.slane %v2327, 4
      %v2330 = vor.u32 %v2329, %v2325
      %v2331 = vrot.slane %v2330, 4
      %v2333 = vshll.u32 %v2161, 16
      %v2335 = vrot.slane %v2333, 5
      %v2336 = vsel %vm2192, %v2331, %v2335
      %v2338 = vshrl.u32 %v2162, 16
      %v2340 = vrot.slane %v2338, 4
      %v2341 = vshll.u32 %v2162, 16
      %v2343 = vrot.slane %v2341, 5
      %v2344 = vor.u32 %v2340, %v2343
      %v2345 = vrot.slane %v2344, 4
      %v2347 = vshll.u32 %v2163, 16
      %v2349 = vrot.slane %v2347, 5
      %v2350 = vsel %vm2192, %v2345, %v2349
      %v2351 = vshrl.u32 %v2163, 16
      %v2353 = vrot.slane %v2351, 4
      %v2354 = vor.u32 %v2353, %v2349
      %v2355 = vrot.slane %v2354, 4
      %v2357 = vshll.u32 %v2164, 16
      %v2359 = vrot.slane %v2357, 5
      %v2360 = vsel %vm2192, %v2355, %v2359
      %v2362 = vshrl.u32 %v2165, 16
      %v2364 = vrot.slane %v2362, 4
      %v2365 = vshll.u32 %v2165, 16
      %v2367 = vrot.slane %v2365, 5
      %v2368 = vor.u32 %v2364, %v2367
      %v2369 = vrot.slane %v2368, 4
      %v2371 = vshll.u32 %v2166, 16
      %v2373 = vrot.slane %v2371, 5
      %v2374 = vsel %vm2192, %v2369, %v2373
      %v2375 = vshrl.u32 %v2166, 16
      %v2377 = vrot.slane %v2375, 4
      %v2378 = vor.u32 %v2377, %v2373
      %v2379 = vrot.slane %v2378, 4
      %v2381 = vshll.u32 %v2167, 16
      %v2383 = vrot.slane %v2381, 5
      %v2384 = vsel %vm2192, %v2379, %v2383
      %s2385 = scalar_lea.vmem %s4, 128
      %v2386 = vld [vmem:[%s2385] sm:$0xff]
      %v2387 = vld [vmem:[%s2385 + $0x8] sm:$0xff]
      %v2388 = vld [vmem:[%s2385 + $0x10] sm:$0xff]
      %v2389 = vld [vmem:[%s2385 + $0x18] sm:$0xff]
      %v2390 = vld [vmem:[%s2385 + $0x20] sm:$0xff]
      %v2391 = vld [vmem:[%s2385 + $0x28] sm:$0xff]
      %v2392 = vld [vmem:[%s2385 + $0x30] sm:$0xff]
      %v2393 = vld [vmem:[%s2385 + $0x38] sm:$0xff]
      %v2394 = vld [vmem:[%s2385 + $0x40] sm:$0xff]
      %v2395 = vld [vmem:[%s2385 + $0x48] sm:$0xff]
      %v2396 = vld [vmem:[%s2385 + $0x50] sm:$0xff]
      %v2397 = vld [vmem:[%s2385 + $0x58] sm:$0xff]
      %v2398 = vld [vmem:[%s2385 + $0x60] sm:$0xff]
      %v2399 = vld [vmem:[%s2385 + $0x68] sm:$0xff]
      %v2400 = vld [vmem:[%s2385 + $0x70] sm:$0xff]
      %v2401 = vld [vmem:[%s2385 + $0x78] sm:$0xff]
      %v2402 = vunpack.c.l.b16 %v2206
      %v2403 = vunpack.c.l.b16 %v2216
      %v2404 = vunpack.c.l.b16 %v2230
      %v2405 = vunpack.c.l.b16 %v2240
      %v2406 = vunpack.c.l.b16 %v2254
      %v2407 = vunpack.c.l.b16 %v2264
      %v2408 = vunpack.c.l.b16 %v2278
      %v2409 = vunpack.c.l.b16 %v2288
      %v2410 = vunpack.c.l.b16 %v2302
      %v2411 = vunpack.c.l.b16 %v2312
      %v2412 = vunpack.c.l.b16 %v2326
      %v2413 = vunpack.c.l.b16 %v2336
      %v2414 = vunpack.c.l.b16 %v2350
      %v2415 = vunpack.c.l.b16 %v2360
      %v2416 = vunpack.c.l.b16 %v2374
      %v2417 = vunpack.c.l.b16 %v2384
      %v2418 = vpack.c.b16 %v2403, %v2402
      %v2419 = vpack.c.b16 %v2405, %v2404
      %v2420 = vpack.c.b16 %v2407, %v2406
      %v2421 = vpack.c.b16 %v2409, %v2408
      %v2422 = vpack.c.b16 %v2411, %v2410
      %v2423 = vpack.c.b16 %v2413, %v2412
      %v2424 = vpack.c.b16 %v2415, %v2414
      %v2425 = vpack.c.b16 %v2417, %v2416
      %v2450 = vunpack.c.l.b16 %v2386
      %v2451 = vunpack.c.h.b16 %v2386
      %v2452 = vunpack.c.l.b16 %v2387
      %v2453 = vunpack.c.h.b16 %v2387
      %v2454 = vunpack.c.l.b16 %v2388
      %v2455 = vunpack.c.h.b16 %v2388
      %v2456 = vunpack.c.l.b16 %v2389
      %v2457 = vunpack.c.h.b16 %v2389
      %v2458 = vunpack.c.l.b16 %v2390
      %v2459 = vunpack.c.h.b16 %v2390
      %v2460 = vunpack.c.l.b16 %v2391
      %v2461 = vunpack.c.h.b16 %v2391
      %v2462 = vunpack.c.l.b16 %v2392
      %v2463 = vunpack.c.h.b16 %v2392
      %v2464 = vunpack.c.l.b16 %v2393
      %v2465 = vunpack.c.h.b16 %v2393
      %v2466 = vunpack.c.l.b16 %v2394
      %v2467 = vunpack.c.h.b16 %v2394
      %v2468 = vunpack.c.l.b16 %v2395
      %v2469 = vunpack.c.h.b16 %v2395
      %v2470 = vunpack.c.l.b16 %v2396
      %v2471 = vunpack.c.h.b16 %v2396
      %v2472 = vunpack.c.l.b16 %v2397
      %v2473 = vunpack.c.h.b16 %v2397
      %v2474 = vunpack.c.l.b16 %v2398
      %v2475 = vunpack.c.h.b16 %v2398
      %v2476 = vunpack.c.l.b16 %v2399
      %v2477 = vunpack.c.h.b16 %v2399
      %v2478 = vunpack.c.l.b16 %v2400
      %v2479 = vunpack.c.h.b16 %v2400
      %v2480 = vunpack.c.l.b16 %v2401
      %v2481 = vunpack.c.h.b16 %v2401
      %v2482 = vpack.c.b16 %v2452, %v2450
      %v2483 = vpack.c.b16 %v2453, %v2451
      %v2484 = vpack.c.b16 %v2456, %v2454
      %v2485 = vpack.c.b16 %v2457, %v2455
      %v2486 = vpack.c.b16 %v2460, %v2458
      %v2487 = vpack.c.b16 %v2461, %v2459
      %v2488 = vpack.c.b16 %v2464, %v2462
      %v2489 = vpack.c.b16 %v2465, %v2463
      %v2490 = vpack.c.b16 %v2468, %v2466
      %v2491 = vpack.c.b16 %v2469, %v2467
      %v2492 = vpack.c.b16 %v2472, %v2470
      %v2493 = vpack.c.b16 %v2473, %v2471
      %v2494 = vpack.c.b16 %v2476, %v2474
      %v2495 = vpack.c.b16 %v2477, %v2475
      %v2496 = vpack.c.b16 %v2480, %v2478
      %v2497 = vpack.c.b16 %v2481, %v2479
      %2514 = vmatpush.bf16.msra.mxu0 %v2496
      %2515 = vmatpush.bf16.msra.mxu0 %v2494
      %2516 = vmatpush.bf16.msra.mxu0 %v2492
      %2517 = vmatpush.bf16.msra.mxu0 %v2490
      %2518 = vmatpush.bf16.msra.mxu0 %v2488
      %2519 = vmatpush.bf16.msra.mxu0 %v2486
      %2520 = vmatpush.bf16.msra.mxu0 %v2484
      %2521 = vmatpush.bf16.msra.mxu0 %v2482
      %2522 = vmatmul.bf16.gmra.mxu0 %v2418
      %v2523 = vpop.f32.mrf.mxu0
      %v2524 = vadd.f32 0.0, %v2523
      %v2525 = vpop.f32.mrf.mxu0
      %v2526 = vadd.f32 0.0, %v2525
      %2527 = vmatmul.bf16.gmra.mxu0 %v2419
      %v2528 = vpop.f32.mrf.mxu0
      %v2529 = vadd.f32 0.0, %v2528
      %v2530 = vpop.f32.mrf.mxu0
      %v2531 = vadd.f32 0.0, %v2530
      %2532 = vmatmul.bf16.gmra.mxu0 %v2420
      %v2533 = vpop.f32.mrf.mxu0
      %v2534 = vadd.f32 0.0, %v2533
      %v2535 = vpop.f32.mrf.mxu0
      %v2536 = vadd.f32 0.0, %v2535
      %2537 = vmatmul.bf16.gmra.mxu0 %v2421
      %v2538 = vpop.f32.mrf.mxu0
      %v2539 = vadd.f32 0.0, %v2538
      %v2540 = vpop.f32.mrf.mxu0
      %v2541 = vadd.f32 0.0, %v2540
      %2542 = vmatmul.bf16.gmra.mxu0 %v2422
      %v2543 = vpop.f32.mrf.mxu0
      %v2544 = vadd.f32 0.0, %v2543
      %v2545 = vpop.f32.mrf.mxu0
      %v2546 = vadd.f32 0.0, %v2545
      %2547 = vmatmul.bf16.gmra.mxu0 %v2423
      %v2548 = vpop.f32.mrf.mxu0
      %v2549 = vadd.f32 0.0, %v2548
      %v2550 = vpop.f32.mrf.mxu0
      %v2551 = vadd.f32 0.0, %v2550
      %2552 = vmatmul.bf16.gmra.mxu0 %v2424
      %v2553 = vpop.f32.mrf.mxu0
      %v2554 = vadd.f32 0.0, %v2553
      %v2555 = vpop.f32.mrf.mxu0
      %v2556 = vadd.f32 0.0, %v2555
      %2557 = vmatmul.bf16.gmra.mxu0 %v2425
      %v2558 = vpop.f32.mrf.mxu0
      %v2559 = vadd.f32 0.0, %v2558
      %v2560 = vpop.f32.mrf.mxu0
      %v2561 = vadd.f32 0.0, %v2560
      %2562 = vdwg.mxu0
      %2563 = vmatpush.bf16.msra.mxu0 %v2497
      %2564 = vmatpush.bf16.msra.mxu0 %v2495
      %2565 = vmatpush.bf16.msra.mxu0 %v2493
      %2566 = vmatpush.bf16.msra.mxu0 %v2491
      %2567 = vmatpush.bf16.msra.mxu0 %v2489
      %2568 = vmatpush.bf16.msra.mxu0 %v2487
      %2569 = vmatpush.bf16.msra.mxu0 %v2485
      %2570 = vmatpush.bf16.msra.mxu0 %v2483
      %2571 = vmatmul.bf16.gmra.mxu0 %v2418
      %v2572 = vpop.f32.mrf.mxu0
      %v2573 = vadd.f32 0.0, %v2572
      %v2574 = vpop.f32.mrf.mxu0
      %v2575 = vadd.f32 0.0, %v2574
      %2576 = vmatmul.bf16.gmra.mxu0 %v2419
      %v2577 = vpop.f32.mrf.mxu0
      %v2578 = vadd.f32 0.0, %v2577
      %v2579 = vpop.f32.mrf.mxu0
      %v2580 = vadd.f32 0.0, %v2579
      %2581 = vmatmul.bf16.gmra.mxu0 %v2420
      %v2582 = vpop.f32.mrf.mxu0
      %v2583 = vadd.f32 0.0, %v2582
      %v2584 = vpop.f32.mrf.mxu0
      %v2585 = vadd.f32 0.0, %v2584
      %2586 = vmatmul.bf16.gmra.mxu0 %v2421
      %v2587 = vpop.f32.mrf.mxu0
      %v2588 = vadd.f32 0.0, %v2587
      %v2589 = vpop.f32.mrf.mxu0
      %v2590 = vadd.f32 0.0, %v2589
      %2591 = vmatmul.bf16.gmra.mxu0 %v2422
      %v2592 = vpop.f32.mrf.mxu0
      %v2593 = vadd.f32 0.0, %v2592
      %v2594 = vpop.f32.mrf.mxu0
      %v2595 = vadd.f32 0.0, %v2594
      %2596 = vmatmul.bf16.gmra.mxu0 %v2423
      %v2597 = vpop.f32.mrf.mxu0
      %v2598 = vadd.f32 0.0, %v2597
      %v2599 = vpop.f32.mrf.mxu0
      %v2600 = vadd.f32 0.0, %v2599
      %2601 = vmatmul.bf16.gmra.mxu0 %v2424
      %v2602 = vpop.f32.mrf.mxu0
      %v2603 = vadd.f32 0.0, %v2602
      %v2604 = vpop.f32.mrf.mxu0
      %v2605 = vadd.f32 0.0, %v2604
      %2606 = vmatmul.bf16.gmra.mxu0 %v2425
      %v2607 = vpop.f32.mrf.mxu0
      %v2608 = vadd.f32 0.0, %v2607
      %v2609 = vpop.f32.mrf.mxu0
      %v2610 = vadd.f32 0.0, %v2609
      %2611 = vdwg.mxu0
      %v2628 = vunpack.c.l.b16 %v2144
      %v2629 = vunpack.c.l.b16 %v2145
      %v2630 = vunpack.c.l.b16 %v2147
      %v2631 = vunpack.c.l.b16 %v2148
      %v2632 = vunpack.c.l.b16 %v2150
      %v2633 = vunpack.c.l.b16 %v2151
      %v2634 = vunpack.c.l.b16 %v2153
      %v2635 = vunpack.c.l.b16 %v2154
      %v2636 = vunpack.c.l.b16 %v2156
      %v2637 = vunpack.c.l.b16 %v2157
      %v2638 = vunpack.c.l.b16 %v2159
      %v2639 = vunpack.c.l.b16 %v2160
      %v2640 = vunpack.c.l.b16 %v2162
      %v2641 = vunpack.c.l.b16 %v2163
      %v2642 = vunpack.c.l.b16 %v2165
      %v2643 = vunpack.c.l.b16 %v2166
      %v2644 = vpack.c.b16 %v2629, %v2628
      %v2645 = vpack.c.b16 %v2631, %v2630
      %v2646 = vpack.c.b16 %v2633, %v2632
      %v2647 = vpack.c.b16 %v2635, %v2634
      %v2648 = vpack.c.b16 %v2637, %v2636
      %v2649 = vpack.c.b16 %v2639, %v2638
      %v2650 = vpack.c.b16 %v2641, %v2640
      %v2651 = vpack.c.b16 %v2643, %v2642
      %v2676 = vunpack.c.l.b16 %v2174
      %v2677 = vunpack.c.h.b16 %v2174
      %v2678 = vunpack.c.l.b16 %v2175
      %v2679 = vunpack.c.h.b16 %v2175
      %v2680 = vunpack.c.l.b16 %v2176
      %v2681 = vunpack.c.h.b16 %v2176
      %v2682 = vunpack.c.l.b16 %v2177
      %v2683 = vunpack.c.h.b16 %v2177
      %v2684 = vunpack.c.l.b16 %v2178
      %v2685 = vunpack.c.h.b16 %v2178
      %v2686 = vunpack.c.l.b16 %v2179
      %v2687 = vunpack.c.h.b16 %v2179
      %v2688 = vunpack.c.l.b16 %v2180
      %v2689 = vunpack.c.h.b16 %v2180
      %v2690 = vunpack.c.l.b16 %v2181
      %v2691 = vunpack.c.h.b16 %v2181
      %v2692 = vunpack.c.l.b16 %v2182
      %v2693 = vunpack.c.h.b16 %v2182
      %v2694 = vunpack.c.l.b16 %v2183
      %v2695 = vunpack.c.h.b16 %v2183
      %v2696 = vunpack.c.l.b16 %v2184
      %v2697 = vunpack.c.h.b16 %v2184
      %v2698 = vunpack.c.l.b16 %v2185
      %v2699 = vunpack.c.h.b16 %v2185
      %v2700 = vunpack.c.l.b16 %v2186
      %v2701 = vunpack.c.h.b16 %v2186
      %v2702 = vunpack.c.l.b16 %v2187
      %v2703 = vunpack.c.h.b16 %v2187
      %v2704 = vunpack.c.l.b16 %v2188
      %v2705 = vunpack.c.h.b16 %v2188
      %v2706 = vunpack.c.l.b16 %v2189
      %v2707 = vunpack.c.h.b16 %v2189
      %v2708 = vpack.c.b16 %v2678, %v2676
      %v2709 = vpack.c.b16 %v2679, %v2677
      %v2710 = vpack.c.b16 %v2682, %v2680
      %v2711 = vpack.c.b16 %v2683, %v2681
      %v2712 = vpack.c.b16 %v2686, %v2684
      %v2713 = vpack.c.b16 %v2687, %v2685
      %v2714 = vpack.c.b16 %v2690, %v2688
      %v2715 = vpack.c.b16 %v2691, %v2689
      %v2716 = vpack.c.b16 %v2694, %v2692
      %v2717 = vpack.c.b16 %v2695, %v2693
      %v2718 = vpack.c.b16 %v2698, %v2696
      %v2719 = vpack.c.b16 %v2699, %v2697
      %v2720 = vpack.c.b16 %v2702, %v2700
      %v2721 = vpack.c.b16 %v2703, %v2701
      %v2722 = vpack.c.b16 %v2706, %v2704
      %v2723 = vpack.c.b16 %v2707, %v2705
      %2740 = vmatpush.bf16.msra.mxu0 %v2722
      %2741 = vmatpush.bf16.msra.mxu0 %v2720
      %2742 = vmatpush.bf16.msra.mxu0 %v2718
      %2743 = vmatpush.bf16.msra.mxu0 %v2716
      %2744 = vmatpush.bf16.msra.mxu0 %v2714
      %2745 = vmatpush.bf16.msra.mxu0 %v2712
      %2746 = vmatpush.bf16.msra.mxu0 %v2710
      %2747 = vmatpush.bf16.msra.mxu0 %v2708
      %2748 = vmatmul.bf16.gmra.mxu0 %v2644
      %v2749 = vpop.f32.mrf.mxu0
      %v2750 = vadd.f32 %v2524, %v2749
      %v2751 = vpop.f32.mrf.mxu0
      %v2752 = vadd.f32 %v2526, %v2751
      %2753 = vmatmul.bf16.gmra.mxu0 %v2645
      %v2754 = vpop.f32.mrf.mxu0
      %v2755 = vadd.f32 %v2529, %v2754
      %v2756 = vpop.f32.mrf.mxu0
      %v2757 = vadd.f32 %v2531, %v2756
      %2758 = vmatmul.bf16.gmra.mxu0 %v2646
      %v2759 = vpop.f32.mrf.mxu0
      %v2760 = vadd.f32 %v2534, %v2759
      %v2761 = vpop.f32.mrf.mxu0
      %v2762 = vadd.f32 %v2536, %v2761
      %2763 = vmatmul.bf16.gmra.mxu0 %v2647
      %v2764 = vpop.f32.mrf.mxu0
      %v2765 = vadd.f32 %v2539, %v2764
      %v2766 = vpop.f32.mrf.mxu0
      %v2767 = vadd.f32 %v2541, %v2766
      %2768 = vmatmul.bf16.gmra.mxu0 %v2648
      %v2769 = vpop.f32.mrf.mxu0
      %v2770 = vadd.f32 %v2544, %v2769
      %v2771 = vpop.f32.mrf.mxu0
      %v2772 = vadd.f32 %v2546, %v2771
      %2773 = vmatmul.bf16.gmra.mxu0 %v2649
      %v2774 = vpop.f32.mrf.mxu0
      %v2775 = vadd.f32 %v2549, %v2774
      %v2776 = vpop.f32.mrf.mxu0
      %v2777 = vadd.f32 %v2551, %v2776
      %2778 = vmatmul.bf16.gmra.mxu0 %v2650
      %v2779 = vpop.f32.mrf.mxu0
      %v2780 = vadd.f32 %v2554, %v2779
      %v2781 = vpop.f32.mrf.mxu0
      %v2782 = vadd.f32 %v2556, %v2781
      %2783 = vmatmul.bf16.gmra.mxu0 %v2651
      %v2784 = vpop.f32.mrf.mxu0
      %v2785 = vadd.f32 %v2559, %v2784
      %v2786 = vpop.f32.mrf.mxu0
      %v2787 = vadd.f32 %v2561, %v2786
      %2788 = vdwg.mxu0
      %2789 = vmatpush.bf16.msra.mxu0 %v2723
      %2790 = vmatpush.bf16.msra.mxu0 %v2721
      %2791 = vmatpush.bf16.msra.mxu0 %v2719
      %2792 = vmatpush.bf16.msra.mxu0 %v2717
      %2793 = vmatpush.bf16.msra.mxu0 %v2715
      %2794 = vmatpush.bf16.msra.mxu0 %v2713
      %2795 = vmatpush.bf16.msra.mxu0 %v2711
      %2796 = vmatpush.bf16.msra.mxu0 %v2709
      %2797 = vmatmul.bf16.gmra.mxu0 %v2644
      %v2798 = vpop.f32.mrf.mxu0
      %v2799 = vadd.f32 %v2573, %v2798
      %v2800 = vpop.f32.mrf.mxu0
      %v2801 = vadd.f32 %v2575, %v2800
      %2802 = vmatmul.bf16.gmra.mxu0 %v2645
      %v2803 = vpop.f32.mrf.mxu0
      %v2804 = vadd.f32 %v2578, %v2803
      %v2805 = vpop.f32.mrf.mxu0
      %v2806 = vadd.f32 %v2580, %v2805
      %2807 = vmatmul.bf16.gmra.mxu0 %v2646
      %v2808 = vpop.f32.mrf.mxu0
      %v2809 = vadd.f32 %v2583, %v2808
      %v2810 = vpop.f32.mrf.mxu0
      %v2811 = vadd.f32 %v2585, %v2810
      %2812 = vmatmul.bf16.gmra.mxu0 %v2647
      %v2813 = vpop.f32.mrf.mxu0
      %v2814 = vadd.f32 %v2588, %v2813
      %v2815 = vpop.f32.mrf.mxu0
      %v2816 = vadd.f32 %v2590, %v2815
      %2817 = vmatmul.bf16.gmra.mxu0 %v2648
      %v2818 = vpop.f32.mrf.mxu0
      %v2819 = vadd.f32 %v2593, %v2818
      %v2820 = vpop.f32.mrf.mxu0
      %v2821 = vadd.f32 %v2595, %v2820
      %2822 = vmatmul.bf16.gmra.mxu0 %v2649
      %v2823 = vpop.f32.mrf.mxu0
      %v2824 = vadd.f32 %v2598, %v2823
      %v2825 = vpop.f32.mrf.mxu0
      %v2826 = vadd.f32 %v2600, %v2825
      %2827 = vmatmul.bf16.gmra.mxu0 %v2650
      %v2828 = vpop.f32.mrf.mxu0
      %v2829 = vadd.f32 %v2603, %v2828
      %v2830 = vpop.f32.mrf.mxu0
      %v2831 = vadd.f32 %v2605, %v2830
      %2832 = vmatmul.bf16.gmra.mxu0 %v2651
      %v2833 = vpop.f32.mrf.mxu0
      %v2834 = vadd.f32 %v2608, %v2833
      %v2835 = vpop.f32.mrf.mxu0
      %v2836 = vadd.f32 %v2610, %v2835
      %2837 = vdwg.mxu0
      %vm2846 = vcmask 1042432
      %vm2847 = vcmask 1046532
      %vm2848 = vmor %vm2846, %vm2847
      %v2849 = vrot.slane %v2144, 5
      %v2850 = vrot.slane %v2849, 4
      %v2851 = vrot.slane %v2145, 5
      %v2852 = vsel %vm2848, %v2850, %v2851
      %v2853 = vrot.slane %v2851, 4
      %v2854 = vrot.slane %v2146, 5
      %v2855 = vsel %vm2848, %v2853, %v2854
      %v2856 = vrot.slane %v2147, 5
      %v2857 = vrot.slane %v2856, 4
      %v2858 = vrot.slane %v2148, 5
      %v2859 = vsel %vm2848, %v2857, %v2858
      %v2860 = vrot.slane %v2858, 4
      %v2861 = vrot.slane %v2149, 5
      %v2862 = vsel %vm2848, %v2860, %v2861
      %v2863 = vrot.slane %v2150, 5
      %v2864 = vrot.slane %v2863, 4
      %v2865 = vrot.slane %v2151, 5
      %v2866 = vsel %vm2848, %v2864, %v2865
      %v2867 = vrot.slane %v2865, 4
      %v2868 = vrot.slane %v2152, 5
      %v2869 = vsel %vm2848, %v2867, %v2868
      %v2870 = vrot.slane %v2153, 5
      %v2871 = vrot.slane %v2870, 4
      %v2872 = vrot.slane %v2154, 5
      %v2873 = vsel %vm2848, %v2871, %v2872
      %v2874 = vrot.slane %v2872, 4
      %v2875 = vrot.slane %v2155, 5
      %v2876 = vsel %vm2848, %v2874, %v2875
      %v2877 = vrot.slane %v2156, 5
      %v2878 = vrot.slane %v2877, 4
      %v2879 = vrot.slane %v2157, 5
      %v2880 = vsel %vm2848, %v2878, %v2879
      %v2881 = vrot.slane %v2879, 4
      %v2882 = vrot.slane %v2158, 5
      %v2883 = vsel %vm2848, %v2881, %v2882
      %v2884 = vrot.slane %v2159, 5
      %v2885 = vrot.slane %v2884, 4
      %v2886 = vrot.slane %v2160, 5
      %v2887 = vsel %vm2848, %v2885, %v2886
      %v2888 = vrot.slane %v2886, 4
      %v2889 = vrot.slane %v2161, 5
      %v2890 = vsel %vm2848, %v2888, %v2889
      %v2891 = vrot.slane %v2162, 5
      %v2892 = vrot.slane %v2891, 4
      %v2893 = vrot.slane %v2163, 5
      %v2894 = vsel %vm2848, %v2892, %v2893
      %v2895 = vrot.slane %v2893, 4
      %v2896 = vrot.slane %v2164, 5
      %v2897 = vsel %vm2848, %v2895, %v2896
      %v2898 = vrot.slane %v2165, 5
      %v2899 = vrot.slane %v2898, 4
      %v2900 = vrot.slane %v2166, 5
      %v2901 = vsel %vm2848, %v2899, %v2900
      %v2902 = vrot.slane %v2900, 4
      %v2903 = vrot.slane %v2167, 5
      %v2904 = vsel %vm2848, %v2902, %v2903
      %s2905 = scalar_lea.vmem %s4, 256
      %v2906 = vld [vmem:[%s2905] sm:$0xff]
      %v2907 = vld [vmem:[%s2905 + $0x8] sm:$0xff]
      %v2908 = vld [vmem:[%s2905 + $0x10] sm:$0xff]
      %v2909 = vld [vmem:[%s2905 + $0x18] sm:$0xff]
      %v2910 = vld [vmem:[%s2905 + $0x20] sm:$0xff]
      %v2911 = vld [vmem:[%s2905 + $0x28] sm:$0xff]
      %v2912 = vld [vmem:[%s2905 + $0x30] sm:$0xff]
      %v2913 = vld [vmem:[%s2905 + $0x38] sm:$0xff]
      %v2914 = vld [vmem:[%s2905 + $0x40] sm:$0xff]
      %v2915 = vld [vmem:[%s2905 + $0x48] sm:$0xff]
      %v2916 = vld [vmem:[%s2905 + $0x50] sm:$0xff]
      %v2917 = vld [vmem:[%s2905 + $0x58] sm:$0xff]
      %v2918 = vld [vmem:[%s2905 + $0x60] sm:$0xff]
      %v2919 = vld [vmem:[%s2905 + $0x68] sm:$0xff]
      %v2920 = vld [vmem:[%s2905 + $0x70] sm:$0xff]
      %v2921 = vld [vmem:[%s2905 + $0x78] sm:$0xff]
      %v2922 = vunpack.c.l.b16 %v2852
      %v2923 = vunpack.c.l.b16 %v2855
      %v2924 = vunpack.c.l.b16 %v2859
      %v2925 = vunpack.c.l.b16 %v2862
      %v2926 = vunpack.c.l.b16 %v2866
      %v2927 = vunpack.c.l.b16 %v2869
      %v2928 = vunpack.c.l.b16 %v2873
      %v2929 = vunpack.c.l.b16 %v2876
      %v2930 = vunpack.c.l.b16 %v2880
      %v2931 = vunpack.c.l.b16 %v2883
      %v2932 = vunpack.c.l.b16 %v2887
      %v2933 = vunpack.c.l.b16 %v2890
      %v2934 = vunpack.c.l.b16 %v2894
      %v2935 = vunpack.c.l.b16 %v2897
      %v2936 = vunpack.c.l.b16 %v2901
      %v2937 = vunpack.c.l.b16 %v2904
      %v2938 = vpack.c.b16 %v2923, %v2922
      %v2939 = vpack.c.b16 %v2925, %v2924
      %v2940 = vpack.c.b16 %v2927, %v2926
      %v2941 = vpack.c.b16 %v2929, %v2928
      %v2942 = vpack.c.b16 %v2931, %v2930
      %v2943 = vpack.c.b16 %v2933, %v2932
      %v2944 = vpack.c.b16 %v2935, %v2934
      %v2945 = vpack.c.b16 %v2937, %v2936
      %v2970 = vunpack.c.l.b16 %v2906
      %v2971 = vunpack.c.h.b16 %v2906
      %v2972 = vunpack.c.l.b16 %v2907
      %v2973 = vunpack.c.h.b16 %v2907
      %v2974 = vunpack.c.l.b16 %v2908
      %v2975 = vunpack.c.h.b16 %v2908
      %v2976 = vunpack.c.l.b16 %v2909
      %v2977 = vunpack.c.h.b16 %v2909
      %v2978 = vunpack.c.l.b16 %v2910
      %v2979 = vunpack.c.h.b16 %v2910
      %v2980 = vunpack.c.l.b16 %v2911
      %v2981 = vunpack.c.h.b16 %v2911
      %v2982 = vunpack.c.l.b16 %v2912
      %v2983 = vunpack.c.h.b16 %v2912
      %v2984 = vunpack.c.l.b16 %v2913
      %v2985 = vunpack.c.h.b16 %v2913
      %v2986 = vunpack.c.l.b16 %v2914
      %v2987 = vunpack.c.h.b16 %v2914
      %v2988 = vunpack.c.l.b16 %v2915
      %v2989 = vunpack.c.h.b16 %v2915
      %v2990 = vunpack.c.l.b16 %v2916
      %v2991 = vunpack.c.h.b16 %v2916
      %v2992 = vunpack.c.l.b16 %v2917
      %v2993 = vunpack.c.h.b16 %v2917
      %v2994 = vunpack.c.l.b16 %v2918
      %v2995 = vunpack.c.h.b16 %v2918
      %v2996 = vunpack.c.l.b16 %v2919
      %v2997 = vunpack.c.h.b16 %v2919
      %v2998 = vunpack.c.l.b16 %v2920
      %v2999 = vunpack.c.h.b16 %v2920
      %v3000 = vunpack.c.l.b16 %v2921
      %v3001 = vunpack.c.h.b16 %v2921
      %v3002 = vpack.c.b16 %v2972, %v2970
      %v3003 = vpack.c.b16 %v2973, %v2971
      %v3004 = vpack.c.b16 %v2976, %v2974
      %v3005 = vpack.c.b16 %v2977, %v2975
      %v3006 = vpack.c.b16 %v2980, %v2978
      %v3007 = vpack.c.b16 %v2981, %v2979
      %v3008 = vpack.c.b16 %v2984, %v2982
      %v3009 = vpack.c.b16 %v2985, %v2983
      %v3010 = vpack.c.b16 %v2988, %v2986
      %v3011 = vpack.c.b16 %v2989, %v2987
      %v3012 = vpack.c.b16 %v2992, %v2990
      %v3013 = vpack.c.b16 %v2993, %v2991
      %v3014 = vpack.c.b16 %v2996, %v2994
      %v3015 = vpack.c.b16 %v2997, %v2995
      %v3016 = vpack.c.b16 %v3000, %v2998
      %v3017 = vpack.c.b16 %v3001, %v2999
      %3034 = vmatpush.bf16.msra.mxu0 %v3016
      %3035 = vmatpush.bf16.msra.mxu0 %v3014
      %3036 = vmatpush.bf16.msra.mxu0 %v3012
      %3037 = vmatpush.bf16.msra.mxu0 %v3010
      %3038 = vmatpush.bf16.msra.mxu0 %v3008
      %3039 = vmatpush.bf16.msra.mxu0 %v3006
      %3040 = vmatpush.bf16.msra.mxu0 %v3004
      %3041 = vmatpush.bf16.msra.mxu0 %v3002
      %3042 = vmatmul.bf16.gmra.mxu0 %v2938
      %v3043 = vpop.f32.mrf.mxu0
      %v3044 = vadd.f32 0.0, %v3043
      %v3045 = vpop.f32.mrf.mxu0
      %v3046 = vadd.f32 0.0, %v3045
      %3047 = vmatmul.bf16.gmra.mxu0 %v2939
      %v3048 = vpop.f32.mrf.mxu0
      %v3049 = vadd.f32 0.0, %v3048
      %v3050 = vpop.f32.mrf.mxu0
      %v3051 = vadd.f32 0.0, %v3050
      %3052 = vmatmul.bf16.gmra.mxu0 %v2940
      %v3053 = vpop.f32.mrf.mxu0
      %v3054 = vadd.f32 0.0, %v3053
      %v3055 = vpop.f32.mrf.mxu0
      %v3056 = vadd.f32 0.0, %v3055
      %3057 = vmatmul.bf16.gmra.mxu0 %v2941
      %v3058 = vpop.f32.mrf.mxu0
      %v3059 = vadd.f32 0.0, %v3058
      %v3060 = vpop.f32.mrf.mxu0
      %v3061 = vadd.f32 0.0, %v3060
      %3062 = vmatmul.bf16.gmra.mxu0 %v2942
      %v3063 = vpop.f32.mrf.mxu0
      %v3064 = vadd.f32 0.0, %v3063
      %v3065 = vpop.f32.mrf.mxu0
      %v3066 = vadd.f32 0.0, %v3065
      %3067 = vmatmul.bf16.gmra.mxu0 %v2943
      %v3068 = vpop.f32.mrf.mxu0
      %v3069 = vadd.f32 0.0, %v3068
      %v3070 = vpop.f32.mrf.mxu0
      %v3071 = vadd.f32 0.0, %v3070
      %3072 = vmatmul.bf16.gmra.mxu0 %v2944
      %v3073 = vpop.f32.mrf.mxu0
      %v3074 = vadd.f32 0.0, %v3073
      %v3075 = vpop.f32.mrf.mxu0
      %v3076 = vadd.f32 0.0, %v3075
      %3077 = vmatmul.bf16.gmra.mxu0 %v2945
      %v3078 = vpop.f32.mrf.mxu0
      %v3079 = vadd.f32 0.0, %v3078
      %v3080 = vpop.f32.mrf.mxu0
      %v3081 = vadd.f32 0.0, %v3080
      %3082 = vdwg.mxu0
      %3083 = vmatpush.bf16.msra.mxu0 %v3017
      %3084 = vmatpush.bf16.msra.mxu0 %v3015
      %3085 = vmatpush.bf16.msra.mxu0 %v3013
      %3086 = vmatpush.bf16.msra.mxu0 %v3011
      %3087 = vmatpush.bf16.msra.mxu0 %v3009
      %3088 = vmatpush.bf16.msra.mxu0 %v3007
      %3089 = vmatpush.bf16.msra.mxu0 %v3005
      %3090 = vmatpush.bf16.msra.mxu0 %v3003
      %3091 = vmatmul.bf16.gmra.mxu0 %v2938
      %v3092 = vpop.f32.mrf.mxu0
      %v3093 = vadd.f32 0.0, %v3092
      %v3094 = vpop.f32.mrf.mxu0
      %v3095 = vadd.f32 0.0, %v3094
      %3096 = vmatmul.bf16.gmra.mxu0 %v2939
      %v3097 = vpop.f32.mrf.mxu0
      %v3098 = vadd.f32 0.0, %v3097
      %v3099 = vpop.f32.mrf.mxu0
      %v3100 = vadd.f32 0.0, %v3099
      %3101 = vmatmul.bf16.gmra.mxu0 %v2940
      %v3102 = vpop.f32.mrf.mxu0
      %v3103 = vadd.f32 0.0, %v3102
      %v3104 = vpop.f32.mrf.mxu0
      %v3105 = vadd.f32 0.0, %v3104
      %3106 = vmatmul.bf16.gmra.mxu0 %v2941
      %v3107 = vpop.f32.mrf.mxu0
      %v3108 = vadd.f32 0.0, %v3107
      %v3109 = vpop.f32.mrf.mxu0
      %v3110 = vadd.f32 0.0, %v3109
      %3111 = vmatmul.bf16.gmra.mxu0 %v2942
      %v3112 = vpop.f32.mrf.mxu0
      %v3113 = vadd.f32 0.0, %v3112
      %v3114 = vpop.f32.mrf.mxu0
      %v3115 = vadd.f32 0.0, %v3114
      %3116 = vmatmul.bf16.gmra.mxu0 %v2943
      %v3117 = vpop.f32.mrf.mxu0
      %v3118 = vadd.f32 0.0, %v3117
      %v3119 = vpop.f32.mrf.mxu0
      %v3120 = vadd.f32 0.0, %v3119
      %3121 = vmatmul.bf16.gmra.mxu0 %v2944
      %v3122 = vpop.f32.mrf.mxu0
      %v3123 = vadd.f32 0.0, %v3122
      %v3124 = vpop.f32.mrf.mxu0
      %v3125 = vadd.f32 0.0, %v3124
      %3126 = vmatmul.bf16.gmra.mxu0 %v2945
      %v3127 = vpop.f32.mrf.mxu0
      %v3128 = vadd.f32 0.0, %v3127
      %v3129 = vpop.f32.mrf.mxu0
      %v3130 = vadd.f32 0.0, %v3129
      %3131 = vdwg.mxu0
      %v3132 = vadd.f32 %v2750, %v3044
      %v3133 = vadd.f32 %v2799, %v3093
      %v3134 = vadd.f32 %v2752, %v3046
      %v3135 = vadd.f32 %v2801, %v3095
      %v3136 = vadd.f32 %v2755, %v3049
      %v3137 = vadd.f32 %v2804, %v3098
      %v3138 = vadd.f32 %v2757, %v3051
      %v3139 = vadd.f32 %v2806, %v3100
      %v3140 = vadd.f32 %v2760, %v3054
      %v3141 = vadd.f32 %v2809, %v3103
      %v3142 = vadd.f32 %v2762, %v3056
      %v3143 = vadd.f32 %v2811, %v3105
      %v3144 = vadd.f32 %v2765, %v3059
      %v3145 = vadd.f32 %v2814, %v3108
      %v3146 = vadd.f32 %v2767, %v3061
      %v3147 = vadd.f32 %v2816, %v3110
      %v3148 = vadd.f32 %v2770, %v3064
      %v3149 = vadd.f32 %v2819, %v3113
      %v3150 = vadd.f32 %v2772, %v3066
      %v3151 = vadd.f32 %v2821, %v3115
      %v3152 = vadd.f32 %v2775, %v3069
      %v3153 = vadd.f32 %v2824, %v3118
      %v3154 = vadd.f32 %v2777, %v3071
      %v3155 = vadd.f32 %v2826, %v3120
      %v3156 = vadd.f32 %v2780, %v3074
      %v3157 = vadd.f32 %v2829, %v3123
      %v3158 = vadd.f32 %v2782, %v3076
      %v3159 = vadd.f32 %v2831, %v3125
      %v3160 = vadd.f32 %v2785, %v3079
      %v3161 = vadd.f32 %v2834, %v3128
      %v3162 = vadd.f32 %v2787, %v3081
      %v3163 = vadd.f32 %v2836, %v3130
      %s3164 = scalar_lea.vmem %s4, 384
      %v3165 = vld [vmem:[%s3164] sm:$0xff]
      %v3166 = vld [vmem:[%s3164 + $0x8] sm:$0xff]
      %v3167 = vld [vmem:[%s3164 + $0x10] sm:$0xff]
      %v3168 = vld [vmem:[%s3164 + $0x18] sm:$0xff]
      %v3169 = vld [vmem:[%s3164 + $0x20] sm:$0xff]
      %v3170 = vld [vmem:[%s3164 + $0x28] sm:$0xff]
      %v3171 = vld [vmem:[%s3164 + $0x30] sm:$0xff]
      %v3172 = vld [vmem:[%s3164 + $0x38] sm:$0xff]
      %v3173 = vld [vmem:[%s3164 + $0x40] sm:$0xff]
      %v3174 = vld [vmem:[%s3164 + $0x48] sm:$0xff]
      %v3175 = vld [vmem:[%s3164 + $0x50] sm:$0xff]
      %v3176 = vld [vmem:[%s3164 + $0x58] sm:$0xff]
      %v3177 = vld [vmem:[%s3164 + $0x60] sm:$0xff]
      %v3178 = vld [vmem:[%s3164 + $0x68] sm:$0xff]
      %v3179 = vld [vmem:[%s3164 + $0x70] sm:$0xff]
      %v3180 = vld [vmem:[%s3164 + $0x78] sm:$0xff]
      %v3183 = vunpack.c.l.b16 %v2168
      %v3184 = vunpack.c.l.b16 %v2169
      %v3185 = vpack.c.b16 %v3184, %v3183
      %v3203 = vunpack.c.l.b16 %v3165
      %v3204 = vunpack.c.h.b16 %v3165
      %v3205 = vunpack.c.l.b16 %v3166
      %v3206 = vunpack.c.h.b16 %v3166
      %v3207 = vunpack.c.l.b16 %v3167
      %v3208 = vunpack.c.h.b16 %v3167
      %v3209 = vunpack.c.l.b16 %v3168
      %v3210 = vunpack.c.h.b16 %v3168
      %v3211 = vunpack.c.l.b16 %v3169
      %v3212 = vunpack.c.h.b16 %v3169
      %v3213 = vunpack.c.l.b16 %v3170
      %v3214 = vunpack.c.h.b16 %v3170
      %v3215 = vunpack.c.l.b16 %v3171
      %v3216 = vunpack.c.h.b16 %v3171
      %v3217 = vunpack.c.l.b16 %v3172
      %v3218 = vunpack.c.h.b16 %v3172
      %v3219 = vunpack.c.l.b16 %v3173
      %v3220 = vunpack.c.h.b16 %v3173
      %v3221 = vunpack.c.l.b16 %v3174
      %v3222 = vunpack.c.h.b16 %v3174
      %v3223 = vunpack.c.l.b16 %v3175
      %v3224 = vunpack.c.h.b16 %v3175
      %v3225 = vunpack.c.l.b16 %v3176
      %v3226 = vunpack.c.h.b16 %v3176
      %v3227 = vunpack.c.l.b16 %v3177
      %v3228 = vunpack.c.h.b16 %v3177
      %v3229 = vunpack.c.l.b16 %v3178
      %v3230 = vunpack.c.h.b16 %v3178
      %v3231 = vunpack.c.l.b16 %v3179
      %v3232 = vunpack.c.h.b16 %v3179
      %v3233 = vunpack.c.l.b16 %v3180
      %v3234 = vunpack.c.h.b16 %v3180
      %v3235 = vpack.c.b16 %v3205, %v3203
      %v3236 = vpack.c.b16 %v3206, %v3204
      %v3237 = vpack.c.b16 %v3209, %v3207
      %v3238 = vpack.c.b16 %v3210, %v3208
      %v3239 = vpack.c.b16 %v3213, %v3211
      %v3240 = vpack.c.b16 %v3214, %v3212
      %v3241 = vpack.c.b16 %v3217, %v3215
      %v3242 = vpack.c.b16 %v3218, %v3216
      %v3243 = vpack.c.b16 %v3221, %v3219
      %v3244 = vpack.c.b16 %v3222, %v3220
      %v3245 = vpack.c.b16 %v3225, %v3223
      %v3246 = vpack.c.b16 %v3226, %v3224
      %v3247 = vpack.c.b16 %v3229, %v3227
      %v3248 = vpack.c.b16 %v3230, %v3228
      %v3249 = vpack.c.b16 %v3233, %v3231
      %v3250 = vpack.c.b16 %v3234, %v3232
      %3267 = vmatpush.bf16.msra.mxu0 %v3249
      %3268 = vmatpush.bf16.msra.mxu0 %v3247
      %3269 = vmatpush.bf16.msra.mxu0 %v3245
      %3270 = vmatpush.bf16.msra.mxu0 %v3243
      %3271 = vmatpush.bf16.msra.mxu0 %v3241
      %3272 = vmatpush.bf16.msra.mxu0 %v3239
      %3273 = vmatpush.bf16.msra.mxu0 %v3237
      %3274 = vmatpush.bf16.msra.mxu0 %v3235
      %3275 = vmatmul.bf16.gmra.mxu0 %v2645
      %v3276 = vpop.f32.mrf.mxu0
      %v3277 = vadd.f32 0.0, %v3276
      %v3278 = vpop.f32.mrf.mxu0
      %v3279 = vadd.f32 0.0, %v3278
      %3280 = vmatmul.bf16.gmra.mxu0 %v2646
      %v3281 = vpop.f32.mrf.mxu0
      %v3282 = vadd.f32 0.0, %v3281
      %v3283 = vpop.f32.mrf.mxu0
      %v3284 = vadd.f32 0.0, %v3283
      %3285 = vmatmul.bf16.gmra.mxu0 %v2647
      %v3286 = vpop.f32.mrf.mxu0
      %v3287 = vadd.f32 0.0, %v3286
      %v3288 = vpop.f32.mrf.mxu0
      %v3289 = vadd.f32 0.0, %v3288
      %3290 = vmatmul.bf16.gmra.mxu0 %v2648
      %v3291 = vpop.f32.mrf.mxu0
      %v3292 = vadd.f32 0.0, %v3291
      %v3293 = vpop.f32.mrf.mxu0
      %v3294 = vadd.f32 0.0, %v3293
      %3295 = vmatmul.bf16.gmra.mxu0 %v2649
      %v3296 = vpop.f32.mrf.mxu0
      %v3297 = vadd.f32 0.0, %v3296
      %v3298 = vpop.f32.mrf.mxu0
      %v3299 = vadd.f32 0.0, %v3298
      %3300 = vmatmul.bf16.gmra.mxu0 %v2650
      %v3301 = vpop.f32.mrf.mxu0
      %v3302 = vadd.f32 0.0, %v3301
      %v3303 = vpop.f32.mrf.mxu0
      %v3304 = vadd.f32 0.0, %v3303
      %3305 = vmatmul.bf16.gmra.mxu0 %v2651
      %v3306 = vpop.f32.mrf.mxu0
      %v3307 = vadd.f32 0.0, %v3306
      %v3308 = vpop.f32.mrf.mxu0
      %v3309 = vadd.f32 0.0, %v3308
      %3310 = vmatmul.bf16.gmra.mxu0 %v3185
      %v3311 = vpop.f32.mrf.mxu0
      %v3312 = vadd.f32 0.0, %v3311
      %v3313 = vpop.f32.mrf.mxu0
      %v3314 = vadd.f32 0.0, %v3313
      %3315 = vdwg.mxu0
      %3316 = vmatpush.bf16.msra.mxu0 %v3250
      %3317 = vmatpush.bf16.msra.mxu0 %v3248
      %3318 = vmatpush.bf16.msra.mxu0 %v3246
      %3319 = vmatpush.bf16.msra.mxu0 %v3244
      %3320 = vmatpush.bf16.msra.mxu0 %v3242
      %3321 = vmatpush.bf16.msra.mxu0 %v3240
      %3322 = vmatpush.bf16.msra.mxu0 %v3238
      %3323 = vmatpush.bf16.msra.mxu0 %v3236
      %3324 = vmatmul.bf16.gmra.mxu0 %v2645
      %v3325 = vpop.f32.mrf.mxu0
      %v3326 = vadd.f32 0.0, %v3325
      %v3327 = vpop.f32.mrf.mxu0
      %v3328 = vadd.f32 0.0, %v3327
      %3329 = vmatmul.bf16.gmra.mxu0 %v2646
      %v3330 = vpop.f32.mrf.mxu0
      %v3331 = vadd.f32 0.0, %v3330
      %v3332 = vpop.f32.mrf.mxu0
      %v3333 = vadd.f32 0.0, %v3332
      %3334 = vmatmul.bf16.gmra.mxu0 %v2647
      %v3335 = vpop.f32.mrf.mxu0
      %v3336 = vadd.f32 0.0, %v3335
      %v3337 = vpop.f32.mrf.mxu0
      %v3338 = vadd.f32 0.0, %v3337
      %3339 = vmatmul.bf16.gmra.mxu0 %v2648
      %v3340 = vpop.f32.mrf.mxu0
      %v3341 = vadd.f32 0.0, %v3340
      %v3342 = vpop.f32.mrf.mxu0
      %v3343 = vadd.f32 0.0, %v3342
      %3344 = vmatmul.bf16.gmra.mxu0 %v2649
      %v3345 = vpop.f32.mrf.mxu0
      %v3346 = vadd.f32 0.0, %v3345
      %v3347 = vpop.f32.mrf.mxu0
      %v3348 = vadd.f32 0.0, %v3347
      %3349 = vmatmul.bf16.gmra.mxu0 %v2650
      %v3350 = vpop.f32.mrf.mxu0
      %v3351 = vadd.f32 0.0, %v3350
      %v3352 = vpop.f32.mrf.mxu0
      %v3353 = vadd.f32 0.0, %v3352
      %3354 = vmatmul.bf16.gmra.mxu0 %v2651
      %v3355 = vpop.f32.mrf.mxu0
      %v3356 = vadd.f32 0.0, %v3355
      %v3357 = vpop.f32.mrf.mxu0
      %v3358 = vadd.f32 0.0, %v3357
      %3359 = vmatmul.bf16.gmra.mxu0 %v3185
      %v3360 = vpop.f32.mrf.mxu0
      %v3361 = vadd.f32 0.0, %v3360
      %v3362 = vpop.f32.mrf.mxu0
      %v3363 = vadd.f32 0.0, %v3362
      %3364 = vdwg.mxu0
      %v3365 = vadd.f32 %v3132, %v3277
      %v3366 = vadd.f32 %v3133, %v3326
      %v3367 = vadd.f32 %v3134, %v3279
      %v3368 = vadd.f32 %v3135, %v3328
      %v3369 = vadd.f32 %v3136, %v3282
      %v3370 = vadd.f32 %v3137, %v3331
      %v3371 = vadd.f32 %v3138, %v3284
      %v3372 = vadd.f32 %v3139, %v3333
      %v3373 = vadd.f32 %v3140, %v3287
      %v3374 = vadd.f32 %v3141, %v3336
      %v3375 = vadd.f32 %v3142, %v3289
      %v3376 = vadd.f32 %v3143, %v3338
      %v3377 = vadd.f32 %v3144, %v3292
      %v3378 = vadd.f32 %v3145, %v3341
      %v3379 = vadd.f32 %v3146, %v3294
      %v3380 = vadd.f32 %v3147, %v3343
      %v3381 = vadd.f32 %v3148, %v3297
      %v3382 = vadd.f32 %v3149, %v3346
      %v3383 = vadd.f32 %v3150, %v3299
      %v3384 = vadd.f32 %v3151, %v3348
      %v3385 = vadd.f32 %v3152, %v3302
      %v3386 = vadd.f32 %v3153, %v3351
      %v3387 = vadd.f32 %v3154, %v3304
      %v3388 = vadd.f32 %v3155, %v3353
      %v3389 = vadd.f32 %v3156, %v3307
      %v3390 = vadd.f32 %v3157, %v3356
      %v3391 = vadd.f32 %v3158, %v3309
      %v3392 = vadd.f32 %v3159, %v3358
      %v3393 = vadd.f32 %v3160, %v3312
      %v3394 = vadd.f32 %v3161, %v3361
      %v3395 = vadd.f32 %v3162, %v3314
      %v3396 = vadd.f32 %v3163, %v3363
      %v3398 = vshrl.u32 %v2168, 16
      %v3400 = vrot.slane %v3398, 4
      %v3401 = vshll.u32 %v2168, 16
      %v3403 = vrot.slane %v3401, 5
      %v3404 = vor.u32 %v3400, %v3403
      %v3405 = vrot.slane %v3404, 4
      %v3407 = vshll.u32 %v2169, 16
      %v3409 = vrot.slane %v3407, 5
      %v3410 = vsel %vm2192, %v3405, %v3409
      %v3411 = vshrl.u32 %v2169, 16
      %v3413 = vrot.slane %v3411, 4
      %v3414 = vor.u32 %v3413, %v3409
      %v3415 = vrot.slane %v3414, 4
      %v3417 = vshll.u32 %v2170, 16
      %v3419 = vrot.slane %v3417, 5
      %v3420 = vsel %vm2192, %v3415, %v3419
      %s3421 = scalar_lea.vmem %s4, 512
      %v3422 = vld [vmem:[%s3421] sm:$0xff]
      %v3423 = vld [vmem:[%s3421 + $0x8] sm:$0xff]
      %v3424 = vld [vmem:[%s3421 + $0x10] sm:$0xff]
      %v3425 = vld [vmem:[%s3421 + $0x18] sm:$0xff]
      %v3426 = vld [vmem:[%s3421 + $0x20] sm:$0xff]
      %v3427 = vld [vmem:[%s3421 + $0x28] sm:$0xff]
      %v3428 = vld [vmem:[%s3421 + $0x30] sm:$0xff]
      %v3429 = vld [vmem:[%s3421 + $0x38] sm:$0xff]
      %v3430 = vld [vmem:[%s3421 + $0x40] sm:$0xff]
      %v3431 = vld [vmem:[%s3421 + $0x48] sm:$0xff]
      %v3432 = vld [vmem:[%s3421 + $0x50] sm:$0xff]
      %v3433 = vld [vmem:[%s3421 + $0x58] sm:$0xff]
      %v3434 = vld [vmem:[%s3421 + $0x60] sm:$0xff]
      %v3435 = vld [vmem:[%s3421 + $0x68] sm:$0xff]
      %v3436 = vld [vmem:[%s3421 + $0x70] sm:$0xff]
      %v3437 = vld [vmem:[%s3421 + $0x78] sm:$0xff]
      %v3438 = vunpack.c.l.b16 %v3410
      %v3439 = vunpack.c.l.b16 %v3420
      %v3440 = vpack.c.b16 %v3439, %v3438
      %v3458 = vunpack.c.l.b16 %v3422
      %v3459 = vunpack.c.h.b16 %v3422
      %v3460 = vunpack.c.l.b16 %v3423
      %v3461 = vunpack.c.h.b16 %v3423
      %v3462 = vunpack.c.l.b16 %v3424
      %v3463 = vunpack.c.h.b16 %v3424
      %v3464 = vunpack.c.l.b16 %v3425
      %v3465 = vunpack.c.h.b16 %v3425
      %v3466 = vunpack.c.l.b16 %v3426
      %v3467 = vunpack.c.h.b16 %v3426
      %v3468 = vunpack.c.l.b16 %v3427
      %v3469 = vunpack.c.h.b16 %v3427
      %v3470 = vunpack.c.l.b16 %v3428
      %v3471 = vunpack.c.h.b16 %v3428
      %v3472 = vunpack.c.l.b16 %v3429
      %v3473 = vunpack.c.h.b16 %v3429
      %v3474 = vunpack.c.l.b16 %v3430
      %v3475 = vunpack.c.h.b16 %v3430
      %v3476 = vunpack.c.l.b16 %v3431
      %v3477 = vunpack.c.h.b16 %v3431
      %v3478 = vunpack.c.l.b16 %v3432
      %v3479 = vunpack.c.h.b16 %v3432
      %v3480 = vunpack.c.l.b16 %v3433
      %v3481 = vunpack.c.h.b16 %v3433
      %v3482 = vunpack.c.l.b16 %v3434
      %v3483 = vunpack.c.h.b16 %v3434
      %v3484 = vunpack.c.l.b16 %v3435
      %v3485 = vunpack.c.h.b16 %v3435
      %v3486 = vunpack.c.l.b16 %v3436
      %v3487 = vunpack.c.h.b16 %v3436
      %v3488 = vunpack.c.l.b16 %v3437
      %v3489 = vunpack.c.h.b16 %v3437
      %v3490 = vpack.c.b16 %v3460, %v3458
      %v3491 = vpack.c.b16 %v3461, %v3459
      %v3492 = vpack.c.b16 %v3464, %v3462
      %v3493 = vpack.c.b16 %v3465, %v3463
      %v3494 = vpack.c.b16 %v3468, %v3466
      %v3495 = vpack.c.b16 %v3469, %v3467
      %v3496 = vpack.c.b16 %v3472, %v3470
      %v3497 = vpack.c.b16 %v3473, %v3471
      %v3498 = vpack.c.b16 %v3476, %v3474
      %v3499 = vpack.c.b16 %v3477, %v3475
      %v3500 = vpack.c.b16 %v3480, %v3478
      %v3501 = vpack.c.b16 %v3481, %v3479
      %v3502 = vpack.c.b16 %v3484, %v3482
      %v3503 = vpack.c.b16 %v3485, %v3483
      %v3504 = vpack.c.b16 %v3488, %v3486
      %v3505 = vpack.c.b16 %v3489, %v3487
      %3522 = vmatpush.bf16.msra.mxu0 %v3504
      %3523 = vmatpush.bf16.msra.mxu0 %v3502
      %3524 = vmatpush.bf16.msra.mxu0 %v3500
      %3525 = vmatpush.bf16.msra.mxu0 %v3498
      %3526 = vmatpush.bf16.msra.mxu0 %v3496
      %3527 = vmatpush.bf16.msra.mxu0 %v3494
      %3528 = vmatpush.bf16.msra.mxu0 %v3492
      %3529 = vmatpush.bf16.msra.mxu0 %v3490
      %3530 = vmatmul.bf16.gmra.mxu0 %v2419
      %v3531 = vpop.f32.mrf.mxu0
      %v3532 = vadd.f32 0.0, %v3531
      %v3533 = vpop.f32.mrf.mxu0
      %v3534 = vadd.f32 0.0, %v3533
      %3535 = vmatmul.bf16.gmra.mxu0 %v2420
      %v3536 = vpop.f32.mrf.mxu0
      %v3537 = vadd.f32 0.0, %v3536
      %v3538 = vpop.f32.mrf.mxu0
      %v3539 = vadd.f32 0.0, %v3538
      %3540 = vmatmul.bf16.gmra.mxu0 %v2421
      %v3541 = vpop.f32.mrf.mxu0
      %v3542 = vadd.f32 0.0, %v3541
      %v3543 = vpop.f32.mrf.mxu0
      %v3544 = vadd.f32 0.0, %v3543
      %3545 = vmatmul.bf16.gmra.mxu0 %v2422
      %v3546 = vpop.f32.mrf.mxu0
      %v3547 = vadd.f32 0.0, %v3546
      %v3548 = vpop.f32.mrf.mxu0
      %v3549 = vadd.f32 0.0, %v3548
      %3550 = vmatmul.bf16.gmra.mxu0 %v2423
      %v3551 = vpop.f32.mrf.mxu0
      %v3552 = vadd.f32 0.0, %v3551
      %v3553 = vpop.f32.mrf.mxu0
      %v3554 = vadd.f32 0.0, %v3553
      %3555 = vmatmul.bf16.gmra.mxu0 %v2424
      %v3556 = vpop.f32.mrf.mxu0
      %v3557 = vadd.f32 0.0, %v3556
      %v3558 = vpop.f32.mrf.mxu0
      %v3559 = vadd.f32 0.0, %v3558
      %3560 = vmatmul.bf16.gmra.mxu0 %v2425
      %v3561 = vpop.f32.mrf.mxu0
      %v3562 = vadd.f32 0.0, %v3561
      %v3563 = vpop.f32.mrf.mxu0
      %v3564 = vadd.f32 0.0, %v3563
      %3565 = vmatmul.bf16.gmra.mxu0 %v3440
      %v3566 = vpop.f32.mrf.mxu0
      %v3567 = vadd.f32 0.0, %v3566
      %v3568 = vpop.f32.mrf.mxu0
      %v3569 = vadd.f32 0.0, %v3568
      %3570 = vdwg.mxu0
      %3571 = vmatpush.bf16.msra.mxu0 %v3505
      %3572 = vmatpush.bf16.msra.mxu0 %v3503
      %3573 = vmatpush.bf16.msra.mxu0 %v3501
      %3574 = vmatpush.bf16.msra.mxu0 %v3499
      %3575 = vmatpush.bf16.msra.mxu0 %v3497
      %3576 = vmatpush.bf16.msra.mxu0 %v3495
      %3577 = vmatpush.bf16.msra.mxu0 %v3493
      %3578 = vmatpush.bf16.msra.mxu0 %v3491
      %3579 = vmatmul.bf16.gmra.mxu0 %v2419
      %v3580 = vpop.f32.mrf.mxu0
      %v3581 = vadd.f32 0.0, %v3580
      %v3582 = vpop.f32.mrf.mxu0
      %v3583 = vadd.f32 0.0, %v3582
      %3584 = vmatmul.bf16.gmra.mxu0 %v2420
      %v3585 = vpop.f32.mrf.mxu0
      %v3586 = vadd.f32 0.0, %v3585
      %v3587 = vpop.f32.mrf.mxu0
      %v3588 = vadd.f32 0.0, %v3587
      %3589 = vmatmul.bf16.gmra.mxu0 %v2421
      %v3590 = vpop.f32.mrf.mxu0
      %v3591 = vadd.f32 0.0, %v3590
      %v3592 = vpop.f32.mrf.mxu0
      %v3593 = vadd.f32 0.0, %v3592
      %3594 = vmatmul.bf16.gmra.mxu0 %v2422
      %v3595 = vpop.f32.mrf.mxu0
      %v3596 = vadd.f32 0.0, %v3595
      %v3597 = vpop.f32.mrf.mxu0
      %v3598 = vadd.f32 0.0, %v3597
      %3599 = vmatmul.bf16.gmra.mxu0 %v2423
      %v3600 = vpop.f32.mrf.mxu0
      %v3601 = vadd.f32 0.0, %v3600
      %v3602 = vpop.f32.mrf.mxu0
      %v3603 = vadd.f32 0.0, %v3602
      %3604 = vmatmul.bf16.gmra.mxu0 %v2424
      %v3605 = vpop.f32.mrf.mxu0
      %v3606 = vadd.f32 0.0, %v3605
      %v3607 = vpop.f32.mrf.mxu0
      %v3608 = vadd.f32 0.0, %v3607
      %3609 = vmatmul.bf16.gmra.mxu0 %v2425
      %v3610 = vpop.f32.mrf.mxu0
      %v3611 = vadd.f32 0.0, %v3610
      %v3612 = vpop.f32.mrf.mxu0
      %v3613 = vadd.f32 0.0, %v3612
      %3614 = vmatmul.bf16.gmra.mxu0 %v3440
      %v3615 = vpop.f32.mrf.mxu0
      %v3616 = vadd.f32 0.0, %v3615
      %v3617 = vpop.f32.mrf.mxu0
      %v3618 = vadd.f32 0.0, %v3617
      %3619 = vdwg.mxu0
      %v3620 = vadd.f32 %v3365, %v3532
      %v3621 = vadd.f32 %v3366, %v3581
      %v3622 = vadd.f32 %v3367, %v3534
      %v3623 = vadd.f32 %v3368, %v3583
      %v3624 = vadd.f32 %v3369, %v3537
      %v3625 = vadd.f32 %v3370, %v3586
      %v3626 = vadd.f32 %v3371, %v3539
      %v3627 = vadd.f32 %v3372, %v3588
      %v3628 = vadd.f32 %v3373, %v3542
      %v3629 = vadd.f32 %v3374, %v3591
      %v3630 = vadd.f32 %v3375, %v3544
      %v3631 = vadd.f32 %v3376, %v3593
      %v3632 = vadd.f32 %v3377, %v3547
      %v3633 = vadd.f32 %v3378, %v3596
      %v3634 = vadd.f32 %v3379, %v3549
      %v3635 = vadd.f32 %v3380, %v3598
      %v3636 = vadd.f32 %v3381, %v3552
      %v3637 = vadd.f32 %v3382, %v3601
      %v3638 = vadd.f32 %v3383, %v3554
      %v3639 = vadd.f32 %v3384, %v3603
      %v3640 = vadd.f32 %v3385, %v3557
      %v3641 = vadd.f32 %v3386, %v3606
      %v3642 = vadd.f32 %v3387, %v3559
      %v3643 = vadd.f32 %v3388, %v3608
      %v3644 = vadd.f32 %v3389, %v3562
      %v3645 = vadd.f32 %v3390, %v3611
      %v3646 = vadd.f32 %v3391, %v3564
      %v3647 = vadd.f32 %v3392, %v3613
      %v3648 = vadd.f32 %v3393, %v3567
      %v3649 = vadd.f32 %v3394, %v3616
      %v3650 = vadd.f32 %v3395, %v3569
      %v3651 = vadd.f32 %v3396, %v3618
      %v3653 = vrot.slane %v2168, 5
      %v3654 = vrot.slane %v3653, 4
      %v3655 = vrot.slane %v2169, 5
      %v3656 = vsel %vm2848, %v3654, %v3655
      %v3657 = vrot.slane %v3655, 4
      %v3658 = vrot.slane %v2170, 5
      %v3659 = vsel %vm2848, %v3657, %v3658
      %s3660 = scalar_lea.vmem %s4, 640
      %v3661 = vld [vmem:[%s3660] sm:$0xff]
      %v3662 = vld [vmem:[%s3660 + $0x8] sm:$0xff]
      %v3663 = vld [vmem:[%s3660 + $0x10] sm:$0xff]
      %v3664 = vld [vmem:[%s3660 + $0x18] sm:$0xff]
      %v3665 = vld [vmem:[%s3660 + $0x20] sm:$0xff]
      %v3666 = vld [vmem:[%s3660 + $0x28] sm:$0xff]
      %v3667 = vld [vmem:[%s3660 + $0x30] sm:$0xff]
      %v3668 = vld [vmem:[%s3660 + $0x38] sm:$0xff]
      %v3669 = vld [vmem:[%s3660 + $0x40] sm:$0xff]
      %v3670 = vld [vmem:[%s3660 + $0x48] sm:$0xff]
      %v3671 = vld [vmem:[%s3660 + $0x50] sm:$0xff]
      %v3672 = vld [vmem:[%s3660 + $0x58] sm:$0xff]
      %v3673 = vld [vmem:[%s3660 + $0x60] sm:$0xff]
      %v3674 = vld [vmem:[%s3660 + $0x68] sm:$0xff]
      %v3675 = vld [vmem:[%s3660 + $0x70] sm:$0xff]
      %v3676 = vld [vmem:[%s3660 + $0x78] sm:$0xff]
      %v3677 = vunpack.c.l.b16 %v3656
      %v3678 = vunpack.c.l.b16 %v3659
      %v3679 = vpack.c.b16 %v3678, %v3677
      %v3697 = vunpack.c.l.b16 %v3661
      %v3698 = vunpack.c.h.b16 %v3661
      %v3699 = vunpack.c.l.b16 %v3662
      %v3700 = vunpack.c.h.b16 %v3662
      %v3701 = vunpack.c.l.b16 %v3663
      %v3702 = vunpack.c.h.b16 %v3663
      %v3703 = vunpack.c.l.b16 %v3664
      %v3704 = vunpack.c.h.b16 %v3664
      %v3705 = vunpack.c.l.b16 %v3665
      %v3706 = vunpack.c.h.b16 %v3665
      %v3707 = vunpack.c.l.b16 %v3666
      %v3708 = vunpack.c.h.b16 %v3666
      %v3709 = vunpack.c.l.b16 %v3667
      %v3710 = vunpack.c.h.b16 %v3667
      %v3711 = vunpack.c.l.b16 %v3668
      %v3712 = vunpack.c.h.b16 %v3668
      %v3713 = vunpack.c.l.b16 %v3669
      %v3714 = vunpack.c.h.b16 %v3669
      %v3715 = vunpack.c.l.b16 %v3670
      %v3716 = vunpack.c.h.b16 %v3670
      %v3717 = vunpack.c.l.b16 %v3671
      %v3718 = vunpack.c.h.b16 %v3671
      %v3719 = vunpack.c.l.b16 %v3672
      %v3720 = vunpack.c.h.b16 %v3672
      %v3721 = vunpack.c.l.b16 %v3673
      %v3722 = vunpack.c.h.b16 %v3673
      %v3723 = vunpack.c.l.b16 %v3674
      %v3724 = vunpack.c.h.b16 %v3674
      %v3725 = vunpack.c.l.b16 %v3675
      %v3726 = vunpack.c.h.b16 %v3675
      %v3727 = vunpack.c.l.b16 %v3676
      %v3728 = vunpack.c.h.b16 %v3676
      %v3729 = vpack.c.b16 %v3699, %v3697
      %v3730 = vpack.c.b16 %v3700, %v3698
      %v3731 = vpack.c.b16 %v3703, %v3701
      %v3732 = vpack.c.b16 %v3704, %v3702
      %v3733 = vpack.c.b16 %v3707, %v3705
      %v3734 = vpack.c.b16 %v3708, %v3706
      %v3735 = vpack.c.b16 %v3711, %v3709
      %v3736 = vpack.c.b16 %v3712, %v3710
      %v3737 = vpack.c.b16 %v3715, %v3713
      %v3738 = vpack.c.b16 %v3716, %v3714
      %v3739 = vpack.c.b16 %v3719, %v3717
      %v3740 = vpack.c.b16 %v3720, %v3718
      %v3741 = vpack.c.b16 %v3723, %v3721
      %v3742 = vpack.c.b16 %v3724, %v3722
      %v3743 = vpack.c.b16 %v3727, %v3725
      %v3744 = vpack.c.b16 %v3728, %v3726
      %3761 = vmatpush.bf16.msra.mxu0 %v3743
      %3762 = vmatpush.bf16.msra.mxu0 %v3741
      %3763 = vmatpush.bf16.msra.mxu0 %v3739
      %3764 = vmatpush.bf16.msra.mxu0 %v3737
      %3765 = vmatpush.bf16.msra.mxu0 %v3735
      %3766 = vmatpush.bf16.msra.mxu0 %v3733
      %3767 = vmatpush.bf16.msra.mxu0 %v3731
      %3768 = vmatpush.bf16.msra.mxu0 %v3729
      %3769 = vmatmul.bf16.gmra.mxu0 %v2939
      %v3770 = vpop.f32.mrf.mxu0
      %v3771 = vadd.f32 0.0, %v3770
      %v3772 = vpop.f32.mrf.mxu0
      %v3773 = vadd.f32 0.0, %v3772
      %3774 = vmatmul.bf16.gmra.mxu0 %v2940
      %v3775 = vpop.f32.mrf.mxu0
      %v3776 = vadd.f32 0.0, %v3775
      %v3777 = vpop.f32.mrf.mxu0
      %v3778 = vadd.f32 0.0, %v3777
      %3779 = vmatmul.bf16.gmra.mxu0 %v2941
      %v3780 = vpop.f32.mrf.mxu0
      %v3781 = vadd.f32 0.0, %v3780
      %v3782 = vpop.f32.mrf.mxu0
      %v3783 = vadd.f32 0.0, %v3782
      %3784 = vmatmul.bf16.gmra.mxu0 %v2942
      %v3785 = vpop.f32.mrf.mxu0
      %v3786 = vadd.f32 0.0, %v3785
      %v3787 = vpop.f32.mrf.mxu0
      %v3788 = vadd.f32 0.0, %v3787
      %3789 = vmatmul.bf16.gmra.mxu0 %v2943
      %v3790 = vpop.f32.mrf.mxu0
      %v3791 = vadd.f32 0.0, %v3790
      %v3792 = vpop.f32.mrf.mxu0
      %v3793 = vadd.f32 0.0, %v3792
      %3794 = vmatmul.bf16.gmra.mxu0 %v2944
      %v3795 = vpop.f32.mrf.mxu0
      %v3796 = vadd.f32 0.0, %v3795
      %v3797 = vpop.f32.mrf.mxu0
      %v3798 = vadd.f32 0.0, %v3797
      %3799 = vmatmul.bf16.gmra.mxu0 %v2945
      %v3800 = vpop.f32.mrf.mxu0
      %v3801 = vadd.f32 0.0, %v3800
      %v3802 = vpop.f32.mrf.mxu0
      %v3803 = vadd.f32 0.0, %v3802
      %3804 = vmatmul.bf16.gmra.mxu0 %v3679
      %v3805 = vpop.f32.mrf.mxu0
      %v3806 = vadd.f32 0.0, %v3805
      %v3807 = vpop.f32.mrf.mxu0
      %v3808 = vadd.f32 0.0, %v3807
      %3809 = vdwg.mxu0
      %3810 = vmatpush.bf16.msra.mxu0 %v3744
      %3811 = vmatpush.bf16.msra.mxu0 %v3742
      %3812 = vmatpush.bf16.msra.mxu0 %v3740
      %3813 = vmatpush.bf16.msra.mxu0 %v3738
      %3814 = vmatpush.bf16.msra.mxu0 %v3736
      %3815 = vmatpush.bf16.msra.mxu0 %v3734
      %3816 = vmatpush.bf16.msra.mxu0 %v3732
      %3817 = vmatpush.bf16.msra.mxu0 %v3730
      %3818 = vmatmul.bf16.gmra.mxu0 %v2939
      %v3819 = vpop.f32.mrf.mxu0
      %v3820 = vadd.f32 0.0, %v3819
      %v3821 = vpop.f32.mrf.mxu0
      %v3822 = vadd.f32 0.0, %v3821
      %3823 = vmatmul.bf16.gmra.mxu0 %v2940
      %v3824 = vpop.f32.mrf.mxu0
      %v3825 = vadd.f32 0.0, %v3824
      %v3826 = vpop.f32.mrf.mxu0
      %v3827 = vadd.f32 0.0, %v3826
      %3828 = vmatmul.bf16.gmra.mxu0 %v2941
      %v3829 = vpop.f32.mrf.mxu0
      %v3830 = vadd.f32 0.0, %v3829
      %v3831 = vpop.f32.mrf.mxu0
      %v3832 = vadd.f32 0.0, %v3831
      %3833 = vmatmul.bf16.gmra.mxu0 %v2942
      %v3834 = vpop.f32.mrf.mxu0
      %v3835 = vadd.f32 0.0, %v3834
      %v3836 = vpop.f32.mrf.mxu0
      %v3837 = vadd.f32 0.0, %v3836
      %3838 = vmatmul.bf16.gmra.mxu0 %v2943
      %v3839 = vpop.f32.mrf.mxu0
      %v3840 = vadd.f32 0.0, %v3839
      %v3841 = vpop.f32.mrf.mxu0
      %v3842 = vadd.f32 0.0, %v3841
      %3843 = vmatmul.bf16.gmra.mxu0 %v2944
      %v3844 = vpop.f32.mrf.mxu0
      %v3845 = vadd.f32 0.0, %v3844
      %v3846 = vpop.f32.mrf.mxu0
      %v3847 = vadd.f32 0.0, %v3846
      %3848 = vmatmul.bf16.gmra.mxu0 %v2945
      %v3849 = vpop.f32.mrf.mxu0
      %v3850 = vadd.f32 0.0, %v3849
      %v3851 = vpop.f32.mrf.mxu0
      %v3852 = vadd.f32 0.0, %v3851
      %3853 = vmatmul.bf16.gmra.mxu0 %v3679
      %v3854 = vpop.f32.mrf.mxu0
      %v3855 = vadd.f32 0.0, %v3854
      %v3856 = vpop.f32.mrf.mxu0
      %v3857 = vadd.f32 0.0, %v3856
      %3858 = vdwg.mxu0
      %v3859 = vadd.f32 %v3620, %v3771
      %v3860 = vadd.f32 %v3621, %v3820
      %v3861 = vadd.f32 %v3622, %v3773
      %v3862 = vadd.f32 %v3623, %v3822
      %v3863 = vadd.f32 %v3624, %v3776
      %v3864 = vadd.f32 %v3625, %v3825
      %v3865 = vadd.f32 %v3626, %v3778
      %v3866 = vadd.f32 %v3627, %v3827
      %v3867 = vadd.f32 %v3628, %v3781
      %v3868 = vadd.f32 %v3629, %v3830
      %v3869 = vadd.f32 %v3630, %v3783
      %v3870 = vadd.f32 %v3631, %v3832
      %v3871 = vadd.f32 %v3632, %v3786
      %v3872 = vadd.f32 %v3633, %v3835
      %v3873 = vadd.f32 %v3634, %v3788
      %v3874 = vadd.f32 %v3635, %v3837
      %v3875 = vadd.f32 %v3636, %v3791
      %v3876 = vadd.f32 %v3637, %v3840
      %v3877 = vadd.f32 %v3638, %v3793
      %v3878 = vadd.f32 %v3639, %v3842
      %v3879 = vadd.f32 %v3640, %v3796
      %v3880 = vadd.f32 %v3641, %v3845
      %v3881 = vadd.f32 %v3642, %v3798
      %v3882 = vadd.f32 %v3643, %v3847
      %v3883 = vadd.f32 %v3644, %v3801
      %v3884 = vadd.f32 %v3645, %v3850
      %v3885 = vadd.f32 %v3646, %v3803
      %v3886 = vadd.f32 %v3647, %v3852
      %v3887 = vadd.f32 %v3648, %v3806
      %v3888 = vadd.f32 %v3649, %v3855
      %v3889 = vadd.f32 %v3650, %v3808
      %v3890 = vadd.f32 %v3651, %v3857
      %s3891 = scalar_lea.vmem %s4, 768
      %v3892 = vld [vmem:[%s3891] sm:$0xff]
      %v3893 = vld [vmem:[%s3891 + $0x8] sm:$0xff]
      %v3894 = vld [vmem:[%s3891 + $0x10] sm:$0xff]
      %v3895 = vld [vmem:[%s3891 + $0x18] sm:$0xff]
      %v3896 = vld [vmem:[%s3891 + $0x20] sm:$0xff]
      %v3897 = vld [vmem:[%s3891 + $0x28] sm:$0xff]
      %v3898 = vld [vmem:[%s3891 + $0x30] sm:$0xff]
      %v3899 = vld [vmem:[%s3891 + $0x38] sm:$0xff]
      %v3900 = vld [vmem:[%s3891 + $0x40] sm:$0xff]
      %v3901 = vld [vmem:[%s3891 + $0x48] sm:$0xff]
      %v3902 = vld [vmem:[%s3891 + $0x50] sm:$0xff]
      %v3903 = vld [vmem:[%s3891 + $0x58] sm:$0xff]
      %v3904 = vld [vmem:[%s3891 + $0x60] sm:$0xff]
      %v3905 = vld [vmem:[%s3891 + $0x68] sm:$0xff]
      %v3906 = vld [vmem:[%s3891 + $0x70] sm:$0xff]
      %v3907 = vld [vmem:[%s3891 + $0x78] sm:$0xff]
      %v3910 = vunpack.c.l.b16 %v2171
      %v3911 = vunpack.c.l.b16 %v2172
      %v3912 = vpack.c.b16 %v3911, %v3910
      %v3930 = vunpack.c.l.b16 %v3892
      %v3931 = vunpack.c.h.b16 %v3892
      %v3932 = vunpack.c.l.b16 %v3893
      %v3933 = vunpack.c.h.b16 %v3893
      %v3934 = vunpack.c.l.b16 %v3894
      %v3935 = vunpack.c.h.b16 %v3894
      %v3936 = vunpack.c.l.b16 %v3895
      %v3937 = vunpack.c.h.b16 %v3895
      %v3938 = vunpack.c.l.b16 %v3896
      %v3939 = vunpack.c.h.b16 %v3896
      %v3940 = vunpack.c.l.b16 %v3897
      %v3941 = vunpack.c.h.b16 %v3897
      %v3942 = vunpack.c.l.b16 %v3898
      %v3943 = vunpack.c.h.b16 %v3898
      %v3944 = vunpack.c.l.b16 %v3899
      %v3945 = vunpack.c.h.b16 %v3899
      %v3946 = vunpack.c.l.b16 %v3900
      %v3947 = vunpack.c.h.b16 %v3900
      %v3948 = vunpack.c.l.b16 %v3901
      %v3949 = vunpack.c.h.b16 %v3901
      %v3950 = vunpack.c.l.b16 %v3902
      %v3951 = vunpack.c.h.b16 %v3902
      %v3952 = vunpack.c.l.b16 %v3903
      %v3953 = vunpack.c.h.b16 %v3903
      %v3954 = vunpack.c.l.b16 %v3904
      %v3955 = vunpack.c.h.b16 %v3904
      %v3956 = vunpack.c.l.b16 %v3905
      %v3957 = vunpack.c.h.b16 %v3905
      %v3958 = vunpack.c.l.b16 %v3906
      %v3959 = vunpack.c.h.b16 %v3906
      %v3960 = vunpack.c.l.b16 %v3907
      %v3961 = vunpack.c.h.b16 %v3907
      %v3962 = vpack.c.b16 %v3932, %v3930
      %v3963 = vpack.c.b16 %v3933, %v3931
      %v3964 = vpack.c.b16 %v3936, %v3934
      %v3965 = vpack.c.b16 %v3937, %v3935
      %v3966 = vpack.c.b16 %v3940, %v3938
      %v3967 = vpack.c.b16 %v3941, %v3939
      %v3968 = vpack.c.b16 %v3944, %v3942
      %v3969 = vpack.c.b16 %v3945, %v3943
      %v3970 = vpack.c.b16 %v3948, %v3946
      %v3971 = vpack.c.b16 %v3949, %v3947
      %v3972 = vpack.c.b16 %v3952, %v3950
      %v3973 = vpack.c.b16 %v3953, %v3951
      %v3974 = vpack.c.b16 %v3956, %v3954
      %v3975 = vpack.c.b16 %v3957, %v3955
      %v3976 = vpack.c.b16 %v3960, %v3958
      %v3977 = vpack.c.b16 %v3961, %v3959
      %3994 = vmatpush.bf16.msra.mxu0 %v3976
      %3995 = vmatpush.bf16.msra.mxu0 %v3974
      %3996 = vmatpush.bf16.msra.mxu0 %v3972
      %3997 = vmatpush.bf16.msra.mxu0 %v3970
      %3998 = vmatpush.bf16.msra.mxu0 %v3968
      %3999 = vmatpush.bf16.msra.mxu0 %v3966
      %4000 = vmatpush.bf16.msra.mxu0 %v3964
      %4001 = vmatpush.bf16.msra.mxu0 %v3962
      %4002 = vmatmul.bf16.gmra.mxu0 %v2646
      %v4003 = vpop.f32.mrf.mxu0
      %v4004 = vadd.f32 0.0, %v4003
      %v4005 = vpop.f32.mrf.mxu0
      %v4006 = vadd.f32 0.0, %v4005
      %4007 = vmatmul.bf16.gmra.mxu0 %v2647
      %v4008 = vpop.f32.mrf.mxu0
      %v4009 = vadd.f32 0.0, %v4008
      %v4010 = vpop.f32.mrf.mxu0
      %v4011 = vadd.f32 0.0, %v4010
      %4012 = vmatmul.bf16.gmra.mxu0 %v2648
      %v4013 = vpop.f32.mrf.mxu0
      %v4014 = vadd.f32 0.0, %v4013
      %v4015 = vpop.f32.mrf.mxu0
      %v4016 = vadd.f32 0.0, %v4015
      %4017 = vmatmul.bf16.gmra.mxu0 %v2649
      %v4018 = vpop.f32.mrf.mxu0
      %v4019 = vadd.f32 0.0, %v4018
      %v4020 = vpop.f32.mrf.mxu0
      %v4021 = vadd.f32 0.0, %v4020
      %4022 = vmatmul.bf16.gmra.mxu0 %v2650
      %v4023 = vpop.f32.mrf.mxu0
      %v4024 = vadd.f32 0.0, %v4023
      %v4025 = vpop.f32.mrf.mxu0
      %v4026 = vadd.f32 0.0, %v4025
      %4027 = vmatmul.bf16.gmra.mxu0 %v2651
      %v4028 = vpop.f32.mrf.mxu0
      %v4029 = vadd.f32 0.0, %v4028
      %v4030 = vpop.f32.mrf.mxu0
      %v4031 = vadd.f32 0.0, %v4030
      %4032 = vmatmul.bf16.gmra.mxu0 %v3185
      %v4033 = vpop.f32.mrf.mxu0
      %v4034 = vadd.f32 0.0, %v4033
      %v4035 = vpop.f32.mrf.mxu0
      %v4036 = vadd.f32 0.0, %v4035
      %4037 = vmatmul.bf16.gmra.mxu0 %v3912
      %v4038 = vpop.f32.mrf.mxu0
      %v4039 = vadd.f32 0.0, %v4038
      %v4040 = vpop.f32.mrf.mxu0
      %v4041 = vadd.f32 0.0, %v4040
      %4042 = vdwg.mxu0
      %4043 = vmatpush.bf16.msra.mxu0 %v3977
      %4044 = vmatpush.bf16.msra.mxu0 %v3975
      %4045 = vmatpush.bf16.msra.mxu0 %v3973
      %4046 = vmatpush.bf16.msra.mxu0 %v3971
      %4047 = vmatpush.bf16.msra.mxu0 %v3969
      %4048 = vmatpush.bf16.msra.mxu0 %v3967
      %4049 = vmatpush.bf16.msra.mxu0 %v3965
      %4050 = vmatpush.bf16.msra.mxu0 %v3963
      %4051 = vmatmul.bf16.gmra.mxu0 %v2646
      %v4052 = vpop.f32.mrf.mxu0
      %v4053 = vadd.f32 0.0, %v4052
      %v4054 = vpop.f32.mrf.mxu0
      %v4055 = vadd.f32 0.0, %v4054
      %4056 = vmatmul.bf16.gmra.mxu0 %v2647
      %v4057 = vpop.f32.mrf.mxu0
      %v4058 = vadd.f32 0.0, %v4057
      %v4059 = vpop.f32.mrf.mxu0
      %v4060 = vadd.f32 0.0, %v4059
      %4061 = vmatmul.bf16.gmra.mxu0 %v2648
      %v4062 = vpop.f32.mrf.mxu0
      %v4063 = vadd.f32 0.0, %v4062
      %v4064 = vpop.f32.mrf.mxu0
      %v4065 = vadd.f32 0.0, %v4064
      %4066 = vmatmul.bf16.gmra.mxu0 %v2649
      %v4067 = vpop.f32.mrf.mxu0
      %v4068 = vadd.f32 0.0, %v4067
      %v4069 = vpop.f32.mrf.mxu0
      %v4070 = vadd.f32 0.0, %v4069
      %4071 = vmatmul.bf16.gmra.mxu0 %v2650
      %v4072 = vpop.f32.mrf.mxu0
      %v4073 = vadd.f32 0.0, %v4072
      %v4074 = vpop.f32.mrf.mxu0
      %v4075 = vadd.f32 0.0, %v4074
      %4076 = vmatmul.bf16.gmra.mxu0 %v2651
      %v4077 = vpop.f32.mrf.mxu0
      %v4078 = vadd.f32 0.0, %v4077
      %v4079 = vpop.f32.mrf.mxu0
      %v4080 = vadd.f32 0.0, %v4079
      %4081 = vmatmul.bf16.gmra.mxu0 %v3185
      %v4082 = vpop.f32.mrf.mxu0
      %v4083 = vadd.f32 0.0, %v4082
      %v4084 = vpop.f32.mrf.mxu0
      %v4085 = vadd.f32 0.0, %v4084
      %4086 = vmatmul.bf16.gmra.mxu0 %v3912
      %v4087 = vpop.f32.mrf.mxu0
      %v4088 = vadd.f32 0.0, %v4087
      %v4089 = vpop.f32.mrf.mxu0
      %v4090 = vadd.f32 0.0, %v4089
      %4091 = vdwg.mxu0
      %v4092 = vadd.f32 %v3859, %v4004
      %v4093 = vadd.f32 %v3860, %v4053
      %v4094 = vadd.f32 %v3861, %v4006
      %v4095 = vadd.f32 %v3862, %v4055
      %v4096 = vadd.f32 %v3863, %v4009
      %v4097 = vadd.f32 %v3864, %v4058
      %v4098 = vadd.f32 %v3865, %v4011
      %v4099 = vadd.f32 %v3866, %v4060
      %v4100 = vadd.f32 %v3867, %v4014
      %v4101 = vadd.f32 %v3868, %v4063
      %v4102 = vadd.f32 %v3869, %v4016
      %v4103 = vadd.f32 %v3870, %v4065
      %v4104 = vadd.f32 %v3871, %v4019
      %v4105 = vadd.f32 %v3872, %v4068
      %v4106 = vadd.f32 %v3873, %v4021
      %v4107 = vadd.f32 %v3874, %v4070
      %v4108 = vadd.f32 %v3875, %v4024
      %v4109 = vadd.f32 %v3876, %v4073
      %v4110 = vadd.f32 %v3877, %v4026
      %v4111 = vadd.f32 %v3878, %v4075
      %v4112 = vadd.f32 %v3879, %v4029
      %v4113 = vadd.f32 %v3880, %v4078
      %v4114 = vadd.f32 %v3881, %v4031
      %v4115 = vadd.f32 %v3882, %v4080
      %v4116 = vadd.f32 %v3883, %v4034
      %v4117 = vadd.f32 %v3884, %v4083
      %v4118 = vadd.f32 %v3885, %v4036
      %v4119 = vadd.f32 %v3886, %v4085
      %v4120 = vadd.f32 %v3887, %v4039
      %v4121 = vadd.f32 %v3888, %v4088
      %v4122 = vadd.f32 %v3889, %v4041
      %v4123 = vadd.f32 %v3890, %v4090
      %v4125 = vshrl.u32 %v2171, 16
      %v4127 = vrot.slane %v4125, 4
      %v4128 = vshll.u32 %v2171, 16
      %v4130 = vrot.slane %v4128, 5
      %v4131 = vor.u32 %v4127, %v4130
      %v4132 = vrot.slane %v4131, 4
      %v4134 = vshll.u32 %v2172, 16
      %v4136 = vrot.slane %v4134, 5
      %v4137 = vsel %vm2192, %v4132, %v4136
      %v4138 = vshrl.u32 %v2172, 16
      %v4140 = vrot.slane %v4138, 4
      %v4141 = vor.u32 %v4140, %v4136
      %v4142 = vrot.slane %v4141, 4
      %v4144 = vshll.u32 %v2173, 16
      %v4146 = vrot.slane %v4144, 5
      %v4147 = vsel %vm2192, %v4142, %v4146
      %s4148 = scalar_lea.vmem %s4, 896
      %v4149 = vld [vmem:[%s4148] sm:$0xff]
      %v4150 = vld [vmem:[%s4148 + $0x8] sm:$0xff]
      %v4151 = vld [vmem:[%s4148 + $0x10] sm:$0xff]
      %v4152 = vld [vmem:[%s4148 + $0x18] sm:$0xff]
      %v4153 = vld [vmem:[%s4148 + $0x20] sm:$0xff]
      %v4154 = vld [vmem:[%s4148 + $0x28] sm:$0xff]
      %v4155 = vld [vmem:[%s4148 + $0x30] sm:$0xff]
      %v4156 = vld [vmem:[%s4148 + $0x38] sm:$0xff]
      %v4157 = vld [vmem:[%s4148 + $0x40] sm:$0xff]
      %v4158 = vld [vmem:[%s4148 + $0x48] sm:$0xff]
      %v4159 = vld [vmem:[%s4148 + $0x50] sm:$0xff]
      %v4160 = vld [vmem:[%s4148 + $0x58] sm:$0xff]
      %v4161 = vld [vmem:[%s4148 + $0x60] sm:$0xff]
      %v4162 = vld [vmem:[%s4148 + $0x68] sm:$0xff]
      %v4163 = vld [vmem:[%s4148 + $0x70] sm:$0xff]
      %v4164 = vld [vmem:[%s4148 + $0x78] sm:$0xff]
      %v4165 = vunpack.c.l.b16 %v4137
      %v4166 = vunpack.c.l.b16 %v4147
      %v4167 = vpack.c.b16 %v4166, %v4165
      %v4185 = vunpack.c.l.b16 %v4149
      %v4186 = vunpack.c.h.b16 %v4149
      %v4187 = vunpack.c.l.b16 %v4150
      %v4188 = vunpack.c.h.b16 %v4150
      %v4189 = vunpack.c.l.b16 %v4151
      %v4190 = vunpack.c.h.b16 %v4151
      %v4191 = vunpack.c.l.b16 %v4152
      %v4192 = vunpack.c.h.b16 %v4152
      %v4193 = vunpack.c.l.b16 %v4153
      %v4194 = vunpack.c.h.b16 %v4153
      %v4195 = vunpack.c.l.b16 %v4154
      %v4196 = vunpack.c.h.b16 %v4154
      %v4197 = vunpack.c.l.b16 %v4155
      %v4198 = vunpack.c.h.b16 %v4155
      %v4199 = vunpack.c.l.b16 %v4156
      %v4200 = vunpack.c.h.b16 %v4156
      %v4201 = vunpack.c.l.b16 %v4157
      %v4202 = vunpack.c.h.b16 %v4157
      %v4203 = vunpack.c.l.b16 %v4158
      %v4204 = vunpack.c.h.b16 %v4158
      %v4205 = vunpack.c.l.b16 %v4159
      %v4206 = vunpack.c.h.b16 %v4159
      %v4207 = vunpack.c.l.b16 %v4160
      %v4208 = vunpack.c.h.b16 %v4160
      %v4209 = vunpack.c.l.b16 %v4161
      %v4210 = vunpack.c.h.b16 %v4161
      %v4211 = vunpack.c.l.b16 %v4162
      %v4212 = vunpack.c.h.b16 %v4162
      %v4213 = vunpack.c.l.b16 %v4163
      %v4214 = vunpack.c.h.b16 %v4163
      %v4215 = vunpack.c.l.b16 %v4164
      %v4216 = vunpack.c.h.b16 %v4164
      %v4217 = vpack.c.b16 %v4187, %v4185
      %v4218 = vpack.c.b16 %v4188, %v4186
      %v4219 = vpack.c.b16 %v4191, %v4189
      %v4220 = vpack.c.b16 %v4192, %v4190
      %v4221 = vpack.c.b16 %v4195, %v4193
      %v4222 = vpack.c.b16 %v4196, %v4194
      %v4223 = vpack.c.b16 %v4199, %v4197
      %v4224 = vpack.c.b16 %v4200, %v4198
      %v4225 = vpack.c.b16 %v4203, %v4201
      %v4226 = vpack.c.b16 %v4204, %v4202
      %v4227 = vpack.c.b16 %v4207, %v4205
      %v4228 = vpack.c.b16 %v4208, %v4206
      %v4229 = vpack.c.b16 %v4211, %v4209
      %v4230 = vpack.c.b16 %v4212, %v4210
      %v4231 = vpack.c.b16 %v4215, %v4213
      %v4232 = vpack.c.b16 %v4216, %v4214
      %4249 = vmatpush.bf16.msra.mxu0 %v4231
      %4250 = vmatpush.bf16.msra.mxu0 %v4229
      %4251 = vmatpush.bf16.msra.mxu0 %v4227
      %4252 = vmatpush.bf16.msra.mxu0 %v4225
      %4253 = vmatpush.bf16.msra.mxu0 %v4223
      %4254 = vmatpush.bf16.msra.mxu0 %v4221
      %4255 = vmatpush.bf16.msra.mxu0 %v4219
      %4256 = vmatpush.bf16.msra.mxu0 %v4217
      %4257 = vmatmul.bf16.gmra.mxu0 %v2420
      %v4258 = vpop.f32.mrf.mxu0
      %v4259 = vadd.f32 0.0, %v4258
      %v4260 = vpop.f32.mrf.mxu0
      %v4261 = vadd.f32 0.0, %v4260
      %4262 = vmatmul.bf16.gmra.mxu0 %v2421
      %v4263 = vpop.f32.mrf.mxu0
      %v4264 = vadd.f32 0.0, %v4263
      %v4265 = vpop.f32.mrf.mxu0
      %v4266 = vadd.f32 0.0, %v4265
      %4267 = vmatmul.bf16.gmra.mxu0 %v2422
      %v4268 = vpop.f32.mrf.mxu0
      %v4269 = vadd.f32 0.0, %v4268
      %v4270 = vpop.f32.mrf.mxu0
      %v4271 = vadd.f32 0.0, %v4270
      %4272 = vmatmul.bf16.gmra.mxu0 %v2423
      %v4273 = vpop.f32.mrf.mxu0
      %v4274 = vadd.f32 0.0, %v4273
      %v4275 = vpop.f32.mrf.mxu0
      %v4276 = vadd.f32 0.0, %v4275
      %4277 = vmatmul.bf16.gmra.mxu0 %v2424
      %v4278 = vpop.f32.mrf.mxu0
      %v4279 = vadd.f32 0.0, %v4278
      %v4280 = vpop.f32.mrf.mxu0
      %v4281 = vadd.f32 0.0, %v4280
      %4282 = vmatmul.bf16.gmra.mxu0 %v2425
      %v4283 = vpop.f32.mrf.mxu0
      %v4284 = vadd.f32 0.0, %v4283
      %v4285 = vpop.f32.mrf.mxu0
      %v4286 = vadd.f32 0.0, %v4285
      %4287 = vmatmul.bf16.gmra.mxu0 %v3440
      %v4288 = vpop.f32.mrf.mxu0
      %v4289 = vadd.f32 0.0, %v4288
      %v4290 = vpop.f32.mrf.mxu0
      %v4291 = vadd.f32 0.0, %v4290
      %4292 = vmatmul.bf16.gmra.mxu0 %v4167
      %v4293 = vpop.f32.mrf.mxu0
      %v4294 = vadd.f32 0.0, %v4293
      %v4295 = vpop.f32.mrf.mxu0
      %v4296 = vadd.f32 0.0, %v4295
      %4297 = vdwg.mxu0
      %4298 = vmatpush.bf16.msra.mxu0 %v4232
      %4299 = vmatpush.bf16.msra.mxu0 %v4230
      %4300 = vmatpush.bf16.msra.mxu0 %v4228
      %4301 = vmatpush.bf16.msra.mxu0 %v4226
      %4302 = vmatpush.bf16.msra.mxu0 %v4224
      %4303 = vmatpush.bf16.msra.mxu0 %v4222
      %4304 = vmatpush.bf16.msra.mxu0 %v4220
      %4305 = vmatpush.bf16.msra.mxu0 %v4218
      %4306 = vmatmul.bf16.gmra.mxu0 %v2420
      %v4307 = vpop.f32.mrf.mxu0
      %v4308 = vadd.f32 0.0, %v4307
      %v4309 = vpop.f32.mrf.mxu0
      %v4310 = vadd.f32 0.0, %v4309
      %4311 = vmatmul.bf16.gmra.mxu0 %v2421
      %v4312 = vpop.f32.mrf.mxu0
      %v4313 = vadd.f32 0.0, %v4312
      %v4314 = vpop.f32.mrf.mxu0
      %v4315 = vadd.f32 0.0, %v4314
      %4316 = vmatmul.bf16.gmra.mxu0 %v2422
      %v4317 = vpop.f32.mrf.mxu0
      %v4318 = vadd.f32 0.0, %v4317
      %v4319 = vpop.f32.mrf.mxu0
      %v4320 = vadd.f32 0.0, %v4319
      %4321 = vmatmul.bf16.gmra.mxu0 %v2423
      %v4322 = vpop.f32.mrf.mxu0
      %v4323 = vadd.f32 0.0, %v4322
      %v4324 = vpop.f32.mrf.mxu0
      %v4325 = vadd.f32 0.0, %v4324
      %4326 = vmatmul.bf16.gmra.mxu0 %v2424
      %v4327 = vpop.f32.mrf.mxu0
      %v4328 = vadd.f32 0.0, %v4327
      %v4329 = vpop.f32.mrf.mxu0
      %v4330 = vadd.f32 0.0, %v4329
      %4331 = vmatmul.bf16.gmra.mxu0 %v2425
      %v4332 = vpop.f32.mrf.mxu0
      %v4333 = vadd.f32 0.0, %v4332
      %v4334 = vpop.f32.mrf.mxu0
      %v4335 = vadd.f32 0.0, %v4334
      %4336 = vmatmul.bf16.gmra.mxu0 %v3440
      %v4337 = vpop.f32.mrf.mxu0
      %v4338 = vadd.f32 0.0, %v4337
      %v4339 = vpop.f32.mrf.mxu0
      %v4340 = vadd.f32 0.0, %v4339
      %4341 = vmatmul.bf16.gmra.mxu0 %v4167
      %v4342 = vpop.f32.mrf.mxu0
      %v4343 = vadd.f32 0.0, %v4342
      %v4344 = vpop.f32.mrf.mxu0
      %v4345 = vadd.f32 0.0, %v4344
      %4346 = vdwg.mxu0
      %v4347 = vadd.f32 %v4092, %v4259
      %v4348 = vadd.f32 %v4093, %v4308
      %v4349 = vadd.f32 %v4094, %v4261
      %v4350 = vadd.f32 %v4095, %v4310
      %v4351 = vadd.f32 %v4096, %v4264
      %v4352 = vadd.f32 %v4097, %v4313
      %v4353 = vadd.f32 %v4098, %v4266
      %v4354 = vadd.f32 %v4099, %v4315
      %v4355 = vadd.f32 %v4100, %v4269
      %v4356 = vadd.f32 %v4101, %v4318
      %v4357 = vadd.f32 %v4102, %v4271
      %v4358 = vadd.f32 %v4103, %v4320
      %v4359 = vadd.f32 %v4104, %v4274
      %v4360 = vadd.f32 %v4105, %v4323
      %v4361 = vadd.f32 %v4106, %v4276
      %v4362 = vadd.f32 %v4107, %v4325
      %v4363 = vadd.f32 %v4108, %v4279
      %v4364 = vadd.f32 %v4109, %v4328
      %v4365 = vadd.f32 %v4110, %v4281
      %v4366 = vadd.f32 %v4111, %v4330
      %v4367 = vadd.f32 %v4112, %v4284
      %v4368 = vadd.f32 %v4113, %v4333
      %v4369 = vadd.f32 %v4114, %v4286
      %v4370 = vadd.f32 %v4115, %v4335
      %v4371 = vadd.f32 %v4116, %v4289
      %v4372 = vadd.f32 %v4117, %v4338
      %v4373 = vadd.f32 %v4118, %v4291
      %v4374 = vadd.f32 %v4119, %v4340
      %v4375 = vadd.f32 %v4120, %v4294
      %v4376 = vadd.f32 %v4121, %v4343
      %v4377 = vadd.f32 %v4122, %v4296
      %v4378 = vadd.f32 %v4123, %v4345
      %v4380 = vrot.slane %v2171, 5
      %v4381 = vrot.slane %v4380, 4
      %v4382 = vrot.slane %v2172, 5
      %v4383 = vsel %vm2848, %v4381, %v4382
      %v4384 = vrot.slane %v4382, 4
      %v4385 = vrot.slane %v2173, 5
      %v4386 = vsel %vm2848, %v4384, %v4385
      %s4387 = scalar_lea.vmem %s4, 1024
      %v4388 = vld [vmem:[%s4387] sm:$0xff]
      %v4389 = vld [vmem:[%s4387 + $0x8] sm:$0xff]
      %v4390 = vld [vmem:[%s4387 + $0x10] sm:$0xff]
      %v4391 = vld [vmem:[%s4387 + $0x18] sm:$0xff]
      %v4392 = vld [vmem:[%s4387 + $0x20] sm:$0xff]
      %v4393 = vld [vmem:[%s4387 + $0x28] sm:$0xff]
      %v4394 = vld [vmem:[%s4387 + $0x30] sm:$0xff]
      %v4395 = vld [vmem:[%s4387 + $0x38] sm:$0xff]
      %v4396 = vld [vmem:[%s4387 + $0x40] sm:$0xff]
      %v4397 = vld [vmem:[%s4387 + $0x48] sm:$0xff]
      %v4398 = vld [vmem:[%s4387 + $0x50] sm:$0xff]
      %v4399 = vld [vmem:[%s4387 + $0x58] sm:$0xff]
      %v4400 = vld [vmem:[%s4387 + $0x60] sm:$0xff]
      %v4401 = vld [vmem:[%s4387 + $0x68] sm:$0xff]
      %v4402 = vld [vmem:[%s4387 + $0x70] sm:$0xff]
      %v4403 = vld [vmem:[%s4387 + $0x78] sm:$0xff]
      %v4404 = vunpack.c.l.b16 %v4383
      %v4405 = vunpack.c.l.b16 %v4386
      %v4406 = vpack.c.b16 %v4405, %v4404
      %v4424 = vunpack.c.l.b16 %v4388
      %v4425 = vunpack.c.h.b16 %v4388
      %v4426 = vunpack.c.l.b16 %v4389
      %v4427 = vunpack.c.h.b16 %v4389
      %v4428 = vunpack.c.l.b16 %v4390
      %v4429 = vunpack.c.h.b16 %v4390
      %v4430 = vunpack.c.l.b16 %v4391
      %v4431 = vunpack.c.h.b16 %v4391
      %v4432 = vunpack.c.l.b16 %v4392
      %v4433 = vunpack.c.h.b16 %v4392
      %v4434 = vunpack.c.l.b16 %v4393
      %v4435 = vunpack.c.h.b16 %v4393
      %v4436 = vunpack.c.l.b16 %v4394
      %v4437 = vunpack.c.h.b16 %v4394
      %v4438 = vunpack.c.l.b16 %v4395
      %v4439 = vunpack.c.h.b16 %v4395
      %v4440 = vunpack.c.l.b16 %v4396
      %v4441 = vunpack.c.h.b16 %v4396
      %v4442 = vunpack.c.l.b16 %v4397
      %v4443 = vunpack.c.h.b16 %v4397
      %v4444 = vunpack.c.l.b16 %v4398
      %v4445 = vunpack.c.h.b16 %v4398
      %v4446 = vunpack.c.l.b16 %v4399
      %v4447 = vunpack.c.h.b16 %v4399
      %v4448 = vunpack.c.l.b16 %v4400
      %v4449 = vunpack.c.h.b16 %v4400
      %v4450 = vunpack.c.l.b16 %v4401
      %v4451 = vunpack.c.h.b16 %v4401
      %v4452 = vunpack.c.l.b16 %v4402
      %v4453 = vunpack.c.h.b16 %v4402
      %v4454 = vunpack.c.l.b16 %v4403
      %v4455 = vunpack.c.h.b16 %v4403
      %v4456 = vpack.c.b16 %v4426, %v4424
      %v4457 = vpack.c.b16 %v4427, %v4425
      %v4458 = vpack.c.b16 %v4430, %v4428
      %v4459 = vpack.c.b16 %v4431, %v4429
      %v4460 = vpack.c.b16 %v4434, %v4432
      %v4461 = vpack.c.b16 %v4435, %v4433
      %v4462 = vpack.c.b16 %v4438, %v4436
      %v4463 = vpack.c.b16 %v4439, %v4437
      %v4464 = vpack.c.b16 %v4442, %v4440
      %v4465 = vpack.c.b16 %v4443, %v4441
      %v4466 = vpack.c.b16 %v4446, %v4444
      %v4467 = vpack.c.b16 %v4447, %v4445
      %v4468 = vpack.c.b16 %v4450, %v4448
      %v4469 = vpack.c.b16 %v4451, %v4449
      %v4470 = vpack.c.b16 %v4454, %v4452
      %v4471 = vpack.c.b16 %v4455, %v4453
      %4488 = vmatpush.bf16.msra.mxu0 %v4470
      %4489 = vmatpush.bf16.msra.mxu0 %v4468
      %4490 = vmatpush.bf16.msra.mxu0 %v4466
      %4491 = vmatpush.bf16.msra.mxu0 %v4464
      %4492 = vmatpush.bf16.msra.mxu0 %v4462
      %4493 = vmatpush.bf16.msra.mxu0 %v4460
      %4494 = vmatpush.bf16.msra.mxu0 %v4458
      %4495 = vmatpush.bf16.msra.mxu0 %v4456
      %4496 = vmatmul.bf16.gmra.mxu0 %v2940
      %v4497 = vpop.f32.mrf.mxu0
      %v4498 = vadd.f32 0.0, %v4497
      %v4499 = vpop.f32.mrf.mxu0
      %v4500 = vadd.f32 0.0, %v4499
      %4501 = vmatmul.bf16.gmra.mxu0 %v2941
      %v4502 = vpop.f32.mrf.mxu0
      %v4503 = vadd.f32 0.0, %v4502
      %v4504 = vpop.f32.mrf.mxu0
      %v4505 = vadd.f32 0.0, %v4504
      %4506 = vmatmul.bf16.gmra.mxu0 %v2942
      %v4507 = vpop.f32.mrf.mxu0
      %v4508 = vadd.f32 0.0, %v4507
      %v4509 = vpop.f32.mrf.mxu0
      %v4510 = vadd.f32 0.0, %v4509
      %4511 = vmatmul.bf16.gmra.mxu0 %v2943
      %v4512 = vpop.f32.mrf.mxu0
      %v4513 = vadd.f32 0.0, %v4512
      %v4514 = vpop.f32.mrf.mxu0
      %v4515 = vadd.f32 0.0, %v4514
      %4516 = vmatmul.bf16.gmra.mxu0 %v2944
      %v4517 = vpop.f32.mrf.mxu0
      %v4518 = vadd.f32 0.0, %v4517
      %v4519 = vpop.f32.mrf.mxu0
      %v4520 = vadd.f32 0.0, %v4519
      %4521 = vmatmul.bf16.gmra.mxu0 %v2945
      %v4522 = vpop.f32.mrf.mxu0
      %v4523 = vadd.f32 0.0, %v4522
      %v4524 = vpop.f32.mrf.mxu0
      %v4525 = vadd.f32 0.0, %v4524
      %4526 = vmatmul.bf16.gmra.mxu0 %v3679
      %v4527 = vpop.f32.mrf.mxu0
      %v4528 = vadd.f32 0.0, %v4527
      %v4529 = vpop.f32.mrf.mxu0
      %v4530 = vadd.f32 0.0, %v4529
      %4531 = vmatmul.bf16.gmra.mxu0 %v4406
      %v4532 = vpop.f32.mrf.mxu0
      %v4533 = vadd.f32 0.0, %v4532
      %v4534 = vpop.f32.mrf.mxu0
      %v4535 = vadd.f32 0.0, %v4534
      %4536 = vdwg.mxu0
      %4537 = vmatpush.bf16.msra.mxu0 %v4471
      %4538 = vmatpush.bf16.msra.mxu0 %v4469
      %4539 = vmatpush.bf16.msra.mxu0 %v4467
      %4540 = vmatpush.bf16.msra.mxu0 %v4465
      %4541 = vmatpush.bf16.msra.mxu0 %v4463
      %4542 = vmatpush.bf16.msra.mxu0 %v4461
      %4543 = vmatpush.bf16.msra.mxu0 %v4459
      %4544 = vmatpush.bf16.msra.mxu0 %v4457
      %4545 = vmatmul.bf16.gmra.mxu0 %v2940
      %v4546 = vpop.f32.mrf.mxu0
      %v4547 = vadd.f32 0.0, %v4546
      %v4548 = vpop.f32.mrf.mxu0
      %v4549 = vadd.f32 0.0, %v4548
      %4550 = vmatmul.bf16.gmra.mxu0 %v2941
      %v4551 = vpop.f32.mrf.mxu0
      %v4552 = vadd.f32 0.0, %v4551
      %v4553 = vpop.f32.mrf.mxu0
      %v4554 = vadd.f32 0.0, %v4553
      %4555 = vmatmul.bf16.gmra.mxu0 %v2942
      %v4556 = vpop.f32.mrf.mxu0
      %v4557 = vadd.f32 0.0, %v4556
      %v4558 = vpop.f32.mrf.mxu0
      %v4559 = vadd.f32 0.0, %v4558
      %4560 = vmatmul.bf16.gmra.mxu0 %v2943
      %v4561 = vpop.f32.mrf.mxu0
      %v4562 = vadd.f32 0.0, %v4561
      %v4563 = vpop.f32.mrf.mxu0
      %v4564 = vadd.f32 0.0, %v4563
      %4565 = vmatmul.bf16.gmra.mxu0 %v2944
      %v4566 = vpop.f32.mrf.mxu0
      %v4567 = vadd.f32 0.0, %v4566
      %v4568 = vpop.f32.mrf.mxu0
      %v4569 = vadd.f32 0.0, %v4568
      %4570 = vmatmul.bf16.gmra.mxu0 %v2945
      %v4571 = vpop.f32.mrf.mxu0
      %v4572 = vadd.f32 0.0, %v4571
      %v4573 = vpop.f32.mrf.mxu0
      %v4574 = vadd.f32 0.0, %v4573
      %4575 = vmatmul.bf16.gmra.mxu0 %v3679
      %v4576 = vpop.f32.mrf.mxu0
      %v4577 = vadd.f32 0.0, %v4576
      %v4578 = vpop.f32.mrf.mxu0
      %v4579 = vadd.f32 0.0, %v4578
      %4580 = vmatmul.bf16.gmra.mxu0 %v4406
      %v4581 = vpop.f32.mrf.mxu0
      %v4582 = vadd.f32 0.0, %v4581
      %v4583 = vpop.f32.mrf.mxu0
      %v4584 = vadd.f32 0.0, %v4583
      %4585 = vdwg.mxu0
      %v4586 = vadd.f32 %v4347, %v4498
      %v4587 = vadd.f32 %v4348, %v4547
      %v4588 = vadd.f32 %v4349, %v4500
      %v4589 = vadd.f32 %v4350, %v4549
      %v4590 = vadd.f32 %v4351, %v4503
      %v4591 = vadd.f32 %v4352, %v4552
      %v4592 = vadd.f32 %v4353, %v4505
      %v4593 = vadd.f32 %v4354, %v4554
      %v4594 = vadd.f32 %v4355, %v4508
      %v4595 = vadd.f32 %v4356, %v4557
      %v4596 = vadd.f32 %v4357, %v4510
      %v4597 = vadd.f32 %v4358, %v4559
      %v4598 = vadd.f32 %v4359, %v4513
      %v4599 = vadd.f32 %v4360, %v4562
      %v4600 = vadd.f32 %v4361, %v4515
      %v4601 = vadd.f32 %v4362, %v4564
      %v4602 = vadd.f32 %v4363, %v4518
      %v4603 = vadd.f32 %v4364, %v4567
      %v4604 = vadd.f32 %v4365, %v4520
      %v4605 = vadd.f32 %v4366, %v4569
      %v4606 = vadd.f32 %v4367, %v4523
      %v4607 = vadd.f32 %v4368, %v4572
      %v4608 = vadd.f32 %v4369, %v4525
      %v4609 = vadd.f32 %v4370, %v4574
      %v4610 = vadd.f32 %v4371, %v4528
      %v4611 = vadd.f32 %v4372, %v4577
      %v4612 = vadd.f32 %v4373, %v4530
      %v4613 = vadd.f32 %v4374, %v4579
      %v4614 = vadd.f32 %v4375, %v4533
      %v4615 = vadd.f32 %v4376, %v4582
      %v4616 = vadd.f32 %v4377, %v4535
      %v4617 = vadd.f32 %v4378, %v4584
      %v4618 = vld [vmem:[%s5] sm:$0x3]
      %v4620 = vperm.slane %v4618, 0
      %v4621 = vperm.slane %v4618, 1
      %v4624 = vadd.f32 %v4586, %v4620
      %v4625 = vadd.f32 %v4587, %v4621
      %v4626 = vadd.f32 %v4588, %v4620
      %v4627 = vadd.f32 %v4589, %v4621
      %v4628 = vadd.f32 %v4590, %v4620
      %v4629 = vadd.f32 %v4591, %v4621
      %v4630 = vadd.f32 %v4592, %v4620
      %v4631 = vadd.f32 %v4593, %v4621
      %v4632 = vadd.f32 %v4594, %v4620
      %v4633 = vadd.f32 %v4595, %v4621
      %v4634 = vadd.f32 %v4596, %v4620
      %v4635 = vadd.f32 %v4597, %v4621
      %v4636 = vadd.f32 %v4598, %v4620
      %v4637 = vadd.f32 %v4599, %v4621
      %v4638 = vadd.f32 %v4600, %v4620
      %v4639 = vadd.f32 %v4601, %v4621
      %v4640 = vadd.f32 %v4602, %v4620
      %v4641 = vadd.f32 %v4603, %v4621
      %v4642 = vadd.f32 %v4604, %v4620
      %v4643 = vadd.f32 %v4605, %v4621
      %v4644 = vadd.f32 %v4606, %v4620
      %v4645 = vadd.f32 %v4607, %v4621
      %v4646 = vadd.f32 %v4608, %v4620
      %v4647 = vadd.f32 %v4609, %v4621
      %v4648 = vadd.f32 %v4610, %v4620
      %v4649 = vadd.f32 %v4611, %v4621
      %v4650 = vadd.f32 %v4612, %v4620
      %v4651 = vadd.f32 %v4613, %v4621
      %v4652 = vadd.f32 %v4614, %v4620
      %v4653 = vadd.f32 %v4615, %v4621
      %v4654 = vadd.f32 %v4616, %v4620
      %v4655 = vadd.f32 %v4617, %v4621
      %v4656 = vld [vmem:[%s357] sm:$0xf]
      %v4657 = vld [vmem:[%s357 + $0x4] sm:$0xf]
      %v4658 = vld [vmem:[%s357 + $0x8] sm:$0xf]
      %v4659 = vld [vmem:[%s357 + $0xc] sm:$0xf]
      %v4660 = vld [vmem:[%s357 + $0x10] sm:$0xf]
      %v4661 = vld [vmem:[%s357 + $0x14] sm:$0xf]
      %v4662 = vld [vmem:[%s357 + $0x18] sm:$0xf]
      %v4663 = vld [vmem:[%s357 + $0x1c] sm:$0xf]
      %v4664 = vld [vmem:[%s357 + $0x20] sm:$0xf]
      %v4665 = vld [vmem:[%s357 + $0x24] sm:$0xf]
      %v4666 = vld [vmem:[%s357 + $0x28] sm:$0xf]
      %v4667 = vld [vmem:[%s357 + $0x2c] sm:$0xf]
      %v4668 = vld [vmem:[%s357 + $0x30] sm:$0xf]
      %v4669 = vld [vmem:[%s357 + $0x34] sm:$0xf]
      %v4670 = vld [vmem:[%s357 + $0x38] sm:$0xf]
      %v4671 = vld [vmem:[%s357 + $0x3c] sm:$0xf]
      %v4672 = vunpack.c.l.bf16 %v4656
      %v4673 = vunpack.c.l.bf16 %v4657
      %v4674 = vunpack.c.l.bf16 %v4658
      %v4675 = vunpack.c.l.bf16 %v4659
      %v4676 = vunpack.c.l.bf16 %v4660
      %v4677 = vunpack.c.l.bf16 %v4661
      %v4678 = vunpack.c.l.bf16 %v4662
      %v4679 = vunpack.c.l.bf16 %v4663
      %v4680 = vunpack.c.l.bf16 %v4664
      %v4681 = vunpack.c.l.bf16 %v4665
      %v4682 = vunpack.c.l.bf16 %v4666
      %v4683 = vunpack.c.l.bf16 %v4667
      %v4684 = vunpack.c.l.bf16 %v4668
      %v4685 = vunpack.c.l.bf16 %v4669
      %v4686 = vunpack.c.l.bf16 %v4670
      %v4687 = vunpack.c.l.bf16 %v4671
      %v4688 = vld [vmem:[%s6] sm:$0x1]
      %v4690 = vperm.slane %v4688, 0
      %v4692 = vmul.f32 %v4672, %v4690
      %v4693 = vmul.f32 %v4673, %v4690
      %v4694 = vmul.f32 %v4674, %v4690
      %v4695 = vmul.f32 %v4675, %v4690
      %v4696 = vmul.f32 %v4676, %v4690
      %v4697 = vmul.f32 %v4677, %v4690
      %v4698 = vmul.f32 %v4678, %v4690
      %v4699 = vmul.f32 %v4679, %v4690
      %v4700 = vmul.f32 %v4680, %v4690
      %v4701 = vmul.f32 %v4681, %v4690
      %v4702 = vmul.f32 %v4682, %v4690
      %v4703 = vmul.f32 %v4683, %v4690
      %v4704 = vmul.f32 %v4684, %v4690
      %v4705 = vmul.f32 %v4685, %v4690
      %v4706 = vmul.f32 %v4686, %v4690
      %v4707 = vmul.f32 %v4687, %v4690
      %v4708 = vld [vmem:[%s7] sm:$0x1]
      %v4710 = vperm.slane %v4708, 0
      %v4712 = vadd.f32 %v4692, %v4710
      %v4713 = vadd.f32 %v4693, %v4710
      %v4714 = vadd.f32 %v4694, %v4710
      %v4715 = vadd.f32 %v4695, %v4710
      %v4716 = vadd.f32 %v4696, %v4710
      %v4717 = vadd.f32 %v4697, %v4710
      %v4718 = vadd.f32 %v4698, %v4710
      %v4719 = vadd.f32 %v4699, %v4710
      %v4720 = vadd.f32 %v4700, %v4710
      %v4721 = vadd.f32 %v4701, %v4710
      %v4722 = vadd.f32 %v4702, %v4710
      %v4723 = vadd.f32 %v4703, %v4710
      %v4724 = vadd.f32 %v4704, %v4710
      %v4725 = vadd.f32 %v4705, %v4710
      %v4726 = vadd.f32 %v4706, %v4710
      %v4727 = vadd.f32 %v4707, %v4710
      %v4728 = vadd.f32 %v4624, 1.0
      %v4729 = vadd.f32 %v4626, 1.0
      %v4730 = vadd.f32 %v4628, 1.0
      %v4731 = vadd.f32 %v4630, 1.0
      %v4732 = vadd.f32 %v4632, 1.0
      %v4733 = vadd.f32 %v4634, 1.0
      %v4734 = vadd.f32 %v4636, 1.0
      %v4735 = vadd.f32 %v4638, 1.0
      %v4736 = vadd.f32 %v4640, 1.0
      %v4737 = vadd.f32 %v4642, 1.0
      %v4738 = vadd.f32 %v4644, 1.0
      %v4739 = vadd.f32 %v4646, 1.0
      %v4740 = vadd.f32 %v4648, 1.0
      %v4741 = vadd.f32 %v4650, 1.0
      %v4742 = vadd.f32 %v4652, 1.0
      %v4743 = vadd.f32 %v4654, 1.0
      %v4744 = vmul.f32 %v4712, %v4728
      %v4745 = vmul.f32 %v4713, %v4729
      %v4746 = vmul.f32 %v4714, %v4730
      %v4747 = vmul.f32 %v4715, %v4731
      %v4748 = vmul.f32 %v4716, %v4732
      %v4749 = vmul.f32 %v4717, %v4733
      %v4750 = vmul.f32 %v4718, %v4734
      %v4751 = vmul.f32 %v4719, %v4735
      %v4752 = vmul.f32 %v4720, %v4736
      %v4753 = vmul.f32 %v4721, %v4737
      %v4754 = vmul.f32 %v4722, %v4738
      %v4755 = vmul.f32 %v4723, %v4739
      %v4756 = vmul.f32 %v4724, %v4740
      %v4757 = vmul.f32 %v4725, %v4741
      %v4758 = vmul.f32 %v4726, %v4742
      %v4759 = vmul.f32 %v4727, %v4743
      %v4760 = vadd.f32 %v4744, %v4625
      %v4761 = vadd.f32 %v4745, %v4627
      %v4762 = vadd.f32 %v4746, %v4629
      %v4763 = vadd.f32 %v4747, %v4631
      %v4764 = vadd.f32 %v4748, %v4633
      %v4765 = vadd.f32 %v4749, %v4635
      %v4766 = vadd.f32 %v4750, %v4637
      %v4767 = vadd.f32 %v4751, %v4639
      %v4768 = vadd.f32 %v4752, %v4641
      %v4769 = vadd.f32 %v4753, %v4643
      %v4770 = vadd.f32 %v4754, %v4645
      %v4771 = vadd.f32 %v4755, %v4647
      %v4772 = vadd.f32 %v4756, %v4649
      %v4773 = vadd.f32 %v4757, %v4651
      %v4774 = vadd.f32 %v4758, %v4653
      %v4775 = vadd.f32 %v4759, %v4655
      %4776 = vst [vmem:[%s368] sm:$0xff] %v4760
      %4777 = vst [vmem:[%s368 + $0x8] sm:$0xff] %v4761
      %4778 = vst [vmem:[%s368 + $0x10] sm:$0xff] %v4762
      %4779 = vst [vmem:[%s368 + $0x18] sm:$0xff] %v4763
      %4780 = vst [vmem:[%s368 + $0x20] sm:$0xff] %v4764
      %4781 = vst [vmem:[%s368 + $0x28] sm:$0xff] %v4765
      %4782 = vst [vmem:[%s368 + $0x30] sm:$0xff] %v4766
      %4783 = vst [vmem:[%s368 + $0x38] sm:$0xff] %v4767
      %4784 = vst [vmem:[%s368 + $0x40] sm:$0xff] %v4768
      %4785 = vst [vmem:[%s368 + $0x48] sm:$0xff] %v4769
      %4786 = vst [vmem:[%s368 + $0x50] sm:$0xff] %v4770
      %4787 = vst [vmem:[%s368 + $0x58] sm:$0xff] %v4771
      %4788 = vst [vmem:[%s368 + $0x60] sm:$0xff] %v4772
      %4789 = vst [vmem:[%s368 + $0x68] sm:$0xff] %v4773
      %4790 = vst [vmem:[%s368 + $0x70] sm:$0xff] %v4774
      %4791 = vst [vmem:[%s368 + $0x78] sm:$0xff] %v4775
      %s4792 = smul.u32 8, %s24
      %p4793 = scmp.lt.s32.totalorder %s23, 1
      %s4794 = scalar_select %p4793, %s23, 1
      %p4795 = scmp.lt.s32.totalorder %s4792, 15
      %s4796 = scalar_select %p4795, %s4792, 15
      %s4797 = smul.addr %s4796, 2
      %s4798 = smul.addr %s4794, 32
      %s4799 = sadd.s32 %s4797, %s4798
      %s4800 = smul.addr %s4799, 8
      %s4801 = scalar_lea.vmem %s8, %s4800
      // Predicated region
      $region53: #{conv_spade_block_forward.3} parent=51 // pred_check
        %p4802 = pneg %p231
      $region54: #{conv_spade_block_forward.3} parent=51 // pred_check_branch
        %4804 = sbr.rel (%p4802) target = $region56
      $region55: #{conv_spade_block_forward.3} parent=51 // pred_region
        %s4805 = smul.u32 8, %s24
      $region56: #{conv_spade_block_forward.3} parent=51 // pred_fallthru
        _
    $region52: #{conv_spade_block_forward.3} parent=5 // pred_fallthru
      _
    %p4806 = scmp.le.s32.totalorder 2, %s14
    // Predicated region
    $region57: #{conv_spade_block_forward.3} parent=5 // pred_check
      %p4807 = pneg %p4806
    $region58: #{conv_spade_block_forward.3} parent=5 // pred_check_branch
      %4809 = sbr.rel (%p4807) target = $region60
    $region59: #{conv_spade_block_forward.3} parent=5 // pred_region
      %s4810 = ssub.s32 %s14, 2
      // Predicated region
      $region61: #{conv_spade_block_forward.3} parent=59 // pred_check
        %p4811 = pneg %p237
      $region62: #{conv_spade_block_forward.3} parent=59 // pred_check_branch
        %4813 = sbr.rel (%p4811) target = $region64
      $region63: #{conv_spade_block_forward.3} parent=59 // pred_region
        %s4814 = smul.u32 8, %s26
        %p4815 = scmp.lt.s32.totalorder %s25, 1
        %s4816 = scalar_select %p4815, %s25, 1
        %p4817 = scmp.lt.s32.totalorder %s4814, 15
        %s4818 = scalar_select %p4817, %s4814, 15
        %s4819 = smul.addr %s4818, 2
        %s4820 = smul.addr %s4816, 32
        %s4821 = sadd.s32 %s4819, %s4820
        %s4822 = smul.addr %s4821, 8
        %s4823 = scalar_lea.vmem %s8, %s4822
      $region64: #{conv_spade_block_forward.3} parent=59 // pred_fallthru
        _
    $region60: #{conv_spade_block_forward.3} parent=5 // pred_fallthru
      _
  $region6: #{conv_spade_block_forward.3} parent=0 // loop_footer
    %s18 = sadd.s32 1, %s14
  $region7: #{conv_spade_block_forward.3} parent=0 // loop_footer_branch
    %13 = sbr.rel target = $region3
  $region8: #{conv_spade_block_forward.3} parent=0 // loop_exit
    _

</llo_original>
